<compile_context>
chip_gen: v7x
topology: tpu7x:2x2x1
jax: 0.10.0
libtpu: 0.0.40
codegen_flags: <defaults>
</compile_context>

<pallas_src>
import math
import functools

import jax
import jax.numpy as jnp
from jax.experimental import pallas as pl
from jax.experimental.pallas import tpu as pltpu


_VMEM_LIMIT_BYTES = 48 * 1024 * 1024   # > default scoped limit, < v7x's 64 MiB physical
_FFN_WEIGHT_BUDGET = 16 * 1024 * 1024  # keep W1/W2 fully resident if they fit this


# ---------------------------------------------------------------------------
# In-kernel helpers
# ---------------------------------------------------------------------------
def _layernorm(x, g, b, eps=1e-6):
    """LayerNorm with statistics in f32, result cast back to x.dtype."""
    f32 = jnp.float32
    xf = x.astype(f32)
    mean = jnp.mean(xf, axis=-1, keepdims=True)
    var = jnp.mean((xf - mean) ** 2, axis=-1, keepdims=True)
    y = (xf - mean) * jax.lax.rsqrt(var + eps)
    return (y * g.astype(f32) + b.astype(f32)).astype(x.dtype)


def _gelu(x):
    c = math.sqrt(2.0 / math.pi)
    return 0.5 * x * (1.0 + jnp.tanh(c * (x + 0.044715 * x * x * x)))


# ---------------------------------------------------------------------------
# Kernel 1: pre-LN (optional) + multi-head attention + residual.
# grid = (B, num_q_tiles).  K/V projected once per batch element into scratch.
# ---------------------------------------------------------------------------
def _attn_kernel(xb_ref, kv_ref, bias_ref,
                 ln_g_ref, ln_b_ref,
                 wq_ref, bq_ref, wkv_ref, bkv_ref, wo_ref, bo_ref,
                 out_ref,
                 kv_scr,
                 *, heads, dh, apply_pre_ln, ln_kv):
    f32 = jnp.float32
    D = heads * dh
    dt = xb_ref.dtype

    # ---- project K/V for the whole sequence once per batch element ----
    @pl.when(pl.program_id(1) == 0)
    def _():
        src = kv_ref[0]                                   # (S, D), native dtype
        if ln_kv:
            src = _layernorm(src, ln_g_ref[...], ln_b_ref[...])
        kv = jnp.dot(src, wkv_ref[...], preferred_element_type=f32)
        kv_scr[...] = (kv + bkv_ref[...].astype(f32)).astype(dt)   # (S, 2D) lane-dense

    # ---- query tile ----
    xq = xb_ref[0]                                        # (Tq, D)
    xq_n = _layernorm(xq, ln_g_ref[...], ln_b_ref[...]) if apply_pre_ln else xq
    # 1/sqrt(dh) is already folded into wq/bq on the host.
    q = (jnp.dot(xq_n, wq_ref[...], preferred_element_type=f32)
         + bq_ref[...].astype(f32)).astype(dt)            # (Tq, D)

    tq = xq.shape[0]
    S = kv_scr.shape[0]
    # additive key-padding bias, broadcast once (hoisted out of the head loop)
    bias = jnp.broadcast_to(bias_ref[0].astype(f32), (tq, S))
    wo = wo_ref[...]                                      # (D, D), native dtype

    attn = jnp.zeros((tq, D), f32)
    for h in range(heads):
        qh = q[:, h * dh:(h + 1) * dh]                    # (Tq, dh)
        kh = kv_scr[:, h * dh:(h + 1) * dh]               # (S,  dh)
        vh = kv_scr[:, D + h * dh: D + (h + 1) * dh]      # (S,  dh)
        s = jax.lax.dot_general(qh, kh, (((1,), (1,)), ((), ())),
                                preferred_element_type=f32)       # (Tq, S)
        s = s + bias
        s = s - jnp.max(s, axis=-1, keepdims=True)
        p = jnp.exp(s)
        inv = pl.reciprocal(jnp.sum(p, axis=-1, keepdims=True))   # (Tq, 1)
        ctx = jnp.dot(p.astype(dt), vh, preferred_element_type=f32) * inv
        # accumulate output projection per head (no concat / unshape relayout)
        attn = attn + jnp.dot(ctx.astype(dt), wo[h * dh:(h + 1) * dh, :],
                              preferred_element_type=f32)

    attn = attn + bo_ref[...].astype(f32)
    out_ref[0] = (attn + xq_n.astype(f32)).astype(out_ref.dtype)  # + residual (normed xb)


# ---------------------------------------------------------------------------
# Kernel 2: PositionwiseFeedForward: LN -> W1 -> gelu -> W2 -> + residual.
# grid = (B, num_s_tiles, num_ff_tiles); W1/W2 streamed over d_ff (n_ff may be 1).
# ---------------------------------------------------------------------------
def _ffn_kernel(x_ref, ln_g_ref, ln_b_ref, w1_ref, b1_ref, w2_ref, b2_ref,
                out_ref, xn_scr, acc_scr):
    f32 = jnp.float32
    fi = pl.program_id(2)
    dt = x_ref.dtype

    @pl.when(fi == 0)
    def _():
        xn_scr[...] = _layernorm(x_ref[0], ln_g_ref[...], ln_b_ref[...])
        acc_scr[...] = jnp.zeros_like(acc_scr)

    inter = _gelu(jnp.dot(xn_scr[...], w1_ref[...], preferred_element_type=f32)
                  + b1_ref[...].astype(f32))                       # (Ts, Tff) f32
    acc_scr[...] += jnp.dot(inter.astype(dt), w2_ref[...],
                            preferred_element_type=f32)            # (Ts, D)

    @pl.when(fi == pl.num_programs(2) - 1)
    def _():
        out_ref[0] = (acc_scr[...] + b2_ref[...].astype(f32)
                      + x_ref[0].astype(f32)).astype(out_ref.dtype)


# ---------------------------------------------------------------------------
# Wrapper: mirrors TransformerEncoderLayer.forward(iter, inputs_a, inputs_b, mask, setting)
# ---------------------------------------------------------------------------
def _pick_tile(n, pref):
    # TODO(synk): pad non-divisible shapes instead of falling back to the full extent.
    if n <= pref:
        return n
    return pref if n % pref == 0 else n


def _ffn_tile(d_ff, d_model, itemsize, pref):
    # Prefer keeping the full, double-buffered W1 + W2 resident in VMEM (DMA'd once).
    if 2 * 2 * d_model * d_ff * itemsize <= _FFN_WEIGHT_BUDGET:
        return d_ff
    return _pick_tile(d_ff, pref)


def transformer_encoder_layer(iter_, inputs_a, inputs_b, mask, setting, params, heads,
                              *, same_inputs=None,
                              q_block=128, s_block=128, ff_block=512):
    B, S, D = inputs_b.shape
    d_ff = params["w1"].shape[1]
    dh = D // heads

    if same_inputs is None:
        # TODO(synk): pass same_inputs statically; this host check syncs the device
        # and breaks under jit (it mirrors torch's data-dependent inputs_a.equal(inputs_b)).
        same_inputs = bool(jnp.array_equal(inputs_a, inputs_b))
    apply_pre_ln = (iter_ != 0)

    # setting != 'realtime' is a broadcast (B, 1, S_key) padding mask.
    # TODO(synk): 'realtime' per-query (B, S_q, S_key) masks are not supported here.
    mask_bias = (mask.astype(jnp.float32) * jnp.float32(-1e10)).reshape(B, 1, S)

    kv_src = inputs_b if same_inputs else inputs_a   # inputs_a never DMA'd when same

    # Host-side weight prep: fold 1/sqrt(dh) into Wq/bq, fuse K|V projections.
    scale = 1.0 / math.sqrt(dh)
    wq = params["wq"] * scale
    bq = params["bq"] * scale
    wkv = jnp.concatenate([params["wk"], params["wv"]], axis=1)    # (D, 2D)
    bkv = jnp.concatenate([params["bk"], params["bv"]], axis=1)    # (1, 2D)

    # ------------------ attention + residual ------------------
    tq = _pick_tile(S, q_block)
    n_q = S // tq
    attn_kernel = functools.partial(
        _attn_kernel, heads=heads, dh=dh,
        apply_pre_ln=apply_pre_ln, ln_kv=(apply_pre_ln and same_inputs))

    attn_out = pl.pallas_call(
        attn_kernel,
        out_shape=jax.ShapeDtypeStruct((B, S, D), inputs_b.dtype),
        grid_spec=pltpu.PrefetchScalarGridSpec(
            num_scalar_prefetch=0,
            grid=(B, n_q),
            in_specs=[
                pl.BlockSpec((1, tq, D), lambda b, qi: (b, qi, 0)),   # inputs_b (query / residual)
                pl.BlockSpec((1, S, D),  lambda b, qi: (b, 0, 0)),    # K/V source (full sequence)
                pl.BlockSpec((1, 1, S),  lambda b, qi: (b, 0, 0)),    # additive mask bias
                pl.BlockSpec((1, D),     lambda b, qi: (0, 0)),       # ln1 gamma
                pl.BlockSpec((1, D),     lambda b, qi: (0, 0)),       # ln1 beta
                pl.BlockSpec((D, D),     lambda b, qi: (0, 0)),       # Wq (pre-scaled)
                pl.BlockSpec((1, D),     lambda b, qi: (0, 0)),       # bq (pre-scaled)
                pl.BlockSpec((D, 2 * D), lambda b, qi: (0, 0)),       # fused Wk|Wv
                pl.BlockSpec((1, 2 * D), lambda b, qi: (0, 0)),       # fused bk|bv
                pl.BlockSpec((D, D),     lambda b, qi: (0, 0)),       # Wo
                pl.BlockSpec((1, D),     lambda b, qi: (0, 0)),       # bo
            ],
            out_specs=pl.BlockSpec((1, tq, D), lambda b, qi: (b, qi, 0)),
            scratch_shapes=[
                pltpu.VMEM((S, 2 * D), inputs_b.dtype),               # fused K|V, lane-dense
            ],
        ),
        compiler_params=pltpu.CompilerParams(
            dimension_semantics=("parallel", "arbitrary"),
            vmem_limit_bytes=_VMEM_LIMIT_BYTES,
        ),
    )(inputs_b, kv_src, mask_bias,
      params["ln1_g"], params["ln1_b"],
      wq, bq, wkv, bkv, params["wo"], params["bo"])

    # ------------------ positionwise feed-forward ------------------
    ts = _pick_tile(S, s_block)
    tf = _ffn_tile(d_ff, D, jnp.dtype(params["w1"].dtype).itemsize, ff_block)
    n_s, n_f = S // ts, d_ff // tf

    out = pl.pallas_call(
        _ffn_kernel,
        out_shape=jax.ShapeDtypeStruct((B, S, D), inputs_b.dtype),
        grid_spec=pltpu.PrefetchScalarGridSpec(
            num_scalar_prefetch=0,
            grid=(B, n_s, n_f),
            in_specs=[
                pl.BlockSpec((1, ts, D), lambda b, si, fi: (b, si, 0)),  # x (attn output)
                pl.BlockSpec((1, D),     lambda b, si, fi: (0, 0)),      # ln2 gamma
                pl.BlockSpec((1, D),     lambda b, si, fi: (0, 0)),      # ln2 beta
                pl.BlockSpec((D, tf),    lambda b, si, fi: (0, fi)),     # W1 (resident or streamed)
                pl.BlockSpec((1, tf),    lambda b, si, fi: (0, fi)),     # b1
                pl.BlockSpec((tf, D),    lambda b, si, fi: (fi, 0)),     # W2 (resident or streamed)
                pl.BlockSpec((1, D),     lambda b, si, fi: (0, 0)),      # b2
            ],
            out_specs=pl.BlockSpec((1, ts, D), lambda b, si, fi: (b, si, 0)),
            scratch_shapes=[
                pltpu.VMEM((ts, D), inputs_b.dtype),    # LayerNorm(x), computed once per tile
                pltpu.VMEM((ts, D), jnp.float32),       # FFN accumulator
            ],
        ),
        compiler_params=pltpu.CompilerParams(
            dimension_semantics=("parallel", "parallel", "arbitrary"),
            vmem_limit_bytes=_VMEM_LIMIT_BYTES,
        ),
    )(attn_out, params["ln2_g"], params["ln2_b"],
      params["w1"], params["b1"], params["w2"], params["b2"])

    return out


# ---------------------------------------------------------------------------
# Pure-JAX reference (mirrors the PyTorch forward exactly) — for validation.
# ---------------------------------------------------------------------------
def _reference(iter_, xa, xb, mask, p, heads, same_inputs):
    B, S, D = xb.shape
    dh = D // heads

    def ln(x, g, b, eps=1e-6):
        m = jnp.mean(x, -1, keepdims=True)
        v = jnp.mean((x - m) ** 2, -1, keepdims=True)
        return (x - m) / jnp.sqrt(v + eps) * g + b

    def gelu(x):
        return 0.5 * x * (1 + jnp.tanh(math.sqrt(2 / math.pi) * (x + 0.044715 * x ** 3)))

    xb_n = ln(xb, p["ln1_g"], p["ln1_b"]) if iter_ != 0 else xb
    kv = xb_n if same_inputs else xa

    q = xb_n @ p["wq"] + p["bq"]
    k = kv @ p["wk"] + p["bk"]
    v = kv @ p["wv"] + p["bv"]

    def split(x):
        return x.reshape(B, S, heads, dh).transpose(0, 2, 1, 3)

    qh, kh, vh = split(q) / math.sqrt(dh), split(k), split(v)
    scores = jnp.einsum("bhqd,bhkd->bhqk", qh, kh)
    scores = jnp.where(mask[:, None, None, :], -1e10, scores)
    attn = jax.nn.softmax(scores, axis=-1)
    ctx = jnp.einsum("bhqk,bhkd->bhqd", attn, vh).transpose(0, 2, 1, 3).reshape(B, S, D)
    attn_out = ctx @ p["wo"] + p["bo"]
    out = attn_out + xb_n

    xn = ln(out, p["ln2_g"], p["ln2_b"])
    inter = gelu(xn @ p["w1"] + p["b1"])
    return inter @ p["w2"] + p["b2"] + out


# ---------------------------------------------------------------------------
if __name__ == "__main__":
    B, S, D, HEADS, D_FF = 2, 256, 128, 4, 256

    root = jax.random.PRNGKey(0)
    kp, kx = jax.random.split(root)
    ks = jax.random.split(kp, 16)

    def w(k, shape, scale=0.1):
        return (scale * jax.random.normal(k, shape)).astype(jnp.float32)

    params = {
        "ln1_g": jnp.ones((1, D), jnp.float32) + w(ks[0], (1, D), 0.01),
        "ln1_b": w(ks[1], (1, D), 0.01),
        "wq": w(ks[2], (D, D)), "bq": w(ks[3], (1, D), 0.01),
        "wk": w(ks[4], (D, D)), "bk": w(ks[5], (1, D), 0.01),
        "wv": w(ks[6], (D, D)), "bv": w(ks[7], (1, D), 0.01),
        "wo": w(ks[8], (D, D)), "bo": w(ks[9], (1, D), 0.01),
        "ln2_g": jnp.ones((1, D), jnp.float32) + w(ks[10], (1, D), 0.01),
        "ln2_b": w(ks[11], (1, D), 0.01),
        "w1": w(ks[12], (D, D_FF)), "b1": w(ks[13], (1, D_FF), 0.01),
        "w2": w(ks[14], (D_FF, D)), "b2": w(ks[15], (1, D), 0.01),
    }

    kxs = jax.random.split(kx, 3)
    inputs_b = jax.random.normal(kxs[0], (B, S, D), jnp.float32)
    inputs_a_same = inputs_b
    inputs_a_diff = jax.random.normal(kxs[1], (B, S, D), jnp.float32)
    mask = jax.random.uniform(kxs[2], (B, S)) < 0.2      # True => masked key position
    mask = mask.at[:, 0].set(False)                      # keep >=1 unmasked key per row

    run = functools.partial(transformer_encoder_layer,
                            q_block=128, s_block=128, ff_block=128)

    # Case 1: inputs_a == inputs_b, iter != 0
    out1 = jax.block_until_ready(
        run(1, inputs_a_same, inputs_b, mask, "default", params, HEADS, same_inputs=True))
    ref1 = _reference(1, inputs_a_same, inputs_b, mask, params, HEADS, same_inputs=True)
    assert jnp.allclose(out1, ref1, atol=1e-4, rtol=1e-4), "mismatch: same-inputs branch"

    # Case 2: inputs_a != inputs_b (cross branch), iter != 0
    out2 = jax.block_until_ready(
        run(1, inputs_a_diff, inputs_b, mask, "default", params, HEADS, same_inputs=False))
    ref2 = _reference(1, inputs_a_diff, inputs_b, mask, params, HEADS, same_inputs=False)
    assert jnp.allclose(out2, ref2, atol=1e-4, rtol=1e-4), "mismatch: cross-inputs branch"

    # Case 3: iter == 0 (no pre-LayerNorm), inputs_a == inputs_b
    out3 = jax.block_until_ready(
        run(0, inputs_a_same, inputs_b, mask, "default", params, HEADS, same_inputs=True))
    ref3 = _reference(0, inputs_a_same, inputs_b, mask, params, HEADS, same_inputs=True)
    assert jnp.allclose(out3, ref3, atol=1e-4, rtol=1e-4), "mismatch: iter==0 branch"

    print("KERNEL_OK")
</pallas_src>

<mosaic_0001>
module attributes {stable_mosaic.version = 11 : i64} {
  func.func @_attn_kernel(%arg0: i32, %arg1: i32, %arg2: memref<1x128x128xf32, #tpu.memory_space<vmem>>, %arg3: memref<1x256x128xf32, #tpu.memory_space<vmem>>, %arg4: memref<1x1x256xf32, #tpu.memory_space<vmem>>, %arg5: memref<1x128xf32, #tpu.memory_space<vmem>>, %arg6: memref<1x128xf32, #tpu.memory_space<vmem>>, %arg7: memref<128x128xf32, #tpu.memory_space<vmem>>, %arg8: memref<1x128xf32, #tpu.memory_space<vmem>>, %arg9: memref<128x256xf32, #tpu.memory_space<vmem>>, %arg10: memref<1x256xf32, #tpu.memory_space<vmem>>, %arg11: memref<128x128xf32, #tpu.memory_space<vmem>>, %arg12: memref<1x128xf32, #tpu.memory_space<vmem>>, %arg13: memref<1x128x128xf32, #tpu.memory_space<vmem>>, %arg14: memref<256x256xf32, #tpu.memory_space<vmem>>) attributes {dimension_semantics = [#tpu.dimension_semantics<parallel>, #tpu.dimension_semantics<arbitrary>], iteration_bounds = array<i64: 2, 2>, scalar_prefetch = 0 : i64, scratch_operands = 1 : i64, tpu.core_type = #tpu.core_type<tc>, window_params = [{transform_indices = @transform_0, window_bounds = array<i64: 1, 128, 128>}, {transform_indices = @transform_1, window_bounds = array<i64: 1, 256, 128>}, {transform_indices = @transform_2, window_bounds = array<i64: 1, 1, 256>}, {pipeline_mode = #tpu.pipeline_mode<synchronous>, transform_indices = @transform_3, window_bounds = array<i64: 1, 128>}, {pipeline_mode = #tpu.pipeline_mode<synchronous>, transform_indices = @transform_4, window_bounds = array<i64: 1, 128>}, {pipeline_mode = #tpu.pipeline_mode<synchronous>, transform_indices = @transform_5, window_bounds = array<i64: 128, 128>}, {pipeline_mode = #tpu.pipeline_mode<synchronous>, transform_indices = @transform_6, window_bounds = array<i64: 1, 128>}, {pipeline_mode = #tpu.pipeline_mode<synchronous>, transform_indices = @transform_7, window_bounds = array<i64: 128, 256>}, {pipeline_mode = #tpu.pipeline_mode<synchronous>, transform_indices = @transform_8, window_bounds = array<i64: 1, 256>}, {pipeline_mode = #tpu.pipeline_mode<synchronous>, transform_indices = @transform_9, window_bounds = array<i64: 128, 128>}, {pipeline_mode = #tpu.pipeline_mode<synchronous>, transform_indices = @transform_10, window_bounds = array<i64: 1, 128>}, {transform_indices = @transform_11, window_bounds = array<i64: 1, 128, 128>}]} {
    %c0_i32 = arith.constant 0 : i32
    %0 = arith.cmpi eq, %arg1, %c0_i32 : i32
    %1 = arith.extui %0 : i1 to i32
    %c0_i32_0 = arith.constant 0 : i32
    %2 = arith.cmpi ne, %1, %c0_i32_0 : i32
    scf.if %2 {
      %c0_56 = arith.constant 0 : index
      %c0_57 = arith.constant 0 : index
      %c0_58 = arith.constant 0 : index
      %123 = vector.load %arg3[%c0_56, %c0_57, %c0_58] : memref<1x256x128xf32, #tpu.memory_space<vmem>>, vector<1x256x128xf32>
      %124 = vector.shape_cast %123 : vector<1x256x128xf32> to vector<256x128xf32>
      %c0_59 = arith.constant 0 : index
      %c0_60 = arith.constant 0 : index
      %125 = vector.load %arg5[%c0_59, %c0_60] : memref<1x128xf32, #tpu.memory_space<vmem>>, vector<1x128xf32>
      %c0_61 = arith.constant 0 : index
      %c0_62 = arith.constant 0 : index
      %126 = vector.load %arg6[%c0_61, %c0_62] : memref<1x128xf32, #tpu.memory_space<vmem>>, vector<1x128xf32>
      %cst_63 = arith.constant dense<0.000000e+00> : vector<256xf32>
      %127 = vector.multi_reduction <add>, %124, %cst_63 [1] : vector<256x128xf32> to vector<256xf32>
      %128 = vector.shape_cast %127 : vector<256xf32> to vector<256x1xf32>
      %cst_64 = arith.constant 1.280000e+02 : f32
      %129 = vector.broadcast %cst_64 : f32 to vector<256x1xf32>
      %130 = arith.divf %128, %129 : vector<256x1xf32>
      %131 = vector.broadcast %130 : vector<256x1xf32> to vector<256x128xf32>
      %132 = arith.subf %124, %131 : vector<256x128xf32>
      %133 = arith.mulf %132, %132 : vector<256x128xf32>
      %cst_65 = arith.constant dense<0.000000e+00> : vector<256xf32>
      %134 = vector.multi_reduction <add>, %133, %cst_65 [1] : vector<256x128xf32> to vector<256xf32>
      %135 = vector.shape_cast %134 : vector<256xf32> to vector<256x1xf32>
      %cst_66 = arith.constant 1.280000e+02 : f32
      %136 = vector.broadcast %cst_66 : f32 to vector<256x1xf32>
      %137 = arith.divf %135, %136 : vector<256x1xf32>
      %138 = vector.broadcast %130 : vector<256x1xf32> to vector<256x128xf32>
      %139 = arith.subf %124, %138 : vector<256x128xf32>
      %cst_67 = arith.constant 9.99999997E-7 : f32
      %140 = vector.broadcast %cst_67 : f32 to vector<256x1xf32>
      %141 = arith.addf %137, %140 : vector<256x1xf32>
      %142 = math.rsqrt %141 : vector<256x1xf32>
      %143 = vector.broadcast %142 : vector<256x1xf32> to vector<256x128xf32>
      %144 = arith.mulf %139, %143 : vector<256x128xf32>
      %145 = vector.broadcast %125 : vector<1x128xf32> to vector<256x128xf32>
      %146 = arith.mulf %144, %145 : vector<256x128xf32>
      %147 = vector.broadcast %126 : vector<1x128xf32> to vector<256x128xf32>
      %148 = arith.addf %146, %147 : vector<256x128xf32>
      %c0_68 = arith.constant 0 : index
      %c0_69 = arith.constant 0 : index
      %149 = vector.load %arg9[%c0_68, %c0_69] : memref<128x256xf32, #tpu.memory_space<vmem>>, vector<128x256xf32>
      %cst_70 = arith.constant dense<0.000000e+00> : vector<256x256xf32>
      %150 = tpu.matmul %148, %149, %cst_70 {dimension_numbers = #tpu.dot_dimension_numbers<[1], [0], [0], [1], [0, 0, 1, 1], [], []>} : vector<256x128xf32>, vector<128x256xf32>, vector<256x256xf32> -> vector<256x256xf32>
      %c0_71 = arith.constant 0 : index
      %c0_72 = arith.constant 0 : index
      %151 = vector.load %arg10[%c0_71, %c0_72] : memref<1x256xf32, #tpu.memory_space<vmem>>, vector<1x256xf32>
      %152 = vector.broadcast %151 : vector<1x256xf32> to vector<256x256xf32>
      %153 = arith.addf %150, %152 : vector<256x256xf32>
      %c0_73 = arith.constant 0 : index
      %c0_74 = arith.constant 0 : index
      %154 = vector.load %arg14[%c0_73, %c0_74] : memref<256x256xf32, #tpu.memory_space<vmem>>, vector<256x256xf32>
      tpu.vector_store %arg14[%c0_73, %c0_74], %153 {strides = array<i32>} : memref<256x256xf32, #tpu.memory_space<vmem>>, vector<256x256xf32>,
    } else {
    }
    %c0 = arith.constant 0 : index
    %c0_1 = arith.constant 0 : index
    %c0_2 = arith.constant 0 : index
    %3 = vector.load %arg2[%c0, %c0_1, %c0_2] : memref<1x128x128xf32, #tpu.memory_space<vmem>>, vector<1x128x128xf32>
    %4 = vector.shape_cast %3 : vector<1x128x128xf32> to vector<128x128xf32>
    %c0_3 = arith.constant 0 : index
    %c0_4 = arith.constant 0 : index
    %5 = vector.load %arg5[%c0_3, %c0_4] : memref<1x128xf32, #tpu.memory_space<vmem>>, vector<1x128xf32>
    %c0_5 = arith.constant 0 : index
    %c0_6 = arith.constant 0 : index
    %6 = vector.load %arg6[%c0_5, %c0_6] : memref<1x128xf32, #tpu.memory_space<vmem>>, vector<1x128xf32>
    %cst = arith.constant dense<0.000000e+00> : vector<128xf32>
    %7 = vector.multi_reduction <add>, %4, %cst [1] : vector<128x128xf32> to vector<128xf32>
    %8 = vector.shape_cast %7 : vector<128xf32> to vector<128x1xf32>
    %cst_7 = arith.constant 1.280000e+02 : f32
    %9 = vector.broadcast %cst_7 : f32 to vector<128x1xf32>
    %10 = arith.divf %8, %9 : vector<128x1xf32>
    %11 = vector.broadcast %10 : vector<128x1xf32> to vector<128x128xf32>
    %12 = arith.subf %4, %11 : vector<128x128xf32>
    %13 = arith.mulf %12, %12 : vector<128x128xf32>
    %cst_8 = arith.constant dense<0.000000e+00> : vector<128xf32>
    %14 = vector.multi_reduction <add>, %13, %cst_8 [1] : vector<128x128xf32> to vector<128xf32>
    %15 = vector.shape_cast %14 : vector<128xf32> to vector<128x1xf32>
    %cst_9 = arith.constant 1.280000e+02 : f32
    %16 = vector.broadcast %cst_9 : f32 to vector<128x1xf32>
    %17 = arith.divf %15, %16 : vector<128x1xf32>
    %18 = vector.broadcast %10 : vector<128x1xf32> to vector<128x128xf32>
    %19 = arith.subf %4, %18 : vector<128x128xf32>
    %cst_10 = arith.constant 9.99999997E-7 : f32
    %20 = vector.broadcast %cst_10 : f32 to vector<128x1xf32>
    %21 = arith.addf %17, %20 : vector<128x1xf32>
    %22 = math.rsqrt %21 : vector<128x1xf32>
    %23 = vector.broadcast %22 : vector<128x1xf32> to vector<128x128xf32>
    %24 = arith.mulf %19, %23 : vector<128x128xf32>
    %25 = vector.broadcast %5 : vector<1x128xf32> to vector<128x128xf32>
    %26 = arith.mulf %24, %25 : vector<128x128xf32>
    %27 = vector.broadcast %6 : vector<1x128xf32> to vector<128x128xf32>
    %28 = arith.addf %26, %27 : vector<128x128xf32>
    %c0_11 = arith.constant 0 : index
    %c0_12 = arith.constant 0 : index
    %29 = vector.load %arg7[%c0_11, %c0_12] : memref<128x128xf32, #tpu.memory_space<vmem>>, vector<128x128xf32>
    %cst_13 = arith.constant dense<0.000000e+00> : vector<128x128xf32>
    %30 = tpu.matmul %28, %29, %cst_13 {dimension_numbers = #tpu.dot_dimension_numbers<[1], [0], [0], [1], [0, 0, 1, 1], [], []>} : vector<128x128xf32>, vector<128x128xf32>, vector<128x128xf32> -> vector<128x128xf32>
    %c0_14 = arith.constant 0 : index
    %c0_15 = arith.constant 0 : index
    %31 = vector.load %arg8[%c0_14, %c0_15] : memref<1x128xf32, #tpu.memory_space<vmem>>, vector<1x128xf32>
    %32 = vector.broadcast %31 : vector<1x128xf32> to vector<128x128xf32>
    %33 = arith.addf %30, %32 : vector<128x128xf32>
    %c0_16 = arith.constant 0 : index
    %c0_17 = arith.constant 0 : index
    %c0_18 = arith.constant 0 : index
    %34 = vector.load %arg4[%c0_16, %c0_17, %c0_18] : memref<1x1x256xf32, #tpu.memory_space<vmem>>, vector<1x1x256xf32>
    %35 = vector.shape_cast %34 : vector<1x1x256xf32> to vector<1x256xf32>
    %36 = vector.shape_cast %35 : vector<1x256xf32> to vector<1x256xf32>
    %37 = vector.broadcast %36 : vector<1x256xf32> to vector<128x256xf32>
    %c0_19 = arith.constant 0 : index
    %c0_20 = arith.constant 0 : index
    %38 = vector.load %arg11[%c0_19, %c0_20] : memref<128x128xf32, #tpu.memory_space<vmem>>, vector<128x128xf32>
    %cst_21 = arith.constant 0.000000e+00 : f32
    %39 = vector.broadcast %cst_21 : f32 to vector<128x128xf32>
    %40 = vector.extract_strided_slice %33 {offsets = [0, 0], sizes = [128, 32], strides = [1, 1]} : vector<128x128xf32> to vector<128x32xf32>
    %c0_22 = arith.constant 0 : index
    %c0_23 = arith.constant 0 : index
    %41 = vector.load %arg14[%c0_22, %c0_23] : memref<256x256xf32, #tpu.memory_space<vmem>>, vector<256x32xf32>
    %c0_24 = arith.constant 0 : index
    %c128 = arith.constant 128 : index
    %42 = vector.load %arg14[%c0_24, %c128] : memref<256x256xf32, #tpu.memory_space<vmem>>, vector<256x32xf32>
    %cst_25 = arith.constant dense<0.000000e+00> : vector<128x256xf32>
    %43 = tpu.matmul %40, %41, %cst_25 {dimension_numbers = #tpu.dot_dimension_numbers<[1], [1], [0], [0], [0, 0, 1, 0], [], []>} : vector<128x32xf32>, vector<256x32xf32>, vector<128x256xf32> -> vector<128x256xf32>
    %44 = arith.addf %43, %37 : vector<128x256xf32>
    %cst_26 = arith.constant dense<0xFF800000> : vector<128xf32>
    %45 = vector.multi_reduction <maximumf>, %44, %cst_26 [1] : vector<128x256xf32> to vector<128xf32>
    %46 = vector.shape_cast %45 : vector<128xf32> to vector<128x1xf32>
    %47 = vector.broadcast %46 : vector<128x1xf32> to vector<128x256xf32>
    %48 = arith.subf %44, %47 : vector<128x256xf32>
    %49 = math.exp %48 : vector<128x256xf32>
    %cst_27 = arith.constant dense<0.000000e+00> : vector<128xf32>
    %50 = vector.multi_reduction <add>, %49, %cst_27 [1] : vector<128x256xf32> to vector<128xf32>
    %51 = vector.shape_cast %50 : vector<128xf32> to vector<128x1xf32>
    %52 = tpu.reciprocal %51 : vector<128x1xf32> -> vector<128x1xf32>
    %cst_28 = arith.constant dense<0.000000e+00> : vector<128x32xf32>
    %53 = tpu.matmul %49, %42, %cst_28 {dimension_numbers = #tpu.dot_dimension_numbers<[1], [0], [0], [1], [0, 0, 1, 1], [], []>} : vector<128x256xf32>, vector<256x32xf32>, vector<128x32xf32> -> vector<128x32xf32>
    %54 = vector.broadcast %52 : vector<128x1xf32> to vector<128x32xf32>
    %55 = arith.mulf %53, %54 : vector<128x32xf32>
    %56 = vector.extract_strided_slice %38 {offsets = [0, 0], sizes = [32, 128], strides = [1, 1]} : vector<128x128xf32> to vector<32x128xf32>
    %cst_29 = arith.constant dense<0.000000e+00> : vector<128x128xf32>
    %57 = tpu.matmul %55, %56, %cst_29 {dimension_numbers = #tpu.dot_dimension_numbers<[1], [0], [0], [1], [0, 0, 1, 1], [], []>} : vector<128x32xf32>, vector<32x128xf32>, vector<128x128xf32> -> vector<128x128xf32>
    %58 = arith.addf %39, %57 : vector<128x128xf32>
    %59 = vector.extract_strided_slice %33 {offsets = [0, 32], sizes = [128, 32], strides = [1, 1]} : vector<128x128xf32> to vector<128x32xf32>
    %c0_30 = arith.constant 0 : index
    %c32 = arith.constant 32 : index
    %60 = vector.load %arg14[%c0_30, %c32] : memref<256x256xf32, #tpu.memory_space<vmem>>, vector<256x32xf32>
    %c0_31 = arith.constant 0 : index
    %c160 = arith.constant 160 : index
    %61 = vector.load %arg14[%c0_31, %c160] : memref<256x256xf32, #tpu.memory_space<vmem>>, vector<256x32xf32>
    %cst_32 = arith.constant dense<0.000000e+00> : vector<128x256xf32>
    %62 = tpu.matmul %59, %60, %cst_32 {dimension_numbers = #tpu.dot_dimension_numbers<[1], [1], [0], [0], [0, 0, 1, 0], [], []>} : vector<128x32xf32>, vector<256x32xf32>, vector<128x256xf32> -> vector<128x256xf32>
    %63 = arith.addf %62, %37 : vector<128x256xf32>
    %cst_33 = arith.constant dense<0xFF800000> : vector<128xf32>
    %64 = vector.multi_reduction <maximumf>, %63, %cst_33 [1] : vector<128x256xf32> to vector<128xf32>
    %65 = vector.shape_cast %64 : vector<128xf32> to vector<128x1xf32>
    %66 = vector.broadcast %65 : vector<128x1xf32> to vector<128x256xf32>
    %67 = arith.subf %63, %66 : vector<128x256xf32>
    %68 = math.exp %67 : vector<128x256xf32>
    %cst_34 = arith.constant dense<0.000000e+00> : vector<128xf32>
    %69 = vector.multi_reduction <add>, %68, %cst_34 [1] : vector<128x256xf32> to vector<128xf32>
    %70 = vector.shape_cast %69 : vector<128xf32> to vector<128x1xf32>
    %71 = tpu.reciprocal %70 : vector<128x1xf32> -> vector<128x1xf32>
    %cst_35 = arith.constant dense<0.000000e+00> : vector<128x32xf32>
    %72 = tpu.matmul %68, %61, %cst_35 {dimension_numbers = #tpu.dot_dimension_numbers<[1], [0], [0], [1], [0, 0, 1, 1], [], []>} : vector<128x256xf32>, vector<256x32xf32>, vector<128x32xf32> -> vector<128x32xf32>
    %73 = vector.broadcast %71 : vector<128x1xf32> to vector<128x32xf32>
    %74 = arith.mulf %72, %73 : vector<128x32xf32>
    %75 = vector.extract_strided_slice %38 {offsets = [32, 0], sizes = [32, 128], strides = [1, 1]} : vector<128x128xf32> to vector<32x128xf32>
    %cst_36 = arith.constant dense<0.000000e+00> : vector<128x128xf32>
    %76 = tpu.matmul %74, %75, %cst_36 {dimension_numbers = #tpu.dot_dimension_numbers<[1], [0], [0], [1], [0, 0, 1, 1], [], []>} : vector<128x32xf32>, vector<32x128xf32>, vector<128x128xf32> -> vector<128x128xf32>
    %77 = arith.addf %58, %76 : vector<128x128xf32>
    %78 = vector.extract_strided_slice %33 {offsets = [0, 64], sizes = [128, 32], strides = [1, 1]} : vector<128x128xf32> to vector<128x32xf32>
    %c0_37 = arith.constant 0 : index
    %c64 = arith.constant 64 : index
    %79 = vector.load %arg14[%c0_37, %c64] : memref<256x256xf32, #tpu.memory_space<vmem>>, vector<256x32xf32>
    %c0_38 = arith.constant 0 : index
    %c192 = arith.constant 192 : index
    %80 = vector.load %arg14[%c0_38, %c192] : memref<256x256xf32, #tpu.memory_space<vmem>>, vector<256x32xf32>
    %cst_39 = arith.constant dense<0.000000e+00> : vector<128x256xf32>
    %81 = tpu.matmul %78, %79, %cst_39 {dimension_numbers = #tpu.dot_dimension_numbers<[1], [1], [0], [0], [0, 0, 1, 0], [], []>} : vector<128x32xf32>, vector<256x32xf32>, vector<128x256xf32> -> vector<128x256xf32>
    %82 = arith.addf %81, %37 : vector<128x256xf32>
    %cst_40 = arith.constant dense<0xFF800000> : vector<128xf32>
    %83 = vector.multi_reduction <maximumf>, %82, %cst_40 [1] : vector<128x256xf32> to vector<128xf32>
    %84 = vector.shape_cast %83 : vector<128xf32> to vector<128x1xf32>
    %85 = vector.broadcast %84 : vector<128x1xf32> to vector<128x256xf32>
    %86 = arith.subf %82, %85 : vector<128x256xf32>
    %87 = math.exp %86 : vector<128x256xf32>
    %cst_41 = arith.constant dense<0.000000e+00> : vector<128xf32>
    %88 = vector.multi_reduction <add>, %87, %cst_41 [1] : vector<128x256xf32> to vector<128xf32>
    %89 = vector.shape_cast %88 : vector<128xf32> to vector<128x1xf32>
    %90 = tpu.reciprocal %89 : vector<128x1xf32> -> vector<128x1xf32>
    %cst_42 = arith.constant dense<0.000000e+00> : vector<128x32xf32>
    %91 = tpu.matmul %87, %80, %cst_42 {dimension_numbers = #tpu.dot_dimension_numbers<[1], [0], [0], [1], [0, 0, 1, 1], [], []>} : vector<128x256xf32>, vector<256x32xf32>, vector<128x32xf32> -> vector<128x32xf32>
    %92 = vector.broadcast %90 : vector<128x1xf32> to vector<128x32xf32>
    %93 = arith.mulf %91, %92 : vector<128x32xf32>
    %94 = vector.extract_strided_slice %38 {offsets = [64, 0], sizes = [32, 128], strides = [1, 1]} : vector<128x128xf32> to vector<32x128xf32>
    %cst_43 = arith.constant dense<0.000000e+00> : vector<128x128xf32>
    %95 = tpu.matmul %93, %94, %cst_43 {dimension_numbers = #tpu.dot_dimension_numbers<[1], [0], [0], [1], [0, 0, 1, 1], [], []>} : vector<128x32xf32>, vector<32x128xf32>, vector<128x128xf32> -> vector<128x128xf32>
    %96 = arith.addf %77, %95 : vector<128x128xf32>
    %97 = vector.extract_strided_slice %33 {offsets = [0, 96], sizes = [128, 32], strides = [1, 1]} : vector<128x128xf32> to vector<128x32xf32>
    %c0_44 = arith.constant 0 : index
    %c96 = arith.constant 96 : index
    %98 = vector.load %arg14[%c0_44, %c96] : memref<256x256xf32, #tpu.memory_space<vmem>>, vector<256x32xf32>
    %c0_45 = arith.constant 0 : index
    %c224 = arith.constant 224 : index
    %99 = vector.load %arg14[%c0_45, %c224] : memref<256x256xf32, #tpu.memory_space<vmem>>, vector<256x32xf32>
    %cst_46 = arith.constant dense<0.000000e+00> : vector<128x256xf32>
    %100 = tpu.matmul %97, %98, %cst_46 {dimension_numbers = #tpu.dot_dimension_numbers<[1], [1], [0], [0], [0, 0, 1, 0], [], []>} : vector<128x32xf32>, vector<256x32xf32>, vector<128x256xf32> -> vector<128x256xf32>
    %101 = arith.addf %100, %37 : vector<128x256xf32>
    %cst_47 = arith.constant dense<0xFF800000> : vector<128xf32>
    %102 = vector.multi_reduction <maximumf>, %101, %cst_47 [1] : vector<128x256xf32> to vector<128xf32>
    %103 = vector.shape_cast %102 : vector<128xf32> to vector<128x1xf32>
    %104 = vector.broadcast %103 : vector<128x1xf32> to vector<128x256xf32>
    %105 = arith.subf %101, %104 : vector<128x256xf32>
    %106 = math.exp %105 : vector<128x256xf32>
    %cst_48 = arith.constant dense<0.000000e+00> : vector<128xf32>
    %107 = vector.multi_reduction <add>, %106, %cst_48 [1] : vector<128x256xf32> to vector<128xf32>
    %108 = vector.shape_cast %107 : vector<128xf32> to vector<128x1xf32>
    %109 = tpu.reciprocal %108 : vector<128x1xf32> -> vector<128x1xf32>
    %cst_49 = arith.constant dense<0.000000e+00> : vector<128x32xf32>
    %110 = tpu.matmul %106, %99, %cst_49 {dimension_numbers = #tpu.dot_dimension_numbers<[1], [0], [0], [1], [0, 0, 1, 1], [], []>} : vector<128x256xf32>, vector<256x32xf32>, vector<128x32xf32> -> vector<128x32xf32>
    %111 = vector.broadcast %109 : vector<128x1xf32> to vector<128x32xf32>
    %112 = arith.mulf %110, %111 : vector<128x32xf32>
    %113 = vector.extract_strided_slice %38 {offsets = [96, 0], sizes = [32, 128], strides = [1, 1]} : vector<128x128xf32> to vector<32x128xf32>
    %cst_50 = arith.constant dense<0.000000e+00> : vector<128x128xf32>
    %114 = tpu.matmul %112, %113, %cst_50 {dimension_numbers = #tpu.dot_dimension_numbers<[1], [0], [0], [1], [0, 0, 1, 1], [], []>} : vector<128x32xf32>, vector<32x128xf32>, vector<128x128xf32> -> vector<128x128xf32>
    %115 = arith.addf %96, %114 : vector<128x128xf32>
    %c0_51 = arith.constant 0 : index
    %c0_52 = arith.constant 0 : index
    %116 = vector.load %arg12[%c0_51, %c0_52] : memref<1x128xf32, #tpu.memory_space<vmem>>, vector<1x128xf32>
    %117 = vector.broadcast %116 : vector<1x128xf32> to vector<128x128xf32>
    %118 = arith.addf %115, %117 : vector<128x128xf32>
    %119 = arith.addf %118, %28 : vector<128x128xf32>
    %c0_53 = arith.constant 0 : index
    %c0_54 = arith.constant 0 : index
    %c0_55 = arith.constant 0 : index
    %120 = vector.load %arg13[%c0_53, %c0_54, %c0_55] : memref<1x128x128xf32, #tpu.memory_space<vmem>>, vector<1x128x128xf32>
    %121 = vector.shape_cast %120 : vector<1x128x128xf32> to vector<128x128xf32>
    %122 = vector.shape_cast %119 : vector<128x128xf32> to vector<1x128x128xf32>
    tpu.vector_store %arg13[%c0_53, %c0_54, %c0_55], %122 {strides = array<i32>} : memref<1x128x128xf32, #tpu.memory_space<vmem>>, vector<1x128x128xf32>,
    return
  }
  func.func @transform_0(%arg0: i32, %arg1: i32) -> (i32, i32, i32) {
    %c0_i32 = arith.constant 0 : i32
    %c0_i32_0 = arith.constant 0 : i32
    return %arg0, %arg1, %c0_i32 : i32, i32, i32
  }
  func.func @transform_1(%arg0: i32, %arg1: i32) -> (i32, i32, i32) {
    %c0_i32 = arith.constant 0 : i32
    %c0_i32_0 = arith.constant 0 : i32
    %c0_i32_1 = arith.constant 0 : i32
    return %arg0, %c0_i32, %c0_i32_0 : i32, i32, i32
  }
  func.func @transform_2(%arg0: i32, %arg1: i32) -> (i32, i32, i32) {
    %c0_i32 = arith.constant 0 : i32
    %c0_i32_0 = arith.constant 0 : i32
    %c0_i32_1 = arith.constant 0 : i32
    return %arg0, %c0_i32, %c0_i32_0 : i32, i32, i32
  }
  func.func @transform_3(%arg0: i32, %arg1: i32) -> (i32, i32) {
    %c0_i32 = arith.constant 0 : i32
    %c0_i32_0 = arith.constant 0 : i32
    %c0_i32_1 = arith.constant 0 : i32
    return %c0_i32, %c0_i32_0 : i32, i32
  }
  func.func @transform_4(%arg0: i32, %arg1: i32) -> (i32, i32) {
    %c0_i32 = arith.constant 0 : i32
    %c0_i32_0 = arith.constant 0 : i32
    %c0_i32_1 = arith.constant 0 : i32
    return %c0_i32, %c0_i32_0 : i32, i32
  }
  func.func @transform_5(%arg0: i32, %arg1: i32) -> (i32, i32) {
    %c0_i32 = arith.constant 0 : i32
    %c0_i32_0 = arith.constant 0 : i32
    %c0_i32_1 = arith.constant 0 : i32
    return %c0_i32, %c0_i32_0 : i32, i32
  }
  func.func @transform_6(%arg0: i32, %arg1: i32) -> (i32, i32) {
    %c0_i32 = arith.constant 0 : i32
    %c0_i32_0 = arith.constant 0 : i32
    %c0_i32_1 = arith.constant 0 : i32
    return %c0_i32, %c0_i32_0 : i32, i32
  }
  func.func @transform_7(%arg0: i32, %arg1: i32) -> (i32, i32) {
    %c0_i32 = arith.constant 0 : i32
    %c0_i32_0 = arith.constant 0 : i32
    %c0_i32_1 = arith.constant 0 : i32
    return %c0_i32, %c0_i32_0 : i32, i32
  }
  func.func @transform_8(%arg0: i32, %arg1: i32) -> (i32, i32) {
    %c0_i32 = arith.constant 0 : i32
    %c0_i32_0 = arith.constant 0 : i32
    %c0_i32_1 = arith.constant 0 : i32
    return %c0_i32, %c0_i32_0 : i32, i32
  }
  func.func @transform_9(%arg0: i32, %arg1: i32) -> (i32, i32) {
    %c0_i32 = arith.constant 0 : i32
    %c0_i32_0 = arith.constant 0 : i32
    %c0_i32_1 = arith.constant 0 : i32
    return %c0_i32, %c0_i32_0 : i32, i32
  }
  func.func @transform_10(%arg0: i32, %arg1: i32) -> (i32, i32) {
    %c0_i32 = arith.constant 0 : i32
    %c0_i32_0 = arith.constant 0 : i32
    %c0_i32_1 = arith.constant 0 : i32
    return %c0_i32, %c0_i32_0 : i32, i32
  }
  func.func @transform_11(%arg0: i32, %arg1: i32) -> (i32, i32, i32) {
    %c0_i32 = arith.constant 0 : i32
    %c0_i32_0 = arith.constant 0 : i32
    return %arg0, %arg1, %c0_i32 : i32, i32, i32
  }
}

</mosaic_0001>

<llo_original>
// kernel: tpu_custom_call.1
$region0: #{tpu_custom_call.1}
  #allocation0 [shape = 'u32[]', space=smem, size = 0x4, offset = 0x4, fixed_abs, tag = 'smem constant byte address 0x4 - core index']
  #allocation1 [shape = 'u32[144,128]{1,0:T(1,128)}', space=vmem, size = 0x12000, scoped, tag = 'internal scratch']
  #allocation2 [shape = 'f32[256,256]{1,0:T(8,128)}', space=vmem, size = 0x40000, scoped, tag = 'scratch operand']
  %s0 = inlined_call_operand.hbm [shape: f32[2,256,128], index: 0, kind: input, shape index: {}]
  %s1 = inlined_call_operand.hbm [shape: f32[2,256,128], index: 1, kind: input, shape index: {}]
  %s2 = inlined_call_operand.vmem [shape: f32[2,1,256], index: 2, kind: input, shape index: {}]
  %s3 = inlined_call_operand.vmem [shape: f32[1,128], index: 3, kind: input, shape index: {}]
  %s4 = inlined_call_operand.vmem [shape: f32[1,128], index: 4, kind: input, shape index: {}]
  %s5 = inlined_call_operand.hbm [shape: f32[128,128], index: 5, kind: input, shape index: {}]
  %s6 = inlined_call_operand.vmem [shape: f32[1,128], index: 6, kind: input, shape index: {}]
  %s7 = inlined_call_operand.hbm [shape: f32[128,256], index: 7, kind: input, shape index: {}]
  %s8 = inlined_call_operand.vmem [shape: f32[1,256], index: 8, kind: input, shape index: {}]
  %s9 = inlined_call_operand.hbm [shape: f32[128,128], index: 9, kind: input, shape index: {}]
  %s10 = inlined_call_operand.vmem [shape: f32[1,128], index: 10, kind: input, shape index: {}]
  %s11 = inlined_call_operand.hbm [shape: f32[2,256,128], index: 11, kind: output, shape index: {}]
  %s12 = sld [smem:[#allocation0]]
  $region101: #{tpu_custom_call.1} parent=0
    _
  %s14 = ssub.s32 1, %s12
  %s15 = scalar_select 0, %s14, %s12
  $region1: #{tpu_custom_call.1} parent=0
    #allocation3 [shape = 'u8[131072]{0}', space=vmem, size = 0x20000, scoped, tag = 'input window, operand 0']
    #allocation4 [shape = 's32[2]{0}', space=sflag, size = 0x8, scoped, tag = 'scoped memory for tpu_custom_call.1']
    #allocation5 [shape = 's32[2]{0}', space=sflag, size = 0x8, scoped, tag = 'scoped memory for tpu_custom_call.1']
    #allocation6 [shape = 'u8[262144]{0}', space=vmem, size = 0x40000, scoped, tag = 'input window, operand 1']
    #allocation7 [shape = 's32[2]{0}', space=sflag, size = 0x8, scoped, tag = 'scoped memory for tpu_custom_call.1']
    #allocation8 [shape = 'u8[65536]{0}', space=vmem, size = 0x10000, scoped, tag = 'input window, operand 5, single buffered']
    #allocation9 [shape = 'u8[131072]{0}', space=vmem, size = 0x20000, scoped, tag = 'input window, operand 7, single buffered']
    #allocation10 [shape = 's32[1]{0}', space=sflag, size = 0x4, scoped, tag = 'scoped memory for tpu_custom_call.1']
    #allocation11 [shape = 'u8[65536]{0}', space=vmem, size = 0x10000, scoped, tag = 'input window, operand 9, single buffered']
    #allocation12 [shape = 'u8[131072]{0}', space=vmem, size = 0x20000, scoped, tag = 'output window, operand 0']
    %16 = vsyncpa [#allocation4], 0
    %s17 = scalar_lea.sflag [#allocation4], 1
    %18 = vsyncpa %s17, 0
    %19 = vsyncpa [#allocation7], 0
    %s20 = scalar_lea.sflag [#allocation7], 1
    %21 = vsyncpa %s20, 0
    %22 = vsyncpa [#allocation10], 0
    %23 = vsyncpa [#allocation5], 0
    %s24 = scalar_lea.sflag [#allocation5], 1
    %25 = vsyncpa %s24, 0
    loop: start=0, step=1, limit=6
    $region2: #{tpu_custom_call.1} parent=1 // loop_pre_header
      _
    $region3: #{tpu_custom_call.1} parent=1 // loop_header
      %s27 = sphi 0, %s31
      %p28 = scmp.ge.s32.totalorder %s27, 6
      %s34 = sphi 0, %s46
      %s35 = sphi 0, %s42
      %s36 = sphi 0, %s34
      %s37 = sphi 0, %s35
      %s38 = sphi 0, %s36
      %s39 = sphi 0, %s37
      %s51 = sphi 0, %s53
      %s54 = sphi 0, %s51
      %s55 = sphi 0, %s54
      %s71 = sphi 0, %s55
      %s77 = sphi 0, %s79
      %s80 = sphi 0, %s77
      %s81 = sphi 0, %s80
      %s97 = sphi 0, %s81
      %s103 = sphi 0, %s105
      %s106 = sphi 0, %s103
      %s107 = sphi 0, %s106
      %s123 = sphi 0, %s107
      %s127 = sphi 0, %s127
      %s129 = sphi 0, %s127
      %s130 = sphi 0, %s129
      %s144 = sphi 0, %s130
      %s148 = sphi 0, %s148
      %s150 = sphi 0, %s148
      %s151 = sphi 0, %s150
      %s165 = sphi 0, %s151
      %s169 = sphi 0, %s169
      %s171 = sphi 0, %s169
      %s172 = sphi 0, %s171
      %s186 = sphi 0, %s172
      %s190 = sphi 0, %s190
      %s192 = sphi 0, %s190
      %s193 = sphi 0, %s192
      %s207 = sphi 0, %s193
      %s211 = sphi 0, %s211
      %s213 = sphi 0, %s211
      %s214 = sphi 0, %s213
      %s228 = sphi 0, %s214
      %s232 = sphi 0, %s232
      %s234 = sphi 0, %s232
      %s235 = sphi 0, %s234
      %s249 = sphi 0, %s235
      %s253 = sphi 0, %s253
      %s255 = sphi 0, %s253
      %s256 = sphi 0, %s255
      %s270 = sphi 0, %s256
      %s274 = sphi 0, %s274
      %s276 = sphi 0, %s274
      %s277 = sphi 0, %s276
      %s291 = sphi 0, %s277
      %s299 = sphi 0, %s301
      %s302 = sphi 0, %s299
      %s303 = sphi 0, %s302
      %s319 = sphi 0, %s303
    $region4: #{tpu_custom_call.1} parent=1 // loop_header_branch
      %30 = sbr.rel (%p28) target = $region8
    $region5: #{tpu_custom_call.1} parent=1 // loop_body
      %s32 = ssub.s32 %s27, 1
      %s33 = ssub.s32 %s27, 2
      %s40 = sadd.s32 1, %s35
      %p41 = scmp.ge.s32.totalorder %s40, 2
      %s42 = scalar_select %p41, 0, %s40
      %s43 = sadd.s32 1, %s34
      %s44 = scalar_select %p41, %s43, %s34
      %p45 = scmp.ge.s32.totalorder %s44, 2
      %s46 = scalar_select %p45, 0, %s44
      %s47 = ssub.s32 %s34, %s46
      %s48 = ssub.s32 %s35, %s42
      %s49 = sor.u32 %s47, %s48
      %p50 = scmp.eq.s32.totalorder %s49, 0
      %s52 = sadd.s32 %s51, 1
      %s53 = scalar_select %p50, %s51, %s52
      %p56 = pneg %p50
      %p57 = scmp.eq.s32.totalorder %s27, 3
      %p58 = por %p56, %p57
      %p59 = scmp.ne.s32.totalorder %s51, %s54
      %p60 = scmp.eq.s32.totalorder %s27, 0
      %p61 = por %p59, %p60
      %p62 = scmp.ne.s32.totalorder %s51, %s54
      %p63 = scmp.eq.s32.totalorder %s32, 3
      %p64 = por %p62, %p63
      %p65 = scmp.ne.s32.totalorder %s54, %s55
      %p66 = scmp.eq.s32.totalorder %s32, 0
      %p67 = por %p65, %p66
      %p68 = scmp.ne.s32.totalorder %s54, %s55
      %p69 = scmp.eq.s32.totalorder %s33, 3
      %p70 = por %p68, %p69
      %p72 = scmp.ne.s32.totalorder %s55, %s71
      %p73 = scmp.eq.s32.totalorder %s33, 0
      %p74 = por %p72, %p73
      %s75 = ssub.s32 %s34, %s46
      %p76 = scmp.eq.s32.totalorder %s75, 0
      %s78 = sadd.s32 %s77, 1
      %s79 = scalar_select %p76, %s77, %s78
      %p82 = pneg %p76
      %p83 = scmp.eq.s32.totalorder %s27, 3
      %p84 = por %p82, %p83
      %p85 = scmp.ne.s32.totalorder %s77, %s80
      %p86 = scmp.eq.s32.totalorder %s27, 0
      %p87 = por %p85, %p86
      %p88 = scmp.ne.s32.totalorder %s77, %s80
      %p89 = scmp.eq.s32.totalorder %s32, 3
      %p90 = por %p88, %p89
      %p91 = scmp.ne.s32.totalorder %s80, %s81
      %p92 = scmp.eq.s32.totalorder %s32, 0
      %p93 = por %p91, %p92
      %p94 = scmp.ne.s32.totalorder %s80, %s81
      %p95 = scmp.eq.s32.totalorder %s33, 3
      %p96 = por %p94, %p95
      %p98 = scmp.ne.s32.totalorder %s81, %s97
      %p99 = scmp.eq.s32.totalorder %s33, 0
      %p100 = por %p98, %p99
      %s101 = ssub.s32 %s34, %s46
      %p102 = scmp.eq.s32.totalorder %s101, 0
      %s104 = sadd.s32 %s103, 1
      %s105 = scalar_select %p102, %s103, %s104
      %p108 = pneg %p102
      %p109 = scmp.eq.s32.totalorder %s27, 3
      %p110 = por %p108, %p109
      %p111 = scmp.ne.s32.totalorder %s103, %s106
      %p112 = scmp.eq.s32.totalorder %s27, 0
      %p113 = por %p111, %p112
      %p114 = scmp.ne.s32.totalorder %s103, %s106
      %p115 = scmp.eq.s32.totalorder %s32, 3
      %p116 = por %p114, %p115
      %p117 = scmp.ne.s32.totalorder %s106, %s107
      %p118 = scmp.eq.s32.totalorder %s32, 0
      %p119 = por %p117, %p118
      %p120 = scmp.ne.s32.totalorder %s106, %s107
      %p121 = scmp.eq.s32.totalorder %s33, 3
      %p122 = por %p120, %p121
      %p124 = scmp.ne.s32.totalorder %s107, %s123
      %p125 = scmp.eq.s32.totalorder %s33, 0
      %p126 = por %p124, %p125
      %s128 = sadd.s32 %s127, 1
      %p131 = scmp.eq.s32.totalorder %s27, 3
      %p132 = scmp.ne.s32.totalorder %s127, %s129
      %p133 = scmp.eq.s32.totalorder %s27, 0
      %p134 = por %p132, %p133
      %p135 = scmp.ne.s32.totalorder %s127, %s129
      %p136 = scmp.eq.s32.totalorder %s32, 3
      %p137 = por %p135, %p136
      %p138 = scmp.ne.s32.totalorder %s129, %s130
      %p139 = scmp.eq.s32.totalorder %s32, 0
      %p140 = por %p138, %p139
      %p141 = scmp.ne.s32.totalorder %s129, %s130
      %p142 = scmp.eq.s32.totalorder %s33, 3
      %p143 = por %p141, %p142
      %p145 = scmp.ne.s32.totalorder %s130, %s144
      %p146 = scmp.eq.s32.totalorder %s33, 0
      %p147 = por %p145, %p146
      %s149 = sadd.s32 %s148, 1
      %p152 = scmp.eq.s32.totalorder %s27, 3
      %p153 = scmp.ne.s32.totalorder %s148, %s150
      %p154 = scmp.eq.s32.totalorder %s27, 0
      %p155 = por %p153, %p154
      %p156 = scmp.ne.s32.totalorder %s148, %s150
      %p157 = scmp.eq.s32.totalorder %s32, 3
      %p158 = por %p156, %p157
      %p159 = scmp.ne.s32.totalorder %s150, %s151
      %p160 = scmp.eq.s32.totalorder %s32, 0
      %p161 = por %p159, %p160
      %p162 = scmp.ne.s32.totalorder %s150, %s151
      %p163 = scmp.eq.s32.totalorder %s33, 3
      %p164 = por %p162, %p163
      %p166 = scmp.ne.s32.totalorder %s151, %s165
      %p167 = scmp.eq.s32.totalorder %s33, 0
      %p168 = por %p166, %p167
      %s170 = sadd.s32 %s169, 1
      %p173 = scmp.eq.s32.totalorder %s27, 3
      %p174 = scmp.ne.s32.totalorder %s169, %s171
      %p175 = scmp.eq.s32.totalorder %s27, 0
      %p176 = por %p174, %p175
      %p177 = scmp.ne.s32.totalorder %s169, %s171
      %p178 = scmp.eq.s32.totalorder %s32, 3
      %p179 = por %p177, %p178
      %p180 = scmp.ne.s32.totalorder %s171, %s172
      %p181 = scmp.eq.s32.totalorder %s32, 0
      %p182 = por %p180, %p181
      %p183 = scmp.ne.s32.totalorder %s171, %s172
      %p184 = scmp.eq.s32.totalorder %s33, 3
      %p185 = por %p183, %p184
      %p187 = scmp.ne.s32.totalorder %s172, %s186
      %p188 = scmp.eq.s32.totalorder %s33, 0
      %p189 = por %p187, %p188
      %s191 = sadd.s32 %s190, 1
      %p194 = scmp.eq.s32.totalorder %s27, 3
      %p195 = scmp.ne.s32.totalorder %s190, %s192
      %p196 = scmp.eq.s32.totalorder %s27, 0
      %p197 = por %p195, %p196
      %p198 = scmp.ne.s32.totalorder %s190, %s192
      %p199 = scmp.eq.s32.totalorder %s32, 3
      %p200 = por %p198, %p199
      %p201 = scmp.ne.s32.totalorder %s192, %s193
      %p202 = scmp.eq.s32.totalorder %s32, 0
      %p203 = por %p201, %p202
      %p204 = scmp.ne.s32.totalorder %s192, %s193
      %p205 = scmp.eq.s32.totalorder %s33, 3
      %p206 = por %p204, %p205
      %p208 = scmp.ne.s32.totalorder %s193, %s207
      %p209 = scmp.eq.s32.totalorder %s33, 0
      %p210 = por %p208, %p209
      %s212 = sadd.s32 %s211, 1
      %p215 = scmp.eq.s32.totalorder %s27, 3
      %p216 = scmp.ne.s32.totalorder %s211, %s213
      %p217 = scmp.eq.s32.totalorder %s27, 0
      %p218 = por %p216, %p217
      %p219 = scmp.ne.s32.totalorder %s211, %s213
      %p220 = scmp.eq.s32.totalorder %s32, 3
      %p221 = por %p219, %p220
      %p222 = scmp.ne.s32.totalorder %s213, %s214
      %p223 = scmp.eq.s32.totalorder %s32, 0
      %p224 = por %p222, %p223
      %p225 = scmp.ne.s32.totalorder %s213, %s214
      %p226 = scmp.eq.s32.totalorder %s33, 3
      %p227 = por %p225, %p226
      %p229 = scmp.ne.s32.totalorder %s214, %s228
      %p230 = scmp.eq.s32.totalorder %s33, 0
      %p231 = por %p229, %p230
      %s233 = sadd.s32 %s232, 1
      %p236 = scmp.eq.s32.totalorder %s27, 3
      %p237 = scmp.ne.s32.totalorder %s232, %s234
      %p238 = scmp.eq.s32.totalorder %s27, 0
      %p239 = por %p237, %p238
      %p240 = scmp.ne.s32.totalorder %s232, %s234
      %p241 = scmp.eq.s32.totalorder %s32, 3
      %p242 = por %p240, %p241
      %p243 = scmp.ne.s32.totalorder %s234, %s235
      %p244 = scmp.eq.s32.totalorder %s32, 0
      %p245 = por %p243, %p244
      %p246 = scmp.ne.s32.totalorder %s234, %s235
      %p247 = scmp.eq.s32.totalorder %s33, 3
      %p248 = por %p246, %p247
      %p250 = scmp.ne.s32.totalorder %s235, %s249
      %p251 = scmp.eq.s32.totalorder %s33, 0
      %p252 = por %p250, %p251
      %s254 = sadd.s32 %s253, 1
      %p257 = scmp.eq.s32.totalorder %s27, 3
      %p258 = scmp.ne.s32.totalorder %s253, %s255
      %p259 = scmp.eq.s32.totalorder %s27, 0
      %p260 = por %p258, %p259
      %p261 = scmp.ne.s32.totalorder %s253, %s255
      %p262 = scmp.eq.s32.totalorder %s32, 3
      %p263 = por %p261, %p262
      %p264 = scmp.ne.s32.totalorder %s255, %s256
      %p265 = scmp.eq.s32.totalorder %s32, 0
      %p266 = por %p264, %p265
      %p267 = scmp.ne.s32.totalorder %s255, %s256
      %p268 = scmp.eq.s32.totalorder %s33, 3
      %p269 = por %p267, %p268
      %p271 = scmp.ne.s32.totalorder %s256, %s270
      %p272 = scmp.eq.s32.totalorder %s33, 0
      %p273 = por %p271, %p272
      %s275 = sadd.s32 %s274, 1
      %p278 = scmp.eq.s32.totalorder %s27, 3
      %p279 = scmp.ne.s32.totalorder %s274, %s276
      %p280 = scmp.eq.s32.totalorder %s27, 0
      %p281 = por %p279, %p280
      %p282 = scmp.ne.s32.totalorder %s274, %s276
      %p283 = scmp.eq.s32.totalorder %s32, 3
      %p284 = por %p282, %p283
      %p285 = scmp.ne.s32.totalorder %s276, %s277
      %p286 = scmp.eq.s32.totalorder %s32, 0
      %p287 = por %p285, %p286
      %p288 = scmp.ne.s32.totalorder %s276, %s277
      %p289 = scmp.eq.s32.totalorder %s33, 3
      %p290 = por %p288, %p289
      %p292 = scmp.ne.s32.totalorder %s277, %s291
      %p293 = scmp.eq.s32.totalorder %s33, 0
      %p294 = por %p292, %p293
      %s295 = ssub.s32 %s34, %s46
      %s296 = ssub.s32 %s35, %s42
      %s297 = sor.u32 %s295, %s296
      %p298 = scmp.eq.s32.totalorder %s297, 0
      %s300 = sadd.s32 %s299, 1
      %s301 = scalar_select %p298, %s299, %s300
      %p304 = pneg %p298
      %p305 = scmp.eq.s32.totalorder %s27, 3
      %p306 = por %p304, %p305
      %p307 = scmp.ne.s32.totalorder %s299, %s302
      %p308 = scmp.eq.s32.totalorder %s27, 0
      %p309 = por %p307, %p308
      %p310 = scmp.ne.s32.totalorder %s299, %s302
      %p311 = scmp.eq.s32.totalorder %s32, 3
      %p312 = por %p310, %p311
      %p313 = scmp.ne.s32.totalorder %s302, %s303
      %p314 = scmp.eq.s32.totalorder %s32, 0
      %p315 = por %p313, %p314
      %p316 = scmp.ne.s32.totalorder %s302, %s303
      %p317 = scmp.eq.s32.totalorder %s33, 3
      %p318 = por %p316, %p317
      %p320 = scmp.ne.s32.totalorder %s303, %s319
      %p321 = scmp.eq.s32.totalorder %s33, 0
      %p322 = por %p320, %p321
      %p323 = scmp.le.s32.totalorder 1, %s27
      %p324 = scmp.lt.s32.totalorder %s27, 5
      %p325 = pnand %p323, %p324
      %p326 = pneg %p325
      // Predicated region
      $region9: #{tpu_custom_call.1} parent=5 // pred_check
        _
      $region10: #{tpu_custom_call.1} parent=5 // pred_check_branch
        %328 = sbr.rel (%p325) target = $region12
      $region11: #{tpu_custom_call.1} parent=5 // pred_region
        %s329 = ssub.s32 %s27, 1
        // Predicated region
        $region13: #{tpu_custom_call.1} parent=11 // pred_check
          %p330 = pneg %p140
        $region14: #{tpu_custom_call.1} parent=11 // pred_check_branch
          %332 = sbr.rel (%p330) target = $region16
        $region15: #{tpu_custom_call.1} parent=11 // pred_region
          _
        $region16: #{tpu_custom_call.1} parent=11 // pred_fallthru
          _
        // Predicated region
        $region17: #{tpu_custom_call.1} parent=11 // pred_check
          %p333 = pneg %p161
        $region18: #{tpu_custom_call.1} parent=11 // pred_check_branch
          %335 = sbr.rel (%p333) target = $region20
        $region19: #{tpu_custom_call.1} parent=11 // pred_region
          _
        $region20: #{tpu_custom_call.1} parent=11 // pred_fallthru
          _
        // Predicated region
        $region21: #{tpu_custom_call.1} parent=11 // pred_check
          %p336 = pneg %p182
        $region22: #{tpu_custom_call.1} parent=11 // pred_check_branch
          %338 = sbr.rel (%p336) target = $region24
        $region23: #{tpu_custom_call.1} parent=11 // pred_region
          %s340 = ssub.s32 2048, 2048
          %341 = vsyncadd [#allocation7], %s340
          %s342 = sshll.u32 [#allocation8], 4
          %s343 = int_to_ptr.vmem [resolvable:$true] %s342
          %348 = dma.hbm_to_vmem [thread:$0]  %s5, 2048, %s343, [#allocation7], 128, 128, 8
        $region24: #{tpu_custom_call.1} parent=11 // pred_fallthru
          _
        // Predicated region
        $region25: #{tpu_custom_call.1} parent=11 // pred_check
          %p349 = pneg %p203
        $region26: #{tpu_custom_call.1} parent=11 // pred_check_branch
          %351 = sbr.rel (%p349) target = $region28
        $region27: #{tpu_custom_call.1} parent=11 // pred_region
          _
        $region28: #{tpu_custom_call.1} parent=11 // pred_fallthru
          _
        // Predicated region
        $region29: #{tpu_custom_call.1} parent=11 // pred_check
          %p352 = pneg %p224
        $region30: #{tpu_custom_call.1} parent=11 // pred_check_branch
          %354 = sbr.rel (%p352) target = $region32
        $region31: #{tpu_custom_call.1} parent=11 // pred_region
          %s356 = ssub.s32 4096, 4096
          %357 = vsyncadd [#allocation10], %s356
          %s358 = sshll.u32 [#allocation9], 4
          %s359 = int_to_ptr.vmem [resolvable:$true] %s358
          %364 = dma.hbm_to_vmem [thread:$0]  %s7, 4096, %s359, [#allocation10], 256, 256, 16
        $region32: #{tpu_custom_call.1} parent=11 // pred_fallthru
          _
        // Predicated region
        $region33: #{tpu_custom_call.1} parent=11 // pred_check
          %p365 = pneg %p245
        $region34: #{tpu_custom_call.1} parent=11 // pred_check_branch
          %367 = sbr.rel (%p365) target = $region36
        $region35: #{tpu_custom_call.1} parent=11 // pred_region
          _
        $region36: #{tpu_custom_call.1} parent=11 // pred_fallthru
          _
        // Predicated region
        $region37: #{tpu_custom_call.1} parent=11 // pred_check
          %p368 = pneg %p266
        $region38: #{tpu_custom_call.1} parent=11 // pred_check_branch
          %370 = sbr.rel (%p368) target = $region40
        $region39: #{tpu_custom_call.1} parent=11 // pred_region
          %s372 = ssub.s32 2048, 2048
          %373 = vsyncadd [#allocation10], %s372
          %s374 = sshll.u32 [#allocation11], 4
          %s375 = int_to_ptr.vmem [resolvable:$true] %s374
          %380 = dma.hbm_to_vmem [thread:$0]  %s9, 2048, %s375, [#allocation10], 128, 128, 8
        $region40: #{tpu_custom_call.1} parent=11 // pred_fallthru
          _
        // Predicated region
        $region41: #{tpu_custom_call.1} parent=11 // pred_check
          %p381 = pneg %p287
        $region42: #{tpu_custom_call.1} parent=11 // pred_check_branch
          %383 = sbr.rel (%p381) target = $region44
        $region43: #{tpu_custom_call.1} parent=11 // pred_region
          _
        $region44: #{tpu_custom_call.1} parent=11 // pred_fallthru
          _
      $region12: #{tpu_custom_call.1} parent=5 // pred_fallthru
        _
      %p384 = scmp.lt.s32.totalorder %s27, 4
      // Predicated region
      $region45: #{tpu_custom_call.1} parent=5 // pred_check
        %p385 = pneg %p384
      $region46: #{tpu_custom_call.1} parent=5 // pred_check_branch
        %387 = sbr.rel (%p385) target = $region48
      $region47: #{tpu_custom_call.1} parent=5 // pred_region
        // Predicated region
        $region49: #{tpu_custom_call.1} parent=47 // pred_check
          %p388 = pneg %p61
        $region50: #{tpu_custom_call.1} parent=47 // pred_check_branch
          %390 = sbr.rel (%p388) target = $region52
        $region51: #{tpu_custom_call.1} parent=47 // pred_region
          %s391 = sand.u32 %s51, 1
          %s392 = scalar_lea.sflag [#allocation4], %s391
          %s393 = sand.u32 %s51, 1
          %s394 = smul.addr %s393, 128
          %s395 = scalar_lea.vmem [#allocation3], %s394
          %s396 = smul.u32 16, %s35
          %s398 = ssub.s32 2048, 2048
          %399 = vsyncadd %s392, %s398
          %s400 = smul.addr %s34, 32
          %s401 = sadd.s32 %s396, %s400
          %s402 = smul.addr %s401, 128
          %s403 = scalar_lea.hbm %s0, %s402
          %s404 = sshll.u32 %s395, 4
          %s405 = int_to_ptr.vmem [resolvable:$true] %s404
          %410 = dma.hbm_to_vmem [thread:$0]  %s403, 2048, %s405, %s392, 128, 128, 8
        $region52: #{tpu_custom_call.1} parent=47 // pred_fallthru
          _
        // Predicated region
        $region53: #{tpu_custom_call.1} parent=47 // pred_check
          %p411 = pneg %p87
        $region54: #{tpu_custom_call.1} parent=47 // pred_check_branch
          %413 = sbr.rel (%p411) target = $region56
        $region55: #{tpu_custom_call.1} parent=47 // pred_region
          %s414 = sand.u32 %s27, 1
          %s415 = scalar_lea.sflag [#allocation7], %s414
          %s416 = sand.u32 %s77, 1
          %s417 = smul.addr %s416, 256
          %s418 = scalar_lea.vmem [#allocation6], %s417
          %s420 = ssub.s32 4096, 4096
          %421 = vsyncadd %s415, %s420
          %s422 = smul.addr %s34, 32
          %s423 = smul.addr %s422, 128
          %s424 = scalar_lea.hbm %s1, %s423
          %s425 = sshll.u32 %s418, 4
          %s426 = int_to_ptr.vmem [resolvable:$true] %s425
          %431 = dma.hbm_to_vmem [thread:$0]  %s424, 4096, %s426, %s415, 128, 128, 8
        $region56: #{tpu_custom_call.1} parent=47 // pred_fallthru
          _
        // Predicated region
        $region57: #{tpu_custom_call.1} parent=47 // pred_check
          %p432 = pneg %p113
        $region58: #{tpu_custom_call.1} parent=47 // pred_check_branch
          %434 = sbr.rel (%p432) target = $region60
        $region59: #{tpu_custom_call.1} parent=47 // pred_region
          %p435 = scmp.lt.s32.totalorder %s34, 1
          %s436 = scalar_select %p435, %s34, 1
          %s437 = smul.addr %s436, 2
          %s438 = scalar_lea.vmem %s2, %s437
        $region60: #{tpu_custom_call.1} parent=47 // pred_fallthru
          _
      $region48: #{tpu_custom_call.1} parent=5 // pred_fallthru
        _
      %p439 = scmp.le.s32.totalorder 1, %s27
      %p440 = scmp.lt.s32.totalorder %s27, 5
      %p441 = pnand %p439, %p440
      %p442 = pneg %p441
      // Predicated region
      $region61: #{tpu_custom_call.1} parent=5 // pred_check
        _
      $region62: #{tpu_custom_call.1} parent=5 // pred_check_branch
        %444 = sbr.rel (%p441) target = $region64
      $region63: #{tpu_custom_call.1} parent=5 // pred_region
        %s445 = ssub.s32 %s27, 1
        %s446 = sand.u32 %s54, 1
        %s447 = scalar_lea.sflag [#allocation4], %s446
        %s448 = sand.u32 %s54, 1
        %s449 = smul.addr %s448, 128
        %s450 = scalar_lea.vmem [#allocation3], %s449
        // Predicated region
        $region65: #{tpu_custom_call.1} parent=63 // pred_check
          %p451 = pneg %p67
        $region66: #{tpu_custom_call.1} parent=63 // pred_check_branch
          %453 = sbr.rel (%p451) target = $region68
        $region67: #{tpu_custom_call.1} parent=63 // pred_region
          %454 = dma.done %s447, 2048
        $region68: #{tpu_custom_call.1} parent=63 // pred_fallthru
          _
        %s455 = sand.u32 %s32, 1
        %s456 = scalar_lea.sflag [#allocation7], %s455
        %s457 = sand.u32 %s80, 1
        %s458 = smul.addr %s457, 256
        %s459 = scalar_lea.vmem [#allocation6], %s458
        // Predicated region
        $region69: #{tpu_custom_call.1} parent=63 // pred_check
          %p460 = pneg %p93
        $region70: #{tpu_custom_call.1} parent=63 // pred_check_branch
          %462 = sbr.rel (%p460) target = $region72
        $region71: #{tpu_custom_call.1} parent=63 // pred_region
          %463 = dma.done %s456, 4096
        $region72: #{tpu_custom_call.1} parent=63 // pred_fallthru
          _
        // Predicated region
        $region73: #{tpu_custom_call.1} parent=63 // pred_check
          %p464 = pneg %p182
        $region74: #{tpu_custom_call.1} parent=63 // pred_check_branch
          %466 = sbr.rel (%p464) target = $region76
        $region75: #{tpu_custom_call.1} parent=63 // pred_region
          %467 = dma.done [#allocation7], 2048
        $region76: #{tpu_custom_call.1} parent=63 // pred_fallthru
          _
        // Predicated region
        $region77: #{tpu_custom_call.1} parent=63 // pred_check
          %p468 = pneg %p224
        $region78: #{tpu_custom_call.1} parent=63 // pred_check_branch
          %470 = sbr.rel (%p468) target = $region80
        $region79: #{tpu_custom_call.1} parent=63 // pred_region
          %471 = dma.done [#allocation10], 4096
        $region80: #{tpu_custom_call.1} parent=63 // pred_fallthru
          _
        // Predicated region
        $region81: #{tpu_custom_call.1} parent=63 // pred_check
          %p472 = pneg %p266
        $region82: #{tpu_custom_call.1} parent=63 // pred_check_branch
          %474 = sbr.rel (%p472) target = $region84
        $region83: #{tpu_custom_call.1} parent=63 // pred_region
          %475 = dma.done [#allocation10], 2048
        $region84: #{tpu_custom_call.1} parent=63 // pred_fallthru
          _
        %s476 = sand.u32 %s54, 1
        %s477 = scalar_lea.sflag [#allocation4], %s476
        %s478 = sand.u32 %s54, 1
        %s479 = smul.addr %s478, 128
        %s480 = scalar_lea.vmem [#allocation3], %s479
        %p481 = pneg %p67
        %p482 = pneg %p64
        %s483 = sand.u32 %s32, 1
        %s484 = scalar_lea.sflag [#allocation7], %s483
        %s485 = sand.u32 %s80, 1
        %s486 = smul.addr %s485, 256
        %s487 = scalar_lea.vmem [#allocation6], %s486
        %p488 = pneg %p93
        %p489 = pneg %p90
        %p490 = scmp.lt.s32.totalorder %s36, 1
        %s491 = scalar_select %p490, %s36, 1
        %s492 = smul.addr %s491, 2
        %s493 = scalar_lea.vmem %s2, %s492
        %p494 = pneg %p119
        %p495 = pneg %p116
        %p496 = pneg %p140
        %p497 = pneg %p137
        %p498 = pneg %p161
        %p499 = pneg %p158
        %p500 = pneg %p182
        %p501 = pneg %p179
        %p502 = pneg %p203
        %p503 = pneg %p200
        %p504 = pneg %p224
        %p505 = pneg %p221
        %p506 = pneg %p245
        %p507 = pneg %p242
        %p508 = pneg %p266
        %p509 = pneg %p263
        %p510 = pneg %p287
        %p511 = pneg %p284
        %p512 = pneg %p315
        %p513 = pneg %p312
        %s514 = sand.u32 %s302, 1
        %s515 = scalar_lea.sflag [#allocation5], %s514
        %s516 = sand.u32 %s302, 1
        %s517 = smul.addr %s516, 128
        %s518 = scalar_lea.vmem [#allocation12], %s517
        %s519 = smul.u32 16, %s37
        %p520 = scmp.lt.s32.totalorder %s36, 1
        %s521 = scalar_select %p520, %s36, 1
        %s522 = smul.addr %s521, 2
        %s523 = scalar_lea.vmem %s2, %s522
        %s524 = smul.u32 16, %s37
        %p525 = scmp.eq.s32.totalorder %s37, 0
        // Predicated region
        $region85: #{tpu_custom_call.1} parent=63 // pred_check
          %p526 = pneg %p525
        $region86: #{tpu_custom_call.1} parent=63 // pred_check_branch
          %528 = sbr.rel (%p526) target = $region88
        $region87: #{tpu_custom_call.1} parent=63 // pred_region
          %v529 = vld [vmem:[%s459] sm:$0xff]
          %v530 = vld [vmem:[%s459 + $0x8] sm:$0xff]
          %v531 = vld [vmem:[%s459 + $0x10] sm:$0xff]
          %v532 = vld [vmem:[%s459 + $0x18] sm:$0xff]
          %v533 = vld [vmem:[%s459 + $0x20] sm:$0xff]
          %v534 = vld [vmem:[%s459 + $0x28] sm:$0xff]
          %v535 = vld [vmem:[%s459 + $0x30] sm:$0xff]
          %v536 = vld [vmem:[%s459 + $0x38] sm:$0xff]
          %v537 = vld [vmem:[%s459 + $0x40] sm:$0xff]
          %v538 = vld [vmem:[%s459 + $0x48] sm:$0xff]
          %v539 = vld [vmem:[%s459 + $0x50] sm:$0xff]
          %v540 = vld [vmem:[%s459 + $0x58] sm:$0xff]
          %v541 = vld [vmem:[%s459 + $0x60] sm:$0xff]
          %v542 = vld [vmem:[%s459 + $0x68] sm:$0xff]
          %v543 = vld [vmem:[%s459 + $0x70] sm:$0xff]
          %v544 = vld [vmem:[%s459 + $0x78] sm:$0xff]
          %v545 = vld [vmem:[%s459 + $0x80] sm:$0xff]
          %v546 = vld [vmem:[%s459 + $0x88] sm:$0xff]
          %v547 = vld [vmem:[%s459 + $0x90] sm:$0xff]
          %v548 = vld [vmem:[%s459 + $0x98] sm:$0xff]
          %v549 = vld [vmem:[%s459 + $0xa0] sm:$0xff]
          %v550 = vld [vmem:[%s459 + $0xa8] sm:$0xff]
          %v551 = vld [vmem:[%s459 + $0xb0] sm:$0xff]
          %v552 = vld [vmem:[%s459 + $0xb8] sm:$0xff]
          %v553 = vld [vmem:[%s459 + $0xc0] sm:$0xff]
          %v554 = vld [vmem:[%s459 + $0xc8] sm:$0xff]
          %v555 = vld [vmem:[%s459 + $0xd0] sm:$0xff]
          %v556 = vld [vmem:[%s459 + $0xd8] sm:$0xff]
          %v557 = vld [vmem:[%s459 + $0xe0] sm:$0xff]
          %v558 = vld [vmem:[%s459 + $0xe8] sm:$0xff]
          %v559 = vld [vmem:[%s459 + $0xf0] sm:$0xff]
          %v560 = vld [vmem:[%s459 + $0xf8] sm:$0xff]
          %v561 = vld [vmem:[%s3] sm:$0x1]
          %v562 = vld [vmem:[%s4] sm:$0x1]
          %563 = vadd.xlane.f32.xlu0 %v529
          %v564 = vpop.xlane.xlu0 %563
          %565 = vadd.xlane.f32.xlu0 %v530
          %v566 = vpop.xlane.xlu0 %565
          %567 = vadd.xlane.f32.xlu0 %v531
          %v568 = vpop.xlane.xlu0 %567
          %569 = vadd.xlane.f32.xlu0 %v532
          %v570 = vpop.xlane.xlu0 %569
          %571 = vadd.xlane.f32.xlu0 %v533
          %v572 = vpop.xlane.xlu0 %571
          %573 = vadd.xlane.f32.xlu0 %v534
          %v574 = vpop.xlane.xlu0 %573
          %575 = vadd.xlane.f32.xlu0 %v535
          %v576 = vpop.xlane.xlu0 %575
          %577 = vadd.xlane.f32.xlu0 %v536
          %v578 = vpop.xlane.xlu0 %577
          %579 = vadd.xlane.f32.xlu0 %v537
          %v580 = vpop.xlane.xlu0 %579
          %581 = vadd.xlane.f32.xlu0 %v538
          %v582 = vpop.xlane.xlu0 %581
          %583 = vadd.xlane.f32.xlu0 %v539
          %v584 = vpop.xlane.xlu0 %583
          %585 = vadd.xlane.f32.xlu0 %v540
          %v586 = vpop.xlane.xlu0 %585
          %587 = vadd.xlane.f32.xlu0 %v541
          %v588 = vpop.xlane.xlu0 %587
          %589 = vadd.xlane.f32.xlu0 %v542
          %v590 = vpop.xlane.xlu0 %589
          %591 = vadd.xlane.f32.xlu0 %v543
          %v592 = vpop.xlane.xlu0 %591
          %593 = vadd.xlane.f32.xlu0 %v544
          %v594 = vpop.xlane.xlu0 %593
          %595 = vadd.xlane.f32.xlu0 %v545
          %v596 = vpop.xlane.xlu0 %595
          %597 = vadd.xlane.f32.xlu0 %v546
          %v598 = vpop.xlane.xlu0 %597
          %599 = vadd.xlane.f32.xlu0 %v547
          %v600 = vpop.xlane.xlu0 %599
          %601 = vadd.xlane.f32.xlu0 %v548
          %v602 = vpop.xlane.xlu0 %601
          %603 = vadd.xlane.f32.xlu0 %v549
          %v604 = vpop.xlane.xlu0 %603
          %605 = vadd.xlane.f32.xlu0 %v550
          %v606 = vpop.xlane.xlu0 %605
          %607 = vadd.xlane.f32.xlu0 %v551
          %v608 = vpop.xlane.xlu0 %607
          %609 = vadd.xlane.f32.xlu0 %v552
          %v610 = vpop.xlane.xlu0 %609
          %611 = vadd.xlane.f32.xlu0 %v553
          %v612 = vpop.xlane.xlu0 %611
          %613 = vadd.xlane.f32.xlu0 %v554
          %v614 = vpop.xlane.xlu0 %613
          %615 = vadd.xlane.f32.xlu0 %v555
          %v616 = vpop.xlane.xlu0 %615
          %617 = vadd.xlane.f32.xlu0 %v556
          %v618 = vpop.xlane.xlu0 %617
          %619 = vadd.xlane.f32.xlu0 %v557
          %v620 = vpop.xlane.xlu0 %619
          %621 = vadd.xlane.f32.xlu0 %v558
          %v622 = vpop.xlane.xlu0 %621
          %623 = vadd.xlane.f32.xlu0 %v559
          %v624 = vpop.xlane.xlu0 %623
          %625 = vadd.xlane.f32.xlu0 %v560
          %v626 = vpop.xlane.xlu0 %625
          %v627 = vrcp.pop 128.0
          %v628 = vmul.f32 %v564, %v627
          %v629 = vmul.f32 %v566, %v627
          %v630 = vmul.f32 %v568, %v627
          %v631 = vmul.f32 %v570, %v627
          %v632 = vmul.f32 %v572, %v627
          %v633 = vmul.f32 %v574, %v627
          %v634 = vmul.f32 %v576, %v627
          %v635 = vmul.f32 %v578, %v627
          %v636 = vmul.f32 %v580, %v627
          %v637 = vmul.f32 %v582, %v627
          %v638 = vmul.f32 %v584, %v627
          %v639 = vmul.f32 %v586, %v627
          %v640 = vmul.f32 %v588, %v627
          %v641 = vmul.f32 %v590, %v627
          %v642 = vmul.f32 %v592, %v627
          %v643 = vmul.f32 %v594, %v627
          %v644 = vmul.f32 %v596, %v627
          %v645 = vmul.f32 %v598, %v627
          %v646 = vmul.f32 %v600, %v627
          %v647 = vmul.f32 %v602, %v627
          %v648 = vmul.f32 %v604, %v627
          %v649 = vmul.f32 %v606, %v627
          %v650 = vmul.f32 %v608, %v627
          %v651 = vmul.f32 %v610, %v627
          %v652 = vmul.f32 %v612, %v627
          %v653 = vmul.f32 %v614, %v627
          %v654 = vmul.f32 %v616, %v627
          %v655 = vmul.f32 %v618, %v627
          %v656 = vmul.f32 %v620, %v627
          %v657 = vmul.f32 %v622, %v627
          %v658 = vmul.f32 %v624, %v627
          %v659 = vmul.f32 %v626, %v627
          %v660 = vsub.f32 %v529, %v628
          %v661 = vsub.f32 %v530, %v629
          %v662 = vsub.f32 %v531, %v630
          %v663 = vsub.f32 %v532, %v631
          %v664 = vsub.f32 %v533, %v632
          %v665 = vsub.f32 %v534, %v633
          %v666 = vsub.f32 %v535, %v634
          %v667 = vsub.f32 %v536, %v635
          %v668 = vsub.f32 %v537, %v636
          %v669 = vsub.f32 %v538, %v637
          %v670 = vsub.f32 %v539, %v638
          %v671 = vsub.f32 %v540, %v639
          %v672 = vsub.f32 %v541, %v640
          %v673 = vsub.f32 %v542, %v641
          %v674 = vsub.f32 %v543, %v642
          %v675 = vsub.f32 %v544, %v643
          %v676 = vsub.f32 %v545, %v644
          %v677 = vsub.f32 %v546, %v645
          %v678 = vsub.f32 %v547, %v646
          %v679 = vsub.f32 %v548, %v647
          %v680 = vsub.f32 %v549, %v648
          %v681 = vsub.f32 %v550, %v649
          %v682 = vsub.f32 %v551, %v650
          %v683 = vsub.f32 %v552, %v651
          %v684 = vsub.f32 %v553, %v652
          %v685 = vsub.f32 %v554, %v653
          %v686 = vsub.f32 %v555, %v654
          %v687 = vsub.f32 %v556, %v655
          %v688 = vsub.f32 %v557, %v656
          %v689 = vsub.f32 %v558, %v657
          %v690 = vsub.f32 %v559, %v658
          %v691 = vsub.f32 %v560, %v659
          %v692 = vmul.f32 %v660, %v660
          %v693 = vmul.f32 %v661, %v661
          %v694 = vmul.f32 %v662, %v662
          %v695 = vmul.f32 %v663, %v663
          %v696 = vmul.f32 %v664, %v664
          %v697 = vmul.f32 %v665, %v665
          %v698 = vmul.f32 %v666, %v666
          %v699 = vmul.f32 %v667, %v667
          %v700 = vmul.f32 %v668, %v668
          %v701 = vmul.f32 %v669, %v669
          %v702 = vmul.f32 %v670, %v670
          %v703 = vmul.f32 %v671, %v671
          %v704 = vmul.f32 %v672, %v672
          %v705 = vmul.f32 %v673, %v673
          %v706 = vmul.f32 %v674, %v674
          %v707 = vmul.f32 %v675, %v675
          %v708 = vmul.f32 %v676, %v676
          %v709 = vmul.f32 %v677, %v677
          %v710 = vmul.f32 %v678, %v678
          %v711 = vmul.f32 %v679, %v679
          %v712 = vmul.f32 %v680, %v680
          %v713 = vmul.f32 %v681, %v681
          %v714 = vmul.f32 %v682, %v682
          %v715 = vmul.f32 %v683, %v683
          %v716 = vmul.f32 %v684, %v684
          %v717 = vmul.f32 %v685, %v685
          %v718 = vmul.f32 %v686, %v686
          %v719 = vmul.f32 %v687, %v687
          %v720 = vmul.f32 %v688, %v688
          %v721 = vmul.f32 %v689, %v689
          %v722 = vmul.f32 %v690, %v690
          %v723 = vmul.f32 %v691, %v691
          %724 = vadd.xlane.f32.xlu0 %v692
          %v725 = vpop.xlane.xlu0 %724
          %726 = vadd.xlane.f32.xlu0 %v693
          %v727 = vpop.xlane.xlu0 %726
          %728 = vadd.xlane.f32.xlu0 %v694
          %v729 = vpop.xlane.xlu0 %728
          %730 = vadd.xlane.f32.xlu0 %v695
          %v731 = vpop.xlane.xlu0 %730
          %732 = vadd.xlane.f32.xlu0 %v696
          %v733 = vpop.xlane.xlu0 %732
          %734 = vadd.xlane.f32.xlu0 %v697
          %v735 = vpop.xlane.xlu0 %734
          %736 = vadd.xlane.f32.xlu0 %v698
          %v737 = vpop.xlane.xlu0 %736
          %738 = vadd.xlane.f32.xlu0 %v699
          %v739 = vpop.xlane.xlu0 %738
          %740 = vadd.xlane.f32.xlu0 %v700
          %v741 = vpop.xlane.xlu0 %740
          %742 = vadd.xlane.f32.xlu0 %v701
          %v743 = vpop.xlane.xlu0 %742
          %744 = vadd.xlane.f32.xlu0 %v702
          %v745 = vpop.xlane.xlu0 %744
          %746 = vadd.xlane.f32.xlu0 %v703
          %v747 = vpop.xlane.xlu0 %746
          %748 = vadd.xlane.f32.xlu0 %v704
          %v749 = vpop.xlane.xlu0 %748
          %750 = vadd.xlane.f32.xlu0 %v705
          %v751 = vpop.xlane.xlu0 %750
          %752 = vadd.xlane.f32.xlu0 %v706
          %v753 = vpop.xlane.xlu0 %752
          %754 = vadd.xlane.f32.xlu0 %v707
          %v755 = vpop.xlane.xlu0 %754
          %756 = vadd.xlane.f32.xlu0 %v708
          %v757 = vpop.xlane.xlu0 %756
          %758 = vadd.xlane.f32.xlu0 %v709
          %v759 = vpop.xlane.xlu0 %758
          %760 = vadd.xlane.f32.xlu0 %v710
          %v761 = vpop.xlane.xlu0 %760
          %762 = vadd.xlane.f32.xlu0 %v711
          %v763 = vpop.xlane.xlu0 %762
          %764 = vadd.xlane.f32.xlu0 %v712
          %v765 = vpop.xlane.xlu0 %764
          %766 = vadd.xlane.f32.xlu0 %v713
          %v767 = vpop.xlane.xlu0 %766
          %768 = vadd.xlane.f32.xlu0 %v714
          %v769 = vpop.xlane.xlu0 %768
          %770 = vadd.xlane.f32.xlu0 %v715
          %v771 = vpop.xlane.xlu0 %770
          %772 = vadd.xlane.f32.xlu0 %v716
          %v773 = vpop.xlane.xlu0 %772
          %774 = vadd.xlane.f32.xlu0 %v717
          %v775 = vpop.xlane.xlu0 %774
          %776 = vadd.xlane.f32.xlu0 %v718
          %v777 = vpop.xlane.xlu0 %776
          %778 = vadd.xlane.f32.xlu0 %v719
          %v779 = vpop.xlane.xlu0 %778
          %780 = vadd.xlane.f32.xlu0 %v720
          %v781 = vpop.xlane.xlu0 %780
          %782 = vadd.xlane.f32.xlu0 %v721
          %v783 = vpop.xlane.xlu0 %782
          %784 = vadd.xlane.f32.xlu0 %v722
          %v785 = vpop.xlane.xlu0 %784
          %786 = vadd.xlane.f32.xlu0 %v723
          %v787 = vpop.xlane.xlu0 %786
          %v788 = vmul.f32 %v725, %v627
          %v789 = vmul.f32 %v727, %v627
          %v790 = vmul.f32 %v729, %v627
          %v791 = vmul.f32 %v731, %v627
          %v792 = vmul.f32 %v733, %v627
          %v793 = vmul.f32 %v735, %v627
          %v794 = vmul.f32 %v737, %v627
          %v795 = vmul.f32 %v739, %v627
          %v796 = vmul.f32 %v741, %v627
          %v797 = vmul.f32 %v743, %v627
          %v798 = vmul.f32 %v745, %v627
          %v799 = vmul.f32 %v747, %v627
          %v800 = vmul.f32 %v749, %v627
          %v801 = vmul.f32 %v751, %v627
          %v802 = vmul.f32 %v753, %v627
          %v803 = vmul.f32 %v755, %v627
          %v804 = vmul.f32 %v757, %v627
          %v805 = vmul.f32 %v759, %v627
          %v806 = vmul.f32 %v761, %v627
          %v807 = vmul.f32 %v763, %v627
          %v808 = vmul.f32 %v765, %v627
          %v809 = vmul.f32 %v767, %v627
          %v810 = vmul.f32 %v769, %v627
          %v811 = vmul.f32 %v771, %v627
          %v812 = vmul.f32 %v773, %v627
          %v813 = vmul.f32 %v775, %v627
          %v814 = vmul.f32 %v777, %v627
          %v815 = vmul.f32 %v779, %v627
          %v816 = vmul.f32 %v781, %v627
          %v817 = vmul.f32 %v783, %v627
          %v818 = vmul.f32 %v785, %v627
          %v819 = vmul.f32 %v787, %v627
          %v820 = vadd.f32 %v788, 1e-06
          %v821 = vadd.f32 %v789, 1e-06
          %v822 = vadd.f32 %v790, 1e-06
          %v823 = vadd.f32 %v791, 1e-06
          %v824 = vadd.f32 %v792, 1e-06
          %v825 = vadd.f32 %v793, 1e-06
          %v826 = vadd.f32 %v794, 1e-06
          %v827 = vadd.f32 %v795, 1e-06
          %v828 = vadd.f32 %v796, 1e-06
          %v829 = vadd.f32 %v797, 1e-06
          %v830 = vadd.f32 %v798, 1e-06
          %v831 = vadd.f32 %v799, 1e-06
          %v832 = vadd.f32 %v800, 1e-06
          %v833 = vadd.f32 %v801, 1e-06
          %v834 = vadd.f32 %v802, 1e-06
          %v835 = vadd.f32 %v803, 1e-06
          %v836 = vadd.f32 %v804, 1e-06
          %v837 = vadd.f32 %v805, 1e-06
          %v838 = vadd.f32 %v806, 1e-06
          %v839 = vadd.f32 %v807, 1e-06
          %v840 = vadd.f32 %v808, 1e-06
          %v841 = vadd.f32 %v809, 1e-06
          %v842 = vadd.f32 %v810, 1e-06
          %v843 = vadd.f32 %v811, 1e-06
          %v844 = vadd.f32 %v812, 1e-06
          %v845 = vadd.f32 %v813, 1e-06
          %v846 = vadd.f32 %v814, 1e-06
          %v847 = vadd.f32 %v815, 1e-06
          %v848 = vadd.f32 %v816, 1e-06
          %v849 = vadd.f32 %v817, 1e-06
          %v850 = vadd.f32 %v818, 1e-06
          %v851 = vadd.f32 %v819, 1e-06
          %v852 = vrsqrt.pop %v820
          %v853 = vrsqrt.pop %v821
          %v854 = vrsqrt.pop %v822
          %v855 = vrsqrt.pop %v823
          %v856 = vrsqrt.pop %v824
          %v857 = vrsqrt.pop %v825
          %v858 = vrsqrt.pop %v826
          %v859 = vrsqrt.pop %v827
          %v860 = vrsqrt.pop %v828
          %v861 = vrsqrt.pop %v829
          %v862 = vrsqrt.pop %v830
          %v863 = vrsqrt.pop %v831
          %v864 = vrsqrt.pop %v832
          %v865 = vrsqrt.pop %v833
          %v866 = vrsqrt.pop %v834
          %v867 = vrsqrt.pop %v835
          %v868 = vrsqrt.pop %v836
          %v869 = vrsqrt.pop %v837
          %v870 = vrsqrt.pop %v838
          %v871 = vrsqrt.pop %v839
          %v872 = vrsqrt.pop %v840
          %v873 = vrsqrt.pop %v841
          %v874 = vrsqrt.pop %v842
          %v875 = vrsqrt.pop %v843
          %v876 = vrsqrt.pop %v844
          %v877 = vrsqrt.pop %v845
          %v878 = vrsqrt.pop %v846
          %v879 = vrsqrt.pop %v847
          %v880 = vrsqrt.pop %v848
          %v881 = vrsqrt.pop %v849
          %v882 = vrsqrt.pop %v850
          %v883 = vrsqrt.pop %v851
          %v884 = vmul.f32 %v660, %v852
          %v885 = vmul.f32 %v661, %v853
          %v886 = vmul.f32 %v662, %v854
          %v887 = vmul.f32 %v663, %v855
          %v888 = vmul.f32 %v664, %v856
          %v889 = vmul.f32 %v665, %v857
          %v890 = vmul.f32 %v666, %v858
          %v891 = vmul.f32 %v667, %v859
          %v892 = vmul.f32 %v668, %v860
          %v893 = vmul.f32 %v669, %v861
          %v894 = vmul.f32 %v670, %v862
          %v895 = vmul.f32 %v671, %v863
          %v896 = vmul.f32 %v672, %v864
          %v897 = vmul.f32 %v673, %v865
          %v898 = vmul.f32 %v674, %v866
          %v899 = vmul.f32 %v675, %v867
          %v900 = vmul.f32 %v676, %v868
          %v901 = vmul.f32 %v677, %v869
          %v902 = vmul.f32 %v678, %v870
          %v903 = vmul.f32 %v679, %v871
          %v904 = vmul.f32 %v680, %v872
          %v905 = vmul.f32 %v681, %v873
          %v906 = vmul.f32 %v682, %v874
          %v907 = vmul.f32 %v683, %v875
          %v908 = vmul.f32 %v684, %v876
          %v909 = vmul.f32 %v685, %v877
          %v910 = vmul.f32 %v686, %v878
          %v911 = vmul.f32 %v687, %v879
          %v912 = vmul.f32 %v688, %v880
          %v913 = vmul.f32 %v689, %v881
          %v914 = vmul.f32 %v690, %v882
          %v915 = vmul.f32 %v691, %v883
          %v917 = vlaneseq
          %v918 = vshrl.u32 %v917, 7
          %v919 = vsub.s32 0, %v918
          %v920 = vrot.slane %v561, %v919
          %v922 = vmul.f32 %v884, %v920
          %v923 = vmul.f32 %v885, %v920
          %v924 = vmul.f32 %v886, %v920
          %v925 = vmul.f32 %v887, %v920
          %v926 = vmul.f32 %v888, %v920
          %v927 = vmul.f32 %v889, %v920
          %v928 = vmul.f32 %v890, %v920
          %v929 = vmul.f32 %v891, %v920
          %v930 = vmul.f32 %v892, %v920
          %v931 = vmul.f32 %v893, %v920
          %v932 = vmul.f32 %v894, %v920
          %v933 = vmul.f32 %v895, %v920
          %v934 = vmul.f32 %v896, %v920
          %v935 = vmul.f32 %v897, %v920
          %v936 = vmul.f32 %v898, %v920
          %v937 = vmul.f32 %v899, %v920
          %v938 = vmul.f32 %v900, %v920
          %v939 = vmul.f32 %v901, %v920
          %v940 = vmul.f32 %v902, %v920
          %v941 = vmul.f32 %v903, %v920
          %v942 = vmul.f32 %v904, %v920
          %v943 = vmul.f32 %v905, %v920
          %v944 = vmul.f32 %v906, %v920
          %v945 = vmul.f32 %v907, %v920
          %v946 = vmul.f32 %v908, %v920
          %v947 = vmul.f32 %v909, %v920
          %v948 = vmul.f32 %v910, %v920
          %v949 = vmul.f32 %v911, %v920
          %v950 = vmul.f32 %v912, %v920
          %v951 = vmul.f32 %v913, %v920
          %v952 = vmul.f32 %v914, %v920
          %v953 = vmul.f32 %v915, %v920
          %v955 = vlaneseq
          %v956 = vshrl.u32 %v955, 7
          %v957 = vsub.s32 0, %v956
          %v958 = vrot.slane %v562, %v957
          %v960 = vadd.f32 %v922, %v958
          %v961 = vadd.f32 %v923, %v958
          %v962 = vadd.f32 %v924, %v958
          %v963 = vadd.f32 %v925, %v958
          %v964 = vadd.f32 %v926, %v958
          %v965 = vadd.f32 %v927, %v958
          %v966 = vadd.f32 %v928, %v958
          %v967 = vadd.f32 %v929, %v958
          %v968 = vadd.f32 %v930, %v958
          %v969 = vadd.f32 %v931, %v958
          %v970 = vadd.f32 %v932, %v958
          %v971 = vadd.f32 %v933, %v958
          %v972 = vadd.f32 %v934, %v958
          %v973 = vadd.f32 %v935, %v958
          %v974 = vadd.f32 %v936, %v958
          %v975 = vadd.f32 %v937, %v958
          %v976 = vadd.f32 %v938, %v958
          %v977 = vadd.f32 %v939, %v958
          %v978 = vadd.f32 %v940, %v958
          %v979 = vadd.f32 %v941, %v958
          %v980 = vadd.f32 %v942, %v958
          %v981 = vadd.f32 %v943, %v958
          %v982 = vadd.f32 %v944, %v958
          %v983 = vadd.f32 %v945, %v958
          %v984 = vadd.f32 %v946, %v958
          %v985 = vadd.f32 %v947, %v958
          %v986 = vadd.f32 %v948, %v958
          %v987 = vadd.f32 %v949, %v958
          %v988 = vadd.f32 %v950, %v958
          %v989 = vadd.f32 %v951, %v958
          %v990 = vadd.f32 %v952, %v958
          %v991 = vadd.f32 %v953, %v958
          %v992 = vld [vmem:[#allocation9] sm:$0xff]
          %v993 = vld [vmem:[#allocation9 + $0x8] sm:$0xff]
          %v994 = vld [vmem:[#allocation9 + $0x10] sm:$0xff]
          %v995 = vld [vmem:[#allocation9 + $0x18] sm:$0xff]
          %v996 = vld [vmem:[#allocation9 + $0x20] sm:$0xff]
          %v997 = vld [vmem:[#allocation9 + $0x28] sm:$0xff]
          %v998 = vld [vmem:[#allocation9 + $0x30] sm:$0xff]
          %v999 = vld [vmem:[#allocation9 + $0x38] sm:$0xff]
          %v1000 = vld [vmem:[#allocation9 + $0x40] sm:$0xff]
          %v1001 = vld [vmem:[#allocation9 + $0x48] sm:$0xff]
          %v1002 = vld [vmem:[#allocation9 + $0x50] sm:$0xff]
          %v1003 = vld [vmem:[#allocation9 + $0x58] sm:$0xff]
          %v1004 = vld [vmem:[#allocation9 + $0x60] sm:$0xff]
          %v1005 = vld [vmem:[#allocation9 + $0x68] sm:$0xff]
          %v1006 = vld [vmem:[#allocation9 + $0x70] sm:$0xff]
          %v1007 = vld [vmem:[#allocation9 + $0x78] sm:$0xff]
          %v1008 = vld [vmem:[#allocation9 + $0x80] sm:$0xff]
          %v1009 = vld [vmem:[#allocation9 + $0x88] sm:$0xff]
          %v1010 = vld [vmem:[#allocation9 + $0x90] sm:$0xff]
          %v1011 = vld [vmem:[#allocation9 + $0x98] sm:$0xff]
          %v1012 = vld [vmem:[#allocation9 + $0xa0] sm:$0xff]
          %v1013 = vld [vmem:[#allocation9 + $0xa8] sm:$0xff]
          %v1014 = vld [vmem:[#allocation9 + $0xb0] sm:$0xff]
          %v1015 = vld [vmem:[#allocation9 + $0xb8] sm:$0xff]
          %v1016 = vld [vmem:[#allocation9 + $0xc0] sm:$0xff]
          %v1017 = vld [vmem:[#allocation9 + $0xc8] sm:$0xff]
          %v1018 = vld [vmem:[#allocation9 + $0xd0] sm:$0xff]
          %v1019 = vld [vmem:[#allocation9 + $0xd8] sm:$0xff]
          %v1020 = vld [vmem:[#allocation9 + $0xe0] sm:$0xff]
          %v1021 = vld [vmem:[#allocation9 + $0xe8] sm:$0xff]
          %v1022 = vld [vmem:[#allocation9 + $0xf0] sm:$0xff]
          %v1023 = vld [vmem:[#allocation9 + $0xf8] sm:$0xff]
          %v1024 = vld [vmem:[%s8] sm:$0x3]
          %v1026 = vlaneseq
          %v1027 = vshrl.u32 %v1026, 7
          %v1028 = vsub.s32 0, %v1027
          %v1029 = vrot.slane %v1024, %v1028
          %v1030 = vlaneseq
          %v1031 = vshrl.u32 %v1030, 7
          %v1032 = vsub.s32 1, %v1031
          %v1033 = vrot.slane %v1024, %v1032
          %1036 = vmatprep.subr.mxu0 %v993
          %1037 = vmatpush1.msra.mxu0 %v992
          %1038 = vmatprep.subr.mxu0 %v995
          %1039 = vmatpush1.msra.mxu0 %v994
          %1040 = vmatprep.subr.mxu0 %v997
          %1041 = vmatpush1.msra.mxu0 %v996
          %1042 = vmatprep.subr.mxu0 %v999
          %1043 = vmatpush1.msra.mxu0 %v998
          %1044 = vmatprep.subr.mxu0 %v1001
          %1045 = vmatpush1.msra.mxu0 %v1000
          %1046 = vmatprep.subr.mxu0 %v1003
          %1047 = vmatpush1.msra.mxu0 %v1002
          %1048 = vmatprep.subr.mxu0 %v1005
          %1049 = vmatpush1.msra.mxu0 %v1004
          %1050 = vmatprep.subr.mxu0 %v1007
          %1051 = vmatpush1.msra.mxu0 %v1006
          %1052 = vmatprep.subr.mxu0 %v1009
          %1053 = vmatpush1.msra.mxu0 %v1008
          %1054 = vmatprep.subr.mxu0 %v1011
          %1055 = vmatpush1.msra.mxu0 %v1010
          %1056 = vmatprep.subr.mxu0 %v1013
          %1057 = vmatpush1.msra.mxu0 %v1012
          %1058 = vmatprep.subr.mxu0 %v1015
          %1059 = vmatpush1.msra.mxu0 %v1014
          %1060 = vmatprep.subr.mxu0 %v1017
          %1061 = vmatpush1.msra.mxu0 %v1016
          %1062 = vmatprep.subr.mxu0 %v1019
          %1063 = vmatpush1.msra.mxu0 %v1018
          %1064 = vmatprep.subr.mxu0 %v1021
          %1065 = vmatpush1.msra.mxu0 %v1020
          %1066 = vmatprep.subr.mxu0 %v1023
          %1067 = vmatpush1.msra.mxu0 %v1022
          %1068 = vmatprep.subr.mxu0 0.0
          %1069 = vmatpush1.msra.mxu0 0.0
          %1070 = vmatprep.subr.mxu0 0.0
          %1071 = vmatpush1.msra.mxu0 0.0
          %1072 = vmatprep.subr.mxu0 0.0
          %1073 = vmatpush1.msra.mxu0 0.0
          %1074 = vmatprep.subr.mxu0 0.0
          %1075 = vmatpush1.msra.mxu0 0.0
          %1076 = vmatprep.subr.mxu0 0.0
          %1077 = vmatpush1.msra.mxu0 0.0
          %1078 = vmatprep.subr.mxu0 0.0
          %1079 = vmatpush1.msra.mxu0 0.0
          %1080 = vmatprep.subr.mxu0 0.0
          %1081 = vmatpush1.msra.mxu0 0.0
          %1082 = vmatprep.subr.mxu0 0.0
          %1083 = vmatpush1.msra.mxu0 0.0
          %1084 = vmatprep.subr.mxu0 0.0
          %1085 = vmatpush1.msra.mxu0 0.0
          %1086 = vmatprep.subr.mxu0 0.0
          %1087 = vmatpush1.msra.mxu0 0.0
          %1088 = vmatprep.subr.mxu0 0.0
          %1089 = vmatpush1.msra.mxu0 0.0
          %1090 = vmatprep.subr.mxu0 0.0
          %1091 = vmatpush1.msra.mxu0 0.0
          %1092 = vmatprep.subr.mxu0 0.0
          %1093 = vmatpush1.msra.mxu0 0.0
          %1094 = vmatprep.subr.mxu0 0.0
          %1095 = vmatpush1.msra.mxu0 0.0
          %1096 = vmatprep.subr.mxu0 0.0
          %1097 = vmatpush1.msra.mxu0 0.0
          %1098 = vmatprep.subr.mxu0 0.0
          %1099 = vmatpush1.msra.mxu0 0.0
          %1100 = vmatprep.mubr.f32.mxu0 0.0
          %1101 = vmatmul.mubr.f32.gmra.mrb[0].mxu0 %v960
          %v1102 = vpop.f32.mrb[0].mxu0
          %v1103 = vadd.f32 %v1029, %v1102
          %v1104 = vpop.f32.mrb[0].mxu0
          %v1105 = vadd.f32 %v1033, %v1104
          %1106 = vmatprep.mubr.f32.mxu0 0.0
          %1107 = vmatmul.mubr.f32.gmra.mrb[0].mxu0 %v961
          %v1108 = vpop.f32.mrb[0].mxu0
          %v1109 = vadd.f32 %v1029, %v1108
          %v1110 = vpop.f32.mrb[0].mxu0
          %v1111 = vadd.f32 %v1033, %v1110
          %1112 = vmatprep.mubr.f32.mxu0 0.0
          %1113 = vmatmul.mubr.f32.gmra.mrb[0].mxu0 %v962
          %v1114 = vpop.f32.mrb[0].mxu0
          %v1115 = vadd.f32 %v1029, %v1114
          %v1116 = vpop.f32.mrb[0].mxu0
          %v1117 = vadd.f32 %v1033, %v1116
          %1118 = vmatprep.mubr.f32.mxu0 0.0
          %1119 = vmatmul.mubr.f32.gmra.mrb[0].mxu0 %v963
          %v1120 = vpop.f32.mrb[0].mxu0
          %v1121 = vadd.f32 %v1029, %v1120
          %v1122 = vpop.f32.mrb[0].mxu0
          %v1123 = vadd.f32 %v1033, %v1122
          %1124 = vmatprep.mubr.f32.mxu0 0.0
          %1125 = vmatmul.mubr.f32.gmra.mrb[0].mxu0 %v964
          %v1126 = vpop.f32.mrb[0].mxu0
          %v1127 = vadd.f32 %v1029, %v1126
          %v1128 = vpop.f32.mrb[0].mxu0
          %v1129 = vadd.f32 %v1033, %v1128
          %1130 = vmatprep.mubr.f32.mxu0 0.0
          %1131 = vmatmul.mubr.f32.gmra.mrb[0].mxu0 %v965
          %v1132 = vpop.f32.mrb[0].mxu0
          %v1133 = vadd.f32 %v1029, %v1132
          %v1134 = vpop.f32.mrb[0].mxu0
          %v1135 = vadd.f32 %v1033, %v1134
          %1136 = vmatprep.mubr.f32.mxu0 0.0
          %1137 = vmatmul.mubr.f32.gmra.mrb[0].mxu0 %v966
          %v1138 = vpop.f32.mrb[0].mxu0
          %v1139 = vadd.f32 %v1029, %v1138
          %v1140 = vpop.f32.mrb[0].mxu0
          %v1141 = vadd.f32 %v1033, %v1140
          %1142 = vmatprep.mubr.f32.mxu0 0.0
          %1143 = vmatmul.mubr.f32.gmra.mrb[0].mxu0 %v967
          %v1144 = vpop.f32.mrb[0].mxu0
          %v1145 = vadd.f32 %v1029, %v1144
          %v1146 = vpop.f32.mrb[0].mxu0
          %v1147 = vadd.f32 %v1033, %v1146
          %1148 = vmatprep.mubr.f32.mxu0 0.0
          %1149 = vmatmul.mubr.f32.gmra.mrb[0].mxu0 %v968
          %v1150 = vpop.f32.mrb[0].mxu0
          %v1151 = vadd.f32 %v1029, %v1150
          %v1152 = vpop.f32.mrb[0].mxu0
          %v1153 = vadd.f32 %v1033, %v1152
          %1154 = vmatprep.mubr.f32.mxu0 0.0
          %1155 = vmatmul.mubr.f32.gmra.mrb[0].mxu0 %v969
          %v1156 = vpop.f32.mrb[0].mxu0
          %v1157 = vadd.f32 %v1029, %v1156
          %v1158 = vpop.f32.mrb[0].mxu0
          %v1159 = vadd.f32 %v1033, %v1158
          %1160 = vmatprep.mubr.f32.mxu0 0.0
          %1161 = vmatmul.mubr.f32.gmra.mrb[0].mxu0 %v970
          %v1162 = vpop.f32.mrb[0].mxu0
          %v1163 = vadd.f32 %v1029, %v1162
          %v1164 = vpop.f32.mrb[0].mxu0
          %v1165 = vadd.f32 %v1033, %v1164
          %1166 = vmatprep.mubr.f32.mxu0 0.0
          %1167 = vmatmul.mubr.f32.gmra.mrb[0].mxu0 %v971
          %v1168 = vpop.f32.mrb[0].mxu0
          %v1169 = vadd.f32 %v1029, %v1168
          %v1170 = vpop.f32.mrb[0].mxu0
          %v1171 = vadd.f32 %v1033, %v1170
          %1172 = vmatprep.mubr.f32.mxu0 0.0
          %1173 = vmatmul.mubr.f32.gmra.mrb[0].mxu0 %v972
          %v1174 = vpop.f32.mrb[0].mxu0
          %v1175 = vadd.f32 %v1029, %v1174
          %v1176 = vpop.f32.mrb[0].mxu0
          %v1177 = vadd.f32 %v1033, %v1176
          %1178 = vmatprep.mubr.f32.mxu0 0.0
          %1179 = vmatmul.mubr.f32.gmra.mrb[0].mxu0 %v973
          %v1180 = vpop.f32.mrb[0].mxu0
          %v1181 = vadd.f32 %v1029, %v1180
          %v1182 = vpop.f32.mrb[0].mxu0
          %v1183 = vadd.f32 %v1033, %v1182
          %1184 = vmatprep.mubr.f32.mxu0 0.0
          %1185 = vmatmul.mubr.f32.gmra.mrb[0].mxu0 %v974
          %v1186 = vpop.f32.mrb[0].mxu0
          %v1187 = vadd.f32 %v1029, %v1186
          %v1188 = vpop.f32.mrb[0].mxu0
          %v1189 = vadd.f32 %v1033, %v1188
          %1190 = vmatprep.mubr.f32.mxu0 0.0
          %1191 = vmatmul.mubr.f32.gmra.mrb[0].mxu0 %v975
          %v1192 = vpop.f32.mrb[0].mxu0
          %v1193 = vadd.f32 %v1029, %v1192
          %v1194 = vpop.f32.mrb[0].mxu0
          %v1195 = vadd.f32 %v1033, %v1194
          %1196 = vmatprep.mubr.f32.mxu0 0.0
          %1197 = vmatmul.mubr.f32.gmra.mrb[0].mxu0 %v976
          %v1198 = vpop.f32.mrb[0].mxu0
          %v1199 = vadd.f32 %v1029, %v1198
          %v1200 = vpop.f32.mrb[0].mxu0
          %v1201 = vadd.f32 %v1033, %v1200
          %1202 = vmatprep.mubr.f32.mxu0 0.0
          %1203 = vmatmul.mubr.f32.gmra.mrb[0].mxu0 %v977
          %v1204 = vpop.f32.mrb[0].mxu0
          %v1205 = vadd.f32 %v1029, %v1204
          %v1206 = vpop.f32.mrb[0].mxu0
          %v1207 = vadd.f32 %v1033, %v1206
          %1208 = vmatprep.mubr.f32.mxu0 0.0
          %1209 = vmatmul.mubr.f32.gmra.mrb[0].mxu0 %v978
          %v1210 = vpop.f32.mrb[0].mxu0
          %v1211 = vadd.f32 %v1029, %v1210
          %v1212 = vpop.f32.mrb[0].mxu0
          %v1213 = vadd.f32 %v1033, %v1212
          %1214 = vmatprep.mubr.f32.mxu0 0.0
          %1215 = vmatmul.mubr.f32.gmra.mrb[0].mxu0 %v979
          %v1216 = vpop.f32.mrb[0].mxu0
          %v1217 = vadd.f32 %v1029, %v1216
          %v1218 = vpop.f32.mrb[0].mxu0
          %v1219 = vadd.f32 %v1033, %v1218
          %1220 = vmatprep.mubr.f32.mxu0 0.0
          %1221 = vmatmul.mubr.f32.gmra.mrb[0].mxu0 %v980
          %v1222 = vpop.f32.mrb[0].mxu0
          %v1223 = vadd.f32 %v1029, %v1222
          %v1224 = vpop.f32.mrb[0].mxu0
          %v1225 = vadd.f32 %v1033, %v1224
          %1226 = vmatprep.mubr.f32.mxu0 0.0
          %1227 = vmatmul.mubr.f32.gmra.mrb[0].mxu0 %v981
          %v1228 = vpop.f32.mrb[0].mxu0
          %v1229 = vadd.f32 %v1029, %v1228
          %v1230 = vpop.f32.mrb[0].mxu0
          %v1231 = vadd.f32 %v1033, %v1230
          %1232 = vmatprep.mubr.f32.mxu0 0.0
          %1233 = vmatmul.mubr.f32.gmra.mrb[0].mxu0 %v982
          %v1234 = vpop.f32.mrb[0].mxu0
          %v1235 = vadd.f32 %v1029, %v1234
          %v1236 = vpop.f32.mrb[0].mxu0
          %v1237 = vadd.f32 %v1033, %v1236
          %1238 = vmatprep.mubr.f32.mxu0 0.0
          %1239 = vmatmul.mubr.f32.gmra.mrb[0].mxu0 %v983
          %v1240 = vpop.f32.mrb[0].mxu0
          %v1241 = vadd.f32 %v1029, %v1240
          %v1242 = vpop.f32.mrb[0].mxu0
          %v1243 = vadd.f32 %v1033, %v1242
          %1244 = vmatprep.mubr.f32.mxu0 0.0
          %1245 = vmatmul.mubr.f32.gmra.mrb[0].mxu0 %v984
          %v1246 = vpop.f32.mrb[0].mxu0
          %v1247 = vadd.f32 %v1029, %v1246
          %v1248 = vpop.f32.mrb[0].mxu0
          %v1249 = vadd.f32 %v1033, %v1248
          %1250 = vmatprep.mubr.f32.mxu0 0.0
          %1251 = vmatmul.mubr.f32.gmra.mrb[0].mxu0 %v985
          %v1252 = vpop.f32.mrb[0].mxu0
          %v1253 = vadd.f32 %v1029, %v1252
          %v1254 = vpop.f32.mrb[0].mxu0
          %v1255 = vadd.f32 %v1033, %v1254
          %1256 = vmatprep.mubr.f32.mxu0 0.0
          %1257 = vmatmul.mubr.f32.gmra.mrb[0].mxu0 %v986
          %v1258 = vpop.f32.mrb[0].mxu0
          %v1259 = vadd.f32 %v1029, %v1258
          %v1260 = vpop.f32.mrb[0].mxu0
          %v1261 = vadd.f32 %v1033, %v1260
          %1262 = vmatprep.mubr.f32.mxu0 0.0
          %1263 = vmatmul.mubr.f32.gmra.mrb[0].mxu0 %v987
          %v1264 = vpop.f32.mrb[0].mxu0
          %v1265 = vadd.f32 %v1029, %v1264
          %v1266 = vpop.f32.mrb[0].mxu0
          %v1267 = vadd.f32 %v1033, %v1266
          %1268 = vmatprep.mubr.f32.mxu0 0.0
          %1269 = vmatmul.mubr.f32.gmra.mrb[0].mxu0 %v988
          %v1270 = vpop.f32.mrb[0].mxu0
          %v1271 = vadd.f32 %v1029, %v1270
          %v1272 = vpop.f32.mrb[0].mxu0
          %v1273 = vadd.f32 %v1033, %v1272
          %1274 = vmatprep.mubr.f32.mxu0 0.0
          %1275 = vmatmul.mubr.f32.gmra.mrb[0].mxu0 %v989
          %v1276 = vpop.f32.mrb[0].mxu0
          %v1277 = vadd.f32 %v1029, %v1276
          %v1278 = vpop.f32.mrb[0].mxu0
          %v1279 = vadd.f32 %v1033, %v1278
          %1280 = vmatprep.mubr.f32.mxu0 0.0
          %1281 = vmatmul.mubr.f32.gmra.mrb[0].mxu0 %v990
          %v1282 = vpop.f32.mrb[0].mxu0
          %v1283 = vadd.f32 %v1029, %v1282
          %v1284 = vpop.f32.mrb[0].mxu0
          %v1285 = vadd.f32 %v1033, %v1284
          %1286 = vmatprep.mubr.f32.mxu0 0.0
          %1287 = vmatmul.mubr.f32.gmra.mrb[0].mxu0 %v991
          %v1288 = vpop.f32.mrb[0].mxu0
          %v1289 = vadd.f32 %v1029, %v1288
          %v1290 = vpop.f32.mrb[0].mxu0
          %v1291 = vadd.f32 %v1033, %v1290
          %1292 = vdwg.mxu0
          %1293 = vst [vmem:[#allocation2] sm:$0xff] %v1103
          %1294 = vst [vmem:[#allocation2 + $0x8] sm:$0xff] %v1105
          %1295 = vst [vmem:[#allocation2 + $0x10] sm:$0xff] %v1109
          %1296 = vst [vmem:[#allocation2 + $0x18] sm:$0xff] %v1111
          %1297 = vst [vmem:[#allocation2 + $0x20] sm:$0xff] %v1115
          %1298 = vst [vmem:[#allocation2 + $0x28] sm:$0xff] %v1117
          %1299 = vst [vmem:[#allocation2 + $0x30] sm:$0xff] %v1121
          %1300 = vst [vmem:[#allocation2 + $0x38] sm:$0xff] %v1123
          %1301 = vst [vmem:[#allocation2 + $0x40] sm:$0xff] %v1127
          %1302 = vst [vmem:[#allocation2 + $0x48] sm:$0xff] %v1129
          %1303 = vst [vmem:[#allocation2 + $0x50] sm:$0xff] %v1133
          %1304 = vst [vmem:[#allocation2 + $0x58] sm:$0xff] %v1135
          %1305 = vst [vmem:[#allocation2 + $0x60] sm:$0xff] %v1139
          %1306 = vst [vmem:[#allocation2 + $0x68] sm:$0xff] %v1141
          %1307 = vst [vmem:[#allocation2 + $0x70] sm:$0xff] %v1145
          %1308 = vst [vmem:[#allocation2 + $0x78] sm:$0xff] %v1147
          %1309 = vst [vmem:[#allocation2 + $0x80] sm:$0xff] %v1151
          %1310 = vst [vmem:[#allocation2 + $0x88] sm:$0xff] %v1153
          %1311 = vst [vmem:[#allocation2 + $0x90] sm:$0xff] %v1157
          %1312 = vst [vmem:[#allocation2 + $0x98] sm:$0xff] %v1159
          %1313 = vst [vmem:[#allocation2 + $0xa0] sm:$0xff] %v1163
          %1314 = vst [vmem:[#allocation2 + $0xa8] sm:$0xff] %v1165
          %1315 = vst [vmem:[#allocation2 + $0xb0] sm:$0xff] %v1169
          %1316 = vst [vmem:[#allocation2 + $0xb8] sm:$0xff] %v1171
          %1317 = vst [vmem:[#allocation2 + $0xc0] sm:$0xff] %v1175
          %1318 = vst [vmem:[#allocation2 + $0xc8] sm:$0xff] %v1177
          %1319 = vst [vmem:[#allocation2 + $0xd0] sm:$0xff] %v1181
          %1320 = vst [vmem:[#allocation2 + $0xd8] sm:$0xff] %v1183
          %1321 = vst [vmem:[#allocation2 + $0xe0] sm:$0xff] %v1187
          %1322 = vst [vmem:[#allocation2 + $0xe8] sm:$0xff] %v1189
          %1323 = vst [vmem:[#allocation2 + $0xf0] sm:$0xff] %v1193
          %1324 = vst [vmem:[#allocation2 + $0xf8] sm:$0xff] %v1195
          %1325 = vst [vmem:[#allocation2 + $0x100] sm:$0xff] %v1199
          %1326 = vst [vmem:[#allocation2 + $0x108] sm:$0xff] %v1201
          %1327 = vst [vmem:[#allocation2 + $0x110] sm:$0xff] %v1205
          %1328 = vst [vmem:[#allocation2 + $0x118] sm:$0xff] %v1207
          %1329 = vst [vmem:[#allocation2 + $0x120] sm:$0xff] %v1211
          %1330 = vst [vmem:[#allocation2 + $0x128] sm:$0xff] %v1213
          %1331 = vst [vmem:[#allocation2 + $0x130] sm:$0xff] %v1217
          %1332 = vst [vmem:[#allocation2 + $0x138] sm:$0xff] %v1219
          %1333 = vst [vmem:[#allocation2 + $0x140] sm:$0xff] %v1223
          %1334 = vst [vmem:[#allocation2 + $0x148] sm:$0xff] %v1225
          %1335 = vst [vmem:[#allocation2 + $0x150] sm:$0xff] %v1229
          %1336 = vst [vmem:[#allocation2 + $0x158] sm:$0xff] %v1231
          %1337 = vst [vmem:[#allocation2 + $0x160] sm:$0xff] %v1235
          %1338 = vst [vmem:[#allocation2 + $0x168] sm:$0xff] %v1237
          %1339 = vst [vmem:[#allocation2 + $0x170] sm:$0xff] %v1241
          %1340 = vst [vmem:[#allocation2 + $0x178] sm:$0xff] %v1243
          %1341 = vst [vmem:[#allocation2 + $0x180] sm:$0xff] %v1247
          %1342 = vst [vmem:[#allocation2 + $0x188] sm:$0xff] %v1249
          %1343 = vst [vmem:[#allocation2 + $0x190] sm:$0xff] %v1253
          %1344 = vst [vmem:[#allocation2 + $0x198] sm:$0xff] %v1255
          %1345 = vst [vmem:[#allocation2 + $0x1a0] sm:$0xff] %v1259
          %1346 = vst [vmem:[#allocation2 + $0x1a8] sm:$0xff] %v1261
          %1347 = vst [vmem:[#allocation2 + $0x1b0] sm:$0xff] %v1265
          %1348 = vst [vmem:[#allocation2 + $0x1b8] sm:$0xff] %v1267
          %1349 = vst [vmem:[#allocation2 + $0x1c0] sm:$0xff] %v1271
          %1350 = vst [vmem:[#allocation2 + $0x1c8] sm:$0xff] %v1273
          %1351 = vst [vmem:[#allocation2 + $0x1d0] sm:$0xff] %v1277
          %1352 = vst [vmem:[#allocation2 + $0x1d8] sm:$0xff] %v1279
          %1353 = vst [vmem:[#allocation2 + $0x1e0] sm:$0xff] %v1283
          %1354 = vst [vmem:[#allocation2 + $0x1e8] sm:$0xff] %v1285
          %1355 = vst [vmem:[#allocation2 + $0x1f0] sm:$0xff] %v1289
          %1356 = vst [vmem:[#allocation2 + $0x1f8] sm:$0xff] %v1291
        $region88: #{tpu_custom_call.1} parent=63 // pred_fallthru
          _
        %v1357 = vld [vmem:[%s450] sm:$0xff]
        %v1358 = vld [vmem:[%s450 + $0x8] sm:$0xff]
        %v1359 = vld [vmem:[%s450 + $0x10] sm:$0xff]
        %v1360 = vld [vmem:[%s450 + $0x18] sm:$0xff]
        %v1361 = vld [vmem:[%s450 + $0x20] sm:$0xff]
        %v1362 = vld [vmem:[%s450 + $0x28] sm:$0xff]
        %v1363 = vld [vmem:[%s450 + $0x30] sm:$0xff]
        %v1364 = vld [vmem:[%s450 + $0x38] sm:$0xff]
        %v1365 = vld [vmem:[%s450 + $0x40] sm:$0xff]
        %v1366 = vld [vmem:[%s450 + $0x48] sm:$0xff]
        %v1367 = vld [vmem:[%s450 + $0x50] sm:$0xff]
        %v1368 = vld [vmem:[%s450 + $0x58] sm:$0xff]
        %v1369 = vld [vmem:[%s450 + $0x60] sm:$0xff]
        %v1370 = vld [vmem:[%s450 + $0x68] sm:$0xff]
        %v1371 = vld [vmem:[%s450 + $0x70] sm:$0xff]
        %v1372 = vld [vmem:[%s450 + $0x78] sm:$0xff]
        %v1373 = vld [vmem:[%s3] sm:$0x1]
        %v1374 = vld [vmem:[%s4] sm:$0x1]
        %1375 = vadd.xlane.f32.xlu0 %v1357
        %v1376 = vpop.xlane.xlu0 %1375
        %1377 = vadd.xlane.f32.xlu0 %v1358
        %v1378 = vpop.xlane.xlu0 %1377
        %1379 = vadd.xlane.f32.xlu0 %v1359
        %v1380 = vpop.xlane.xlu0 %1379
        %1381 = vadd.xlane.f32.xlu0 %v1360
        %v1382 = vpop.xlane.xlu0 %1381
        %1383 = vadd.xlane.f32.xlu0 %v1361
        %v1384 = vpop.xlane.xlu0 %1383
        %1385 = vadd.xlane.f32.xlu0 %v1362
        %v1386 = vpop.xlane.xlu0 %1385
        %1387 = vadd.xlane.f32.xlu0 %v1363
        %v1388 = vpop.xlane.xlu0 %1387
        %1389 = vadd.xlane.f32.xlu0 %v1364
        %v1390 = vpop.xlane.xlu0 %1389
        %1391 = vadd.xlane.f32.xlu0 %v1365
        %v1392 = vpop.xlane.xlu0 %1391
        %1393 = vadd.xlane.f32.xlu0 %v1366
        %v1394 = vpop.xlane.xlu0 %1393
        %1395 = vadd.xlane.f32.xlu0 %v1367
        %v1396 = vpop.xlane.xlu0 %1395
        %1397 = vadd.xlane.f32.xlu0 %v1368
        %v1398 = vpop.xlane.xlu0 %1397
        %1399 = vadd.xlane.f32.xlu0 %v1369
        %v1400 = vpop.xlane.xlu0 %1399
        %1401 = vadd.xlane.f32.xlu0 %v1370
        %v1402 = vpop.xlane.xlu0 %1401
        %1403 = vadd.xlane.f32.xlu0 %v1371
        %v1404 = vpop.xlane.xlu0 %1403
        %1405 = vadd.xlane.f32.xlu0 %v1372
        %v1406 = vpop.xlane.xlu0 %1405
        %v1407 = vrcp.pop 128.0
        %v1408 = vmul.f32 %v1376, %v1407
        %v1409 = vmul.f32 %v1378, %v1407
        %v1410 = vmul.f32 %v1380, %v1407
        %v1411 = vmul.f32 %v1382, %v1407
        %v1412 = vmul.f32 %v1384, %v1407
        %v1413 = vmul.f32 %v1386, %v1407
        %v1414 = vmul.f32 %v1388, %v1407
        %v1415 = vmul.f32 %v1390, %v1407
        %v1416 = vmul.f32 %v1392, %v1407
        %v1417 = vmul.f32 %v1394, %v1407
        %v1418 = vmul.f32 %v1396, %v1407
        %v1419 = vmul.f32 %v1398, %v1407
        %v1420 = vmul.f32 %v1400, %v1407
        %v1421 = vmul.f32 %v1402, %v1407
        %v1422 = vmul.f32 %v1404, %v1407
        %v1423 = vmul.f32 %v1406, %v1407
        %v1424 = vsub.f32 %v1357, %v1408
        %v1425 = vsub.f32 %v1358, %v1409
        %v1426 = vsub.f32 %v1359, %v1410
        %v1427 = vsub.f32 %v1360, %v1411
        %v1428 = vsub.f32 %v1361, %v1412
        %v1429 = vsub.f32 %v1362, %v1413
        %v1430 = vsub.f32 %v1363, %v1414
        %v1431 = vsub.f32 %v1364, %v1415
        %v1432 = vsub.f32 %v1365, %v1416
        %v1433 = vsub.f32 %v1366, %v1417
        %v1434 = vsub.f32 %v1367, %v1418
        %v1435 = vsub.f32 %v1368, %v1419
        %v1436 = vsub.f32 %v1369, %v1420
        %v1437 = vsub.f32 %v1370, %v1421
        %v1438 = vsub.f32 %v1371, %v1422
        %v1439 = vsub.f32 %v1372, %v1423
        %v1440 = vmul.f32 %v1424, %v1424
        %v1441 = vmul.f32 %v1425, %v1425
        %v1442 = vmul.f32 %v1426, %v1426
        %v1443 = vmul.f32 %v1427, %v1427
        %v1444 = vmul.f32 %v1428, %v1428
        %v1445 = vmul.f32 %v1429, %v1429
        %v1446 = vmul.f32 %v1430, %v1430
        %v1447 = vmul.f32 %v1431, %v1431
        %v1448 = vmul.f32 %v1432, %v1432
        %v1449 = vmul.f32 %v1433, %v1433
        %v1450 = vmul.f32 %v1434, %v1434
        %v1451 = vmul.f32 %v1435, %v1435
        %v1452 = vmul.f32 %v1436, %v1436
        %v1453 = vmul.f32 %v1437, %v1437
        %v1454 = vmul.f32 %v1438, %v1438
        %v1455 = vmul.f32 %v1439, %v1439
        %1456 = vadd.xlane.f32.xlu0 %v1440
        %v1457 = vpop.xlane.xlu0 %1456
        %1458 = vadd.xlane.f32.xlu0 %v1441
        %v1459 = vpop.xlane.xlu0 %1458
        %1460 = vadd.xlane.f32.xlu0 %v1442
        %v1461 = vpop.xlane.xlu0 %1460
        %1462 = vadd.xlane.f32.xlu0 %v1443
        %v1463 = vpop.xlane.xlu0 %1462
        %1464 = vadd.xlane.f32.xlu0 %v1444
        %v1465 = vpop.xlane.xlu0 %1464
        %1466 = vadd.xlane.f32.xlu0 %v1445
        %v1467 = vpop.xlane.xlu0 %1466
        %1468 = vadd.xlane.f32.xlu0 %v1446
        %v1469 = vpop.xlane.xlu0 %1468
        %1470 = vadd.xlane.f32.xlu0 %v1447
        %v1471 = vpop.xlane.xlu0 %1470
        %1472 = vadd.xlane.f32.xlu0 %v1448
        %v1473 = vpop.xlane.xlu0 %1472
        %1474 = vadd.xlane.f32.xlu0 %v1449
        %v1475 = vpop.xlane.xlu0 %1474
        %1476 = vadd.xlane.f32.xlu0 %v1450
        %v1477 = vpop.xlane.xlu0 %1476
        %1478 = vadd.xlane.f32.xlu0 %v1451
        %v1479 = vpop.xlane.xlu0 %1478
        %1480 = vadd.xlane.f32.xlu0 %v1452
        %v1481 = vpop.xlane.xlu0 %1480
        %1482 = vadd.xlane.f32.xlu0 %v1453
        %v1483 = vpop.xlane.xlu0 %1482
        %1484 = vadd.xlane.f32.xlu0 %v1454
        %v1485 = vpop.xlane.xlu0 %1484
        %1486 = vadd.xlane.f32.xlu0 %v1455
        %v1487 = vpop.xlane.xlu0 %1486
        %v1488 = vmul.f32 %v1457, %v1407
        %v1489 = vmul.f32 %v1459, %v1407
        %v1490 = vmul.f32 %v1461, %v1407
        %v1491 = vmul.f32 %v1463, %v1407
        %v1492 = vmul.f32 %v1465, %v1407
        %v1493 = vmul.f32 %v1467, %v1407
        %v1494 = vmul.f32 %v1469, %v1407
        %v1495 = vmul.f32 %v1471, %v1407
        %v1496 = vmul.f32 %v1473, %v1407
        %v1497 = vmul.f32 %v1475, %v1407
        %v1498 = vmul.f32 %v1477, %v1407
        %v1499 = vmul.f32 %v1479, %v1407
        %v1500 = vmul.f32 %v1481, %v1407
        %v1501 = vmul.f32 %v1483, %v1407
        %v1502 = vmul.f32 %v1485, %v1407
        %v1503 = vmul.f32 %v1487, %v1407
        %v1504 = vadd.f32 %v1488, 1e-06
        %v1505 = vadd.f32 %v1489, 1e-06
        %v1506 = vadd.f32 %v1490, 1e-06
        %v1507 = vadd.f32 %v1491, 1e-06
        %v1508 = vadd.f32 %v1492, 1e-06
        %v1509 = vadd.f32 %v1493, 1e-06
        %v1510 = vadd.f32 %v1494, 1e-06
        %v1511 = vadd.f32 %v1495, 1e-06
        %v1512 = vadd.f32 %v1496, 1e-06
        %v1513 = vadd.f32 %v1497, 1e-06
        %v1514 = vadd.f32 %v1498, 1e-06
        %v1515 = vadd.f32 %v1499, 1e-06
        %v1516 = vadd.f32 %v1500, 1e-06
        %v1517 = vadd.f32 %v1501, 1e-06
        %v1518 = vadd.f32 %v1502, 1e-06
        %v1519 = vadd.f32 %v1503, 1e-06
        %v1520 = vrsqrt.pop %v1504
        %v1521 = vrsqrt.pop %v1505
        %v1522 = vrsqrt.pop %v1506
        %v1523 = vrsqrt.pop %v1507
        %v1524 = vrsqrt.pop %v1508
        %v1525 = vrsqrt.pop %v1509
        %v1526 = vrsqrt.pop %v1510
        %v1527 = vrsqrt.pop %v1511
        %v1528 = vrsqrt.pop %v1512
        %v1529 = vrsqrt.pop %v1513
        %v1530 = vrsqrt.pop %v1514
        %v1531 = vrsqrt.pop %v1515
        %v1532 = vrsqrt.pop %v1516
        %v1533 = vrsqrt.pop %v1517
        %v1534 = vrsqrt.pop %v1518
        %v1535 = vrsqrt.pop %v1519
        %v1536 = vmul.f32 %v1424, %v1520
        %v1537 = vmul.f32 %v1425, %v1521
        %v1538 = vmul.f32 %v1426, %v1522
        %v1539 = vmul.f32 %v1427, %v1523
        %v1540 = vmul.f32 %v1428, %v1524
        %v1541 = vmul.f32 %v1429, %v1525
        %v1542 = vmul.f32 %v1430, %v1526
        %v1543 = vmul.f32 %v1431, %v1527
        %v1544 = vmul.f32 %v1432, %v1528
        %v1545 = vmul.f32 %v1433, %v1529
        %v1546 = vmul.f32 %v1434, %v1530
        %v1547 = vmul.f32 %v1435, %v1531
        %v1548 = vmul.f32 %v1436, %v1532
        %v1549 = vmul.f32 %v1437, %v1533
        %v1550 = vmul.f32 %v1438, %v1534
        %v1551 = vmul.f32 %v1439, %v1535
        %v1553 = vlaneseq
        %v1554 = vshrl.u32 %v1553, 7
        %v1555 = vsub.s32 0, %v1554
        %v1556 = vrot.slane %v1373, %v1555
        %v1558 = vmul.f32 %v1536, %v1556
        %v1559 = vmul.f32 %v1537, %v1556
        %v1560 = vmul.f32 %v1538, %v1556
        %v1561 = vmul.f32 %v1539, %v1556
        %v1562 = vmul.f32 %v1540, %v1556
        %v1563 = vmul.f32 %v1541, %v1556
        %v1564 = vmul.f32 %v1542, %v1556
        %v1565 = vmul.f32 %v1543, %v1556
        %v1566 = vmul.f32 %v1544, %v1556
        %v1567 = vmul.f32 %v1545, %v1556
        %v1568 = vmul.f32 %v1546, %v1556
        %v1569 = vmul.f32 %v1547, %v1556
        %v1570 = vmul.f32 %v1548, %v1556
        %v1571 = vmul.f32 %v1549, %v1556
        %v1572 = vmul.f32 %v1550, %v1556
        %v1573 = vmul.f32 %v1551, %v1556
        %v1575 = vlaneseq
        %v1576 = vshrl.u32 %v1575, 7
        %v1577 = vsub.s32 0, %v1576
        %v1578 = vrot.slane %v1374, %v1577
        %v1580 = vadd.f32 %v1558, %v1578
        %v1581 = vadd.f32 %v1559, %v1578
        %v1582 = vadd.f32 %v1560, %v1578
        %v1583 = vadd.f32 %v1561, %v1578
        %v1584 = vadd.f32 %v1562, %v1578
        %v1585 = vadd.f32 %v1563, %v1578
        %v1586 = vadd.f32 %v1564, %v1578
        %v1587 = vadd.f32 %v1565, %v1578
        %v1588 = vadd.f32 %v1566, %v1578
        %v1589 = vadd.f32 %v1567, %v1578
        %v1590 = vadd.f32 %v1568, %v1578
        %v1591 = vadd.f32 %v1569, %v1578
        %v1592 = vadd.f32 %v1570, %v1578
        %v1593 = vadd.f32 %v1571, %v1578
        %v1594 = vadd.f32 %v1572, %v1578
        %v1595 = vadd.f32 %v1573, %v1578
        %v1596 = vld [vmem:[#allocation8] sm:$0xff]
        %v1597 = vld [vmem:[#allocation8 + $0x8] sm:$0xff]
        %v1598 = vld [vmem:[#allocation8 + $0x10] sm:$0xff]
        %v1599 = vld [vmem:[#allocation8 + $0x18] sm:$0xff]
        %v1600 = vld [vmem:[#allocation8 + $0x20] sm:$0xff]
        %v1601 = vld [vmem:[#allocation8 + $0x28] sm:$0xff]
        %v1602 = vld [vmem:[#allocation8 + $0x30] sm:$0xff]
        %v1603 = vld [vmem:[#allocation8 + $0x38] sm:$0xff]
        %v1604 = vld [vmem:[#allocation8 + $0x40] sm:$0xff]
        %v1605 = vld [vmem:[#allocation8 + $0x48] sm:$0xff]
        %v1606 = vld [vmem:[#allocation8 + $0x50] sm:$0xff]
        %v1607 = vld [vmem:[#allocation8 + $0x58] sm:$0xff]
        %v1608 = vld [vmem:[#allocation8 + $0x60] sm:$0xff]
        %v1609 = vld [vmem:[#allocation8 + $0x68] sm:$0xff]
        %v1610 = vld [vmem:[#allocation8 + $0x70] sm:$0xff]
        %v1611 = vld [vmem:[#allocation8 + $0x78] sm:$0xff]
        %v1612 = vld [vmem:[%s6] sm:$0x1]
        %v1614 = vlaneseq
        %v1615 = vshrl.u32 %v1614, 7
        %v1616 = vsub.s32 0, %v1615
        %v1617 = vrot.slane %v1612, %v1616
        %1619 = vmatprep.subr.mxu0 0.0
        %1620 = vmatpush1.msra.mxu0 %v1596
        %1621 = vmatprep.subr.mxu0 0.0
        %1622 = vmatpush1.msra.mxu0 %v1597
        %1623 = vmatprep.subr.mxu0 0.0
        %1624 = vmatpush1.msra.mxu0 %v1598
        %1625 = vmatprep.subr.mxu0 0.0
        %1626 = vmatpush1.msra.mxu0 %v1599
        %1627 = vmatprep.subr.mxu0 0.0
        %1628 = vmatpush1.msra.mxu0 %v1600
        %1629 = vmatprep.subr.mxu0 0.0
        %1630 = vmatpush1.msra.mxu0 %v1601
        %1631 = vmatprep.subr.mxu0 0.0
        %1632 = vmatpush1.msra.mxu0 %v1602
        %1633 = vmatprep.subr.mxu0 0.0
        %1634 = vmatpush1.msra.mxu0 %v1603
        %1635 = vmatprep.subr.mxu0 0.0
        %1636 = vmatpush1.msra.mxu0 %v1604
        %1637 = vmatprep.subr.mxu0 0.0
        %1638 = vmatpush1.msra.mxu0 %v1605
        %1639 = vmatprep.subr.mxu0 0.0
        %1640 = vmatpush1.msra.mxu0 %v1606
        %1641 = vmatprep.subr.mxu0 0.0
        %1642 = vmatpush1.msra.mxu0 %v1607
        %1643 = vmatprep.subr.mxu0 0.0
        %1644 = vmatpush1.msra.mxu0 %v1608
        %1645 = vmatprep.subr.mxu0 0.0
        %1646 = vmatpush1.msra.mxu0 %v1609
        %1647 = vmatprep.subr.mxu0 0.0
        %1648 = vmatpush1.msra.mxu0 %v1610
        %1649 = vmatprep.subr.mxu0 0.0
        %1650 = vmatpush1.msra.mxu0 %v1611
        %1651 = vmatprep.subr.mxu0 0.0
        %1652 = vmatpush1.msra.mxu0 0.0
        %1653 = vmatprep.subr.mxu0 0.0
        %1654 = vmatpush1.msra.mxu0 0.0
        %1655 = vmatprep.subr.mxu0 0.0
        %1656 = vmatpush1.msra.mxu0 0.0
        %1657 = vmatprep.subr.mxu0 0.0
        %1658 = vmatpush1.msra.mxu0 0.0
        %1659 = vmatprep.subr.mxu0 0.0
        %1660 = vmatpush1.msra.mxu0 0.0
        %1661 = vmatprep.subr.mxu0 0.0
        %1662 = vmatpush1.msra.mxu0 0.0
        %1663 = vmatprep.subr.mxu0 0.0
        %1664 = vmatpush1.msra.mxu0 0.0
        %1665 = vmatprep.subr.mxu0 0.0
        %1666 = vmatpush1.msra.mxu0 0.0
        %1667 = vmatprep.subr.mxu0 0.0
        %1668 = vmatpush1.msra.mxu0 0.0
        %1669 = vmatprep.subr.mxu0 0.0
        %1670 = vmatpush1.msra.mxu0 0.0
        %1671 = vmatprep.subr.mxu0 0.0
        %1672 = vmatpush1.msra.mxu0 0.0
        %1673 = vmatprep.subr.mxu0 0.0
        %1674 = vmatpush1.msra.mxu0 0.0
        %1675 = vmatprep.subr.mxu0 0.0
        %1676 = vmatpush1.msra.mxu0 0.0
        %1677 = vmatprep.subr.mxu0 0.0
        %1678 = vmatpush1.msra.mxu0 0.0
        %1679 = vmatprep.subr.mxu0 0.0
        %1680 = vmatpush1.msra.mxu0 0.0
        %1681 = vmatprep.subr.mxu0 0.0
        %1682 = vmatpush1.msra.mxu0 0.0
        %1683 = vmatprep.mubr.f32.mxu0 0.0
        %1684 = vmatmul.mubr.f32.gmra.mrb[0].mxu0 %v1580
        %v1685 = vpop.f32.mrb[0].mxu0
        %v1686 = vadd.f32 %v1617, %v1685
        %v1687 = vpop.f32.mrb[0].mxu0
        %1688 = vmatprep.mubr.f32.mxu0 0.0
        %1689 = vmatmul.mubr.f32.gmra.mrb[0].mxu0 %v1581
        %v1690 = vpop.f32.mrb[0].mxu0
        %v1691 = vadd.f32 %v1617, %v1690
        %v1692 = vpop.f32.mrb[0].mxu0
        %1693 = vmatprep.mubr.f32.mxu0 0.0
        %1694 = vmatmul.mubr.f32.gmra.mrb[0].mxu0 %v1582
        %v1695 = vpop.f32.mrb[0].mxu0
        %v1696 = vadd.f32 %v1617, %v1695
        %v1697 = vpop.f32.mrb[0].mxu0
        %1698 = vmatprep.mubr.f32.mxu0 0.0
        %1699 = vmatmul.mubr.f32.gmra.mrb[0].mxu0 %v1583
        %v1700 = vpop.f32.mrb[0].mxu0
        %v1701 = vadd.f32 %v1617, %v1700
        %v1702 = vpop.f32.mrb[0].mxu0
        %1703 = vmatprep.mubr.f32.mxu0 0.0
        %1704 = vmatmul.mubr.f32.gmra.mrb[0].mxu0 %v1584
        %v1705 = vpop.f32.mrb[0].mxu0
        %v1706 = vadd.f32 %v1617, %v1705
        %v1707 = vpop.f32.mrb[0].mxu0
        %1708 = vmatprep.mubr.f32.mxu0 0.0
        %1709 = vmatmul.mubr.f32.gmra.mrb[0].mxu0 %v1585
        %v1710 = vpop.f32.mrb[0].mxu0
        %v1711 = vadd.f32 %v1617, %v1710
        %v1712 = vpop.f32.mrb[0].mxu0
        %1713 = vmatprep.mubr.f32.mxu0 0.0
        %1714 = vmatmul.mubr.f32.gmra.mrb[0].mxu0 %v1586
        %v1715 = vpop.f32.mrb[0].mxu0
        %v1716 = vadd.f32 %v1617, %v1715
        %v1717 = vpop.f32.mrb[0].mxu0
        %1718 = vmatprep.mubr.f32.mxu0 0.0
        %1719 = vmatmul.mubr.f32.gmra.mrb[0].mxu0 %v1587
        %v1720 = vpop.f32.mrb[0].mxu0
        %v1721 = vadd.f32 %v1617, %v1720
        %v1722 = vpop.f32.mrb[0].mxu0
        %1723 = vmatprep.mubr.f32.mxu0 0.0
        %1724 = vmatmul.mubr.f32.gmra.mrb[0].mxu0 %v1588
        %v1725 = vpop.f32.mrb[0].mxu0
        %v1726 = vadd.f32 %v1617, %v1725
        %v1727 = vpop.f32.mrb[0].mxu0
        %1728 = vmatprep.mubr.f32.mxu0 0.0
        %1729 = vmatmul.mubr.f32.gmra.mrb[0].mxu0 %v1589
        %v1730 = vpop.f32.mrb[0].mxu0
        %v1731 = vadd.f32 %v1617, %v1730
        %v1732 = vpop.f32.mrb[0].mxu0
        %1733 = vmatprep.mubr.f32.mxu0 0.0
        %1734 = vmatmul.mubr.f32.gmra.mrb[0].mxu0 %v1590
        %v1735 = vpop.f32.mrb[0].mxu0
        %v1736 = vadd.f32 %v1617, %v1735
        %v1737 = vpop.f32.mrb[0].mxu0
        %1738 = vmatprep.mubr.f32.mxu0 0.0
        %1739 = vmatmul.mubr.f32.gmra.mrb[0].mxu0 %v1591
        %v1740 = vpop.f32.mrb[0].mxu0
        %v1741 = vadd.f32 %v1617, %v1740
        %v1742 = vpop.f32.mrb[0].mxu0
        %1743 = vmatprep.mubr.f32.mxu0 0.0
        %1744 = vmatmul.mubr.f32.gmra.mrb[0].mxu0 %v1592
        %v1745 = vpop.f32.mrb[0].mxu0
        %v1746 = vadd.f32 %v1617, %v1745
        %v1747 = vpop.f32.mrb[0].mxu0
        %1748 = vmatprep.mubr.f32.mxu0 0.0
        %1749 = vmatmul.mubr.f32.gmra.mrb[0].mxu0 %v1593
        %v1750 = vpop.f32.mrb[0].mxu0
        %v1751 = vadd.f32 %v1617, %v1750
        %v1752 = vpop.f32.mrb[0].mxu0
        %1753 = vmatprep.mubr.f32.mxu0 0.0
        %1754 = vmatmul.mubr.f32.gmra.mrb[0].mxu0 %v1594
        %v1755 = vpop.f32.mrb[0].mxu0
        %v1756 = vadd.f32 %v1617, %v1755
        %v1757 = vpop.f32.mrb[0].mxu0
        %1758 = vmatprep.mubr.f32.mxu0 0.0
        %1759 = vmatmul.mubr.f32.gmra.mrb[0].mxu0 %v1595
        %v1760 = vpop.f32.mrb[0].mxu0
        %v1761 = vadd.f32 %v1617, %v1760
        %v1762 = vpop.f32.mrb[0].mxu0
        %1763 = vdwg.mxu0
        %v1764 = vld [vmem:[%s523] sm:$0x3]
        %v1766 = vlaneseq
        %v1767 = vshrl.u32 %v1766, 7
        %v1768 = vsub.s32 0, %v1767
        %v1769 = vrot.slane %v1764, %v1768
        %v1770 = vlaneseq
        %v1771 = vshrl.u32 %v1770, 7
        %v1772 = vsub.s32 1, %v1771
        %v1773 = vrot.slane %v1764, %v1772
        %v1776 = vld [vmem:[#allocation11] sm:$0xff]
        %v1777 = vld [vmem:[#allocation11 + $0x8] sm:$0xff]
        %v1778 = vld [vmem:[#allocation11 + $0x10] sm:$0xff]
        %v1779 = vld [vmem:[#allocation11 + $0x18] sm:$0xff]
        %v1780 = vld [vmem:[#allocation11 + $0x20] sm:$0xff]
        %v1781 = vld [vmem:[#allocation11 + $0x28] sm:$0xff]
        %v1782 = vld [vmem:[#allocation11 + $0x30] sm:$0xff]
        %v1783 = vld [vmem:[#allocation11 + $0x38] sm:$0xff]
        %v1784 = vld [vmem:[#allocation11 + $0x40] sm:$0xff]
        %v1785 = vld [vmem:[#allocation11 + $0x48] sm:$0xff]
        %v1786 = vld [vmem:[#allocation11 + $0x50] sm:$0xff]
        %v1787 = vld [vmem:[#allocation11 + $0x58] sm:$0xff]
        %v1788 = vld [vmem:[#allocation11 + $0x60] sm:$0xff]
        %v1789 = vld [vmem:[#allocation11 + $0x68] sm:$0xff]
        %v1790 = vld [vmem:[#allocation11 + $0x70] sm:$0xff]
        %v1791 = vld [vmem:[#allocation11 + $0x78] sm:$0xff]
        %v1792 = vld [vmem:[#allocation2] sm:$0xff]
        %v1793 = vld [vmem:[#allocation2 + $0x10] sm:$0xff]
        %v1794 = vld [vmem:[#allocation2 + $0x20] sm:$0xff]
        %v1795 = vld [vmem:[#allocation2 + $0x30] sm:$0xff]
        %v1796 = vld [vmem:[#allocation2 + $0x40] sm:$0xff]
        %v1797 = vld [vmem:[#allocation2 + $0x50] sm:$0xff]
        %v1798 = vld [vmem:[#allocation2 + $0x60] sm:$0xff]
        %v1799 = vld [vmem:[#allocation2 + $0x70] sm:$0xff]
        %v1800 = vld [vmem:[#allocation2 + $0x80] sm:$0xff]
        %v1801 = vld [vmem:[#allocation2 + $0x90] sm:$0xff]
        %v1802 = vld [vmem:[#allocation2 + $0xa0] sm:$0xff]
        %v1803 = vld [vmem:[#allocation2 + $0xb0] sm:$0xff]
        %v1804 = vld [vmem:[#allocation2 + $0xc0] sm:$0xff]
        %v1805 = vld [vmem:[#allocation2 + $0xd0] sm:$0xff]
        %v1806 = vld [vmem:[#allocation2 + $0xe0] sm:$0xff]
        %v1807 = vld [vmem:[#allocation2 + $0xf0] sm:$0xff]
        %v1808 = vld [vmem:[#allocation2 + $0x100] sm:$0xff]
        %v1809 = vld [vmem:[#allocation2 + $0x110] sm:$0xff]
        %v1810 = vld [vmem:[#allocation2 + $0x120] sm:$0xff]
        %v1811 = vld [vmem:[#allocation2 + $0x130] sm:$0xff]
        %v1812 = vld [vmem:[#allocation2 + $0x140] sm:$0xff]
        %v1813 = vld [vmem:[#allocation2 + $0x150] sm:$0xff]
        %v1814 = vld [vmem:[#allocation2 + $0x160] sm:$0xff]
        %v1815 = vld [vmem:[#allocation2 + $0x170] sm:$0xff]
        %v1816 = vld [vmem:[#allocation2 + $0x180] sm:$0xff]
        %v1817 = vld [vmem:[#allocation2 + $0x190] sm:$0xff]
        %v1818 = vld [vmem:[#allocation2 + $0x1a0] sm:$0xff]
        %v1819 = vld [vmem:[#allocation2 + $0x1b0] sm:$0xff]
        %v1820 = vld [vmem:[#allocation2 + $0x1c0] sm:$0xff]
        %v1821 = vld [vmem:[#allocation2 + $0x1d0] sm:$0xff]
        %v1822 = vld [vmem:[#allocation2 + $0x1e0] sm:$0xff]
        %v1823 = vld [vmem:[#allocation2 + $0x1f0] sm:$0xff]
        %v1824 = vld [vmem:[#allocation2 + $0x8] sm:$0xff]
        %v1825 = vld [vmem:[#allocation2 + $0x18] sm:$0xff]
        %v1826 = vld [vmem:[#allocation2 + $0x28] sm:$0xff]
        %v1827 = vld [vmem:[#allocation2 + $0x38] sm:$0xff]
        %v1828 = vld [vmem:[#allocation2 + $0x48] sm:$0xff]
        %v1829 = vld [vmem:[#allocation2 + $0x58] sm:$0xff]
        %v1830 = vld [vmem:[#allocation2 + $0x68] sm:$0xff]
        %v1831 = vld [vmem:[#allocation2 + $0x78] sm:$0xff]
        %v1832 = vld [vmem:[#allocation2 + $0x88] sm:$0xff]
        %v1833 = vld [vmem:[#allocation2 + $0x98] sm:$0xff]
        %v1834 = vld [vmem:[#allocation2 + $0xa8] sm:$0xff]
        %v1835 = vld [vmem:[#allocation2 + $0xb8] sm:$0xff]
        %v1836 = vld [vmem:[#allocation2 + $0xc8] sm:$0xff]
        %v1837 = vld [vmem:[#allocation2 + $0xd8] sm:$0xff]
        %v1838 = vld [vmem:[#allocation2 + $0xe8] sm:$0xff]
        %v1839 = vld [vmem:[#allocation2 + $0xf8] sm:$0xff]
        %v1840 = vld [vmem:[#allocation2 + $0x108] sm:$0xff]
        %v1841 = vld [vmem:[#allocation2 + $0x118] sm:$0xff]
        %v1842 = vld [vmem:[#allocation2 + $0x128] sm:$0xff]
        %v1843 = vld [vmem:[#allocation2 + $0x138] sm:$0xff]
        %v1844 = vld [vmem:[#allocation2 + $0x148] sm:$0xff]
        %v1845 = vld [vmem:[#allocation2 + $0x158] sm:$0xff]
        %v1846 = vld [vmem:[#allocation2 + $0x168] sm:$0xff]
        %v1847 = vld [vmem:[#allocation2 + $0x178] sm:$0xff]
        %v1848 = vld [vmem:[#allocation2 + $0x188] sm:$0xff]
        %v1849 = vld [vmem:[#allocation2 + $0x198] sm:$0xff]
        %v1850 = vld [vmem:[#allocation2 + $0x1a8] sm:$0xff]
        %v1851 = vld [vmem:[#allocation2 + $0x1b8] sm:$0xff]
        %v1852 = vld [vmem:[#allocation2 + $0x1c8] sm:$0xff]
        %v1853 = vld [vmem:[#allocation2 + $0x1d8] sm:$0xff]
        %v1854 = vld [vmem:[#allocation2 + $0x1e8] sm:$0xff]
        %v1855 = vld [vmem:[#allocation2 + $0x1f8] sm:$0xff]
        %vm1856 = vcmask 261120
        %v1858 = vsel %vm1856, %v1686, 0
        %v1861 = vsel %vm1856, %v1691, 0
        %v1864 = vsel %vm1856, %v1696, 0
        %v1867 = vsel %vm1856, %v1701, 0
        %v1870 = vsel %vm1856, %v1706, 0
        %v1873 = vsel %vm1856, %v1711, 0
        %v1876 = vsel %vm1856, %v1716, 0
        %v1879 = vsel %vm1856, %v1721, 0
        %v1882 = vsel %vm1856, %v1726, 0
        %v1885 = vsel %vm1856, %v1731, 0
        %v1888 = vsel %vm1856, %v1736, 0
        %v1891 = vsel %vm1856, %v1741, 0
        %v1894 = vsel %vm1856, %v1746, 0
        %v1897 = vsel %vm1856, %v1751, 0
        %v1900 = vsel %vm1856, %v1756, 0
        %v1903 = vsel %vm1856, %v1761, 0
        %v1906 = vsel %vm1856, %v1792, 0
        %v1909 = vsel %vm1856, %v1793, 0
        %v1912 = vsel %vm1856, %v1794, 0
        %v1915 = vsel %vm1856, %v1795, 0
        %v1918 = vsel %vm1856, %v1796, 0
        %v1921 = vsel %vm1856, %v1797, 0
        %v1924 = vsel %vm1856, %v1798, 0
        %v1927 = vsel %vm1856, %v1799, 0
        %v1930 = vsel %vm1856, %v1800, 0
        %v1933 = vsel %vm1856, %v1801, 0
        %v1936 = vsel %vm1856, %v1802, 0
        %v1939 = vsel %vm1856, %v1803, 0
        %v1942 = vsel %vm1856, %v1804, 0
        %v1945 = vsel %vm1856, %v1805, 0
        %v1948 = vsel %vm1856, %v1806, 0
        %v1951 = vsel %vm1856, %v1807, 0
        %v1954 = vsel %vm1856, %v1808, 0
        %v1957 = vsel %vm1856, %v1809, 0
        %v1960 = vsel %vm1856, %v1810, 0
        %v1963 = vsel %vm1856, %v1811, 0
        %v1966 = vsel %vm1856, %v1812, 0
        %v1969 = vsel %vm1856, %v1813, 0
        %v1972 = vsel %vm1856, %v1814, 0
        %v1975 = vsel %vm1856, %v1815, 0
        %v1978 = vsel %vm1856, %v1816, 0
        %v1981 = vsel %vm1856, %v1817, 0
        %v1984 = vsel %vm1856, %v1818, 0
        %v1987 = vsel %vm1856, %v1819, 0
        %v1990 = vsel %vm1856, %v1820, 0
        %v1993 = vsel %vm1856, %v1821, 0
        %v1996 = vsel %vm1856, %v1822, 0
        %v1999 = vsel %vm1856, %v1823, 0
        %2001 = vmatprep.subr.mxu0 0.0
        %2002 = vmatpush1.xpose.msra.mxu0 %v1906
        %2003 = vmatprep.subr.mxu0 0.0
        %2004 = vmatpush1.xpose.msra.mxu0 %v1909
        %2005 = vmatprep.subr.mxu0 0.0
        %2006 = vmatpush1.xpose.msra.mxu0 %v1912
        %2007 = vmatprep.subr.mxu0 0.0
        %2008 = vmatpush1.xpose.msra.mxu0 %v1915
        %2009 = vmatprep.subr.mxu0 0.0
        %2010 = vmatpush1.xpose.msra.mxu0 %v1918
        %2011 = vmatprep.subr.mxu0 0.0
        %2012 = vmatpush1.xpose.msra.mxu0 %v1921
        %2013 = vmatprep.subr.mxu0 0.0
        %2014 = vmatpush1.xpose.msra.mxu0 %v1924
        %2015 = vmatprep.subr.mxu0 0.0
        %2016 = vmatpush1.xpose.msra.mxu0 %v1927
        %2017 = vmatprep.subr.mxu0 0.0
        %2018 = vmatpush1.xpose.msra.mxu0 %v1930
        %2019 = vmatprep.subr.mxu0 0.0
        %2020 = vmatpush1.xpose.msra.mxu0 %v1933
        %2021 = vmatprep.subr.mxu0 0.0
        %2022 = vmatpush1.xpose.msra.mxu0 %v1936
        %2023 = vmatprep.subr.mxu0 0.0
        %2024 = vmatpush1.xpose.msra.mxu0 %v1939
        %2025 = vmatprep.subr.mxu0 0.0
        %2026 = vmatpush1.xpose.msra.mxu0 %v1942
        %2027 = vmatprep.subr.mxu0 0.0
        %2028 = vmatpush1.xpose.msra.mxu0 %v1945
        %2029 = vmatprep.subr.mxu0 0.0
        %2030 = vmatpush1.xpose.msra.mxu0 %v1948
        %2031 = vmatprep.subr.mxu0 0.0
        %2032 = vmatpush1.xpose.msra.mxu0 %v1951
        %2033 = vmatprep.subr.mxu0 0.0
        %2034 = vmatpush1.xpose.msra.mxu0 %v1954
        %2035 = vmatprep.subr.mxu0 0.0
        %2036 = vmatpush1.xpose.msra.mxu0 %v1957
        %2037 = vmatprep.subr.mxu0 0.0
        %2038 = vmatpush1.xpose.msra.mxu0 %v1960
        %2039 = vmatprep.subr.mxu0 0.0
        %2040 = vmatpush1.xpose.msra.mxu0 %v1963
        %2041 = vmatprep.subr.mxu0 0.0
        %2042 = vmatpush1.xpose.msra.mxu0 %v1966
        %2043 = vmatprep.subr.mxu0 0.0
        %2044 = vmatpush1.xpose.msra.mxu0 %v1969
        %2045 = vmatprep.subr.mxu0 0.0
        %2046 = vmatpush1.xpose.msra.mxu0 %v1972
        %2047 = vmatprep.subr.mxu0 0.0
        %2048 = vmatpush1.xpose.msra.mxu0 %v1975
        %2049 = vmatprep.subr.mxu0 0.0
        %2050 = vmatpush1.xpose.msra.mxu0 %v1978
        %2051 = vmatprep.subr.mxu0 0.0
        %2052 = vmatpush1.xpose.msra.mxu0 %v1981
        %2053 = vmatprep.subr.mxu0 0.0
        %2054 = vmatpush1.xpose.msra.mxu0 %v1984
        %2055 = vmatprep.subr.mxu0 0.0
        %2056 = vmatpush1.xpose.msra.mxu0 %v1987
        %2057 = vmatprep.subr.mxu0 0.0
        %2058 = vmatpush1.xpose.msra.mxu0 %v1990
        %2059 = vmatprep.subr.mxu0 0.0
        %2060 = vmatpush1.xpose.msra.mxu0 %v1993
        %2061 = vmatprep.subr.mxu0 0.0
        %2062 = vmatpush1.xpose.msra.mxu0 %v1996
        %2063 = vmatprep.subr.mxu0 0.0
        %2064 = vmatpush1.xpose.msra.mxu0 %v1999
        %2065 = vmatprep.mubr.f32.mxu0 0.0
        %2066 = vmatmul.mubr.f32.gmra.mrb[0].mxu0 %v1858
        %v2067 = vpop.f32.mrb[0].mxu0
        %v2068 = vadd.f32 %v1769, %v2067
        %v2069 = vpop.f32.mrb[0].mxu0
        %v2070 = vadd.f32 %v1773, %v2069
        %2071 = vmatprep.mubr.f32.mxu0 0.0
        %2072 = vmatmul.mubr.f32.gmra.mrb[0].mxu0 %v1861
        %v2073 = vpop.f32.mrb[0].mxu0
        %v2074 = vadd.f32 %v1769, %v2073
        %v2075 = vpop.f32.mrb[0].mxu0
        %v2076 = vadd.f32 %v1773, %v2075
        %2077 = vmatprep.mubr.f32.mxu0 0.0
        %2078 = vmatmul.mubr.f32.gmra.mrb[0].mxu0 %v1864
        %v2079 = vpop.f32.mrb[0].mxu0
        %v2080 = vadd.f32 %v1769, %v2079
        %v2081 = vpop.f32.mrb[0].mxu0
        %v2082 = vadd.f32 %v1773, %v2081
        %2083 = vmatprep.mubr.f32.mxu0 0.0
        %2084 = vmatmul.mubr.f32.gmra.mrb[0].mxu0 %v1867
        %v2085 = vpop.f32.mrb[0].mxu0
        %v2086 = vadd.f32 %v1769, %v2085
        %v2087 = vpop.f32.mrb[0].mxu0
        %v2088 = vadd.f32 %v1773, %v2087
        %2089 = vmatprep.mubr.f32.mxu0 0.0
        %2090 = vmatmul.mubr.f32.gmra.mrb[0].mxu0 %v1870
        %v2091 = vpop.f32.mrb[0].mxu0
        %v2092 = vadd.f32 %v1769, %v2091
        %v2093 = vpop.f32.mrb[0].mxu0
        %v2094 = vadd.f32 %v1773, %v2093
        %2095 = vmatprep.mubr.f32.mxu0 0.0
        %2096 = vmatmul.mubr.f32.gmra.mrb[0].mxu0 %v1873
        %v2097 = vpop.f32.mrb[0].mxu0
        %v2098 = vadd.f32 %v1769, %v2097
        %v2099 = vpop.f32.mrb[0].mxu0
        %v2100 = vadd.f32 %v1773, %v2099
        %2101 = vmatprep.mubr.f32.mxu0 0.0
        %2102 = vmatmul.mubr.f32.gmra.mrb[0].mxu0 %v1876
        %v2103 = vpop.f32.mrb[0].mxu0
        %v2104 = vadd.f32 %v1769, %v2103
        %v2105 = vpop.f32.mrb[0].mxu0
        %v2106 = vadd.f32 %v1773, %v2105
        %2107 = vmatprep.mubr.f32.mxu0 0.0
        %2108 = vmatmul.mubr.f32.gmra.mrb[0].mxu0 %v1879
        %v2109 = vpop.f32.mrb[0].mxu0
        %v2110 = vadd.f32 %v1769, %v2109
        %v2111 = vpop.f32.mrb[0].mxu0
        %v2112 = vadd.f32 %v1773, %v2111
        %2113 = vmatprep.mubr.f32.mxu0 0.0
        %2114 = vmatmul.mubr.f32.gmra.mrb[0].mxu0 %v1882
        %v2115 = vpop.f32.mrb[0].mxu0
        %v2116 = vadd.f32 %v1769, %v2115
        %v2117 = vpop.f32.mrb[0].mxu0
        %v2118 = vadd.f32 %v1773, %v2117
        %2119 = vmatprep.mubr.f32.mxu0 0.0
        %2120 = vmatmul.mubr.f32.gmra.mrb[0].mxu0 %v1885
        %v2121 = vpop.f32.mrb[0].mxu0
        %v2122 = vadd.f32 %v1769, %v2121
        %v2123 = vpop.f32.mrb[0].mxu0
        %v2124 = vadd.f32 %v1773, %v2123
        %2125 = vmatprep.mubr.f32.mxu0 0.0
        %2126 = vmatmul.mubr.f32.gmra.mrb[0].mxu0 %v1888
        %v2127 = vpop.f32.mrb[0].mxu0
        %v2128 = vadd.f32 %v1769, %v2127
        %v2129 = vpop.f32.mrb[0].mxu0
        %v2130 = vadd.f32 %v1773, %v2129
        %2131 = vmatprep.mubr.f32.mxu0 0.0
        %2132 = vmatmul.mubr.f32.gmra.mrb[0].mxu0 %v1891
        %v2133 = vpop.f32.mrb[0].mxu0
        %v2134 = vadd.f32 %v1769, %v2133
        %v2135 = vpop.f32.mrb[0].mxu0
        %v2136 = vadd.f32 %v1773, %v2135
        %2137 = vmatprep.mubr.f32.mxu0 0.0
        %2138 = vmatmul.mubr.f32.gmra.mrb[0].mxu0 %v1894
        %v2139 = vpop.f32.mrb[0].mxu0
        %v2140 = vadd.f32 %v1769, %v2139
        %v2141 = vpop.f32.mrb[0].mxu0
        %v2142 = vadd.f32 %v1773, %v2141
        %2143 = vmatprep.mubr.f32.mxu0 0.0
        %2144 = vmatmul.mubr.f32.gmra.mrb[0].mxu0 %v1897
        %v2145 = vpop.f32.mrb[0].mxu0
        %v2146 = vadd.f32 %v1769, %v2145
        %v2147 = vpop.f32.mrb[0].mxu0
        %v2148 = vadd.f32 %v1773, %v2147
        %2149 = vmatprep.mubr.f32.mxu0 0.0
        %2150 = vmatmul.mubr.f32.gmra.mrb[0].mxu0 %v1900
        %v2151 = vpop.f32.mrb[0].mxu0
        %v2152 = vadd.f32 %v1769, %v2151
        %v2153 = vpop.f32.mrb[0].mxu0
        %v2154 = vadd.f32 %v1773, %v2153
        %2155 = vmatprep.mubr.f32.mxu0 0.0
        %2156 = vmatmul.mubr.f32.gmra.mrb[0].mxu0 %v1903
        %v2157 = vpop.f32.mrb[0].mxu0
        %v2158 = vadd.f32 %v1769, %v2157
        %v2159 = vpop.f32.mrb[0].mxu0
        %v2160 = vadd.f32 %v1773, %v2159
        %2161 = vdwg.mxu0
        %v2162 = vmax.f32 %v2068, %v2070
        %2163 = vmax.xlane.f32.xlu0 %v2162
        %v2164 = vpop.xlane.xlu0 %2163
        %v2165 = vmax.f32 %v2074, %v2076
        %2166 = vmax.xlane.f32.xlu0 %v2165
        %v2167 = vpop.xlane.xlu0 %2166
        %v2168 = vmax.f32 %v2080, %v2082
        %2169 = vmax.xlane.f32.xlu0 %v2168
        %v2170 = vpop.xlane.xlu0 %2169
        %v2171 = vmax.f32 %v2086, %v2088
        %2172 = vmax.xlane.f32.xlu0 %v2171
        %v2173 = vpop.xlane.xlu0 %2172
        %v2174 = vmax.f32 %v2092, %v2094
        %2175 = vmax.xlane.f32.xlu0 %v2174
        %v2176 = vpop.xlane.xlu0 %2175
        %v2177 = vmax.f32 %v2098, %v2100
        %2178 = vmax.xlane.f32.xlu0 %v2177
        %v2179 = vpop.xlane.xlu0 %2178
        %v2180 = vmax.f32 %v2104, %v2106
        %2181 = vmax.xlane.f32.xlu0 %v2180
        %v2182 = vpop.xlane.xlu0 %2181
        %v2183 = vmax.f32 %v2110, %v2112
        %2184 = vmax.xlane.f32.xlu0 %v2183
        %v2185 = vpop.xlane.xlu0 %2184
        %v2186 = vmax.f32 %v2116, %v2118
        %2187 = vmax.xlane.f32.xlu0 %v2186
        %v2188 = vpop.xlane.xlu0 %2187
        %v2189 = vmax.f32 %v2122, %v2124
        %2190 = vmax.xlane.f32.xlu0 %v2189
        %v2191 = vpop.xlane.xlu0 %2190
        %v2192 = vmax.f32 %v2128, %v2130
        %2193 = vmax.xlane.f32.xlu0 %v2192
        %v2194 = vpop.xlane.xlu0 %2193
        %v2195 = vmax.f32 %v2134, %v2136
        %2196 = vmax.xlane.f32.xlu0 %v2195
        %v2197 = vpop.xlane.xlu0 %2196
        %v2198 = vmax.f32 %v2140, %v2142
        %2199 = vmax.xlane.f32.xlu0 %v2198
        %v2200 = vpop.xlane.xlu0 %2199
        %v2201 = vmax.f32 %v2146, %v2148
        %2202 = vmax.xlane.f32.xlu0 %v2201
        %v2203 = vpop.xlane.xlu0 %2202
        %v2204 = vmax.f32 %v2152, %v2154
        %2205 = vmax.xlane.f32.xlu0 %v2204
        %v2206 = vpop.xlane.xlu0 %2205
        %v2207 = vmax.f32 %v2158, %v2160
        %2208 = vmax.xlane.f32.xlu0 %v2207
        %v2209 = vpop.xlane.xlu0 %2208
        %v2210 = vsub.f32 %v2068, %v2164
        %v2211 = vsub.f32 %v2070, %v2164
        %v2212 = vsub.f32 %v2074, %v2167
        %v2213 = vsub.f32 %v2076, %v2167
        %v2214 = vsub.f32 %v2080, %v2170
        %v2215 = vsub.f32 %v2082, %v2170
        %v2216 = vsub.f32 %v2086, %v2173
        %v2217 = vsub.f32 %v2088, %v2173
        %v2218 = vsub.f32 %v2092, %v2176
        %v2219 = vsub.f32 %v2094, %v2176
        %v2220 = vsub.f32 %v2098, %v2179
        %v2221 = vsub.f32 %v2100, %v2179
        %v2222 = vsub.f32 %v2104, %v2182
        %v2223 = vsub.f32 %v2106, %v2182
        %v2224 = vsub.f32 %v2110, %v2185
        %v2225 = vsub.f32 %v2112, %v2185
        %v2226 = vsub.f32 %v2116, %v2188
        %v2227 = vsub.f32 %v2118, %v2188
        %v2228 = vsub.f32 %v2122, %v2191
        %v2229 = vsub.f32 %v2124, %v2191
        %v2230 = vsub.f32 %v2128, %v2194
        %v2231 = vsub.f32 %v2130, %v2194
        %v2232 = vsub.f32 %v2134, %v2197
        %v2233 = vsub.f32 %v2136, %v2197
        %v2234 = vsub.f32 %v2140, %v2200
        %v2235 = vsub.f32 %v2142, %v2200
        %v2236 = vsub.f32 %v2146, %v2203
        %v2237 = vsub.f32 %v2148, %v2203
        %v2238 = vsub.f32 %v2152, %v2206
        %v2239 = vsub.f32 %v2154, %v2206
        %v2240 = vsub.f32 %v2158, %v2209
        %v2241 = vsub.f32 %v2160, %v2209
        %v2242 = vmul.f32 %v2210, 1.442695
        %v2243 = vpow.pop %v2242
        %v2244 = vmul.f32 %v2211, 1.442695
        %v2245 = vpow.pop %v2244
        %v2246 = vmul.f32 %v2212, 1.442695
        %v2247 = vpow.pop %v2246
        %v2248 = vmul.f32 %v2213, 1.442695
        %v2249 = vpow.pop %v2248
        %v2250 = vmul.f32 %v2214, 1.442695
        %v2251 = vpow.pop %v2250
        %v2252 = vmul.f32 %v2215, 1.442695
        %v2253 = vpow.pop %v2252
        %v2254 = vmul.f32 %v2216, 1.442695
        %v2255 = vpow.pop %v2254
        %v2256 = vmul.f32 %v2217, 1.442695
        %v2257 = vpow.pop %v2256
        %v2258 = vmul.f32 %v2218, 1.442695
        %v2259 = vpow.pop %v2258
        %v2260 = vmul.f32 %v2219, 1.442695
        %v2261 = vpow.pop %v2260
        %v2262 = vmul.f32 %v2220, 1.442695
        %v2263 = vpow.pop %v2262
        %v2264 = vmul.f32 %v2221, 1.442695
        %v2265 = vpow.pop %v2264
        %v2266 = vmul.f32 %v2222, 1.442695
        %v2267 = vpow.pop %v2266
        %v2268 = vmul.f32 %v2223, 1.442695
        %v2269 = vpow.pop %v2268
        %v2270 = vmul.f32 %v2224, 1.442695
        %v2271 = vpow.pop %v2270
        %v2272 = vmul.f32 %v2225, 1.442695
        %v2273 = vpow.pop %v2272
        %v2274 = vmul.f32 %v2226, 1.442695
        %v2275 = vpow.pop %v2274
        %v2276 = vmul.f32 %v2227, 1.442695
        %v2277 = vpow.pop %v2276
        %v2278 = vmul.f32 %v2228, 1.442695
        %v2279 = vpow.pop %v2278
        %v2280 = vmul.f32 %v2229, 1.442695
        %v2281 = vpow.pop %v2280
        %v2282 = vmul.f32 %v2230, 1.442695
        %v2283 = vpow.pop %v2282
        %v2284 = vmul.f32 %v2231, 1.442695
        %v2285 = vpow.pop %v2284
        %v2286 = vmul.f32 %v2232, 1.442695
        %v2287 = vpow.pop %v2286
        %v2288 = vmul.f32 %v2233, 1.442695
        %v2289 = vpow.pop %v2288
        %v2290 = vmul.f32 %v2234, 1.442695
        %v2291 = vpow.pop %v2290
        %v2292 = vmul.f32 %v2235, 1.442695
        %v2293 = vpow.pop %v2292
        %v2294 = vmul.f32 %v2236, 1.442695
        %v2295 = vpow.pop %v2294
        %v2296 = vmul.f32 %v2237, 1.442695
        %v2297 = vpow.pop %v2296
        %v2298 = vmul.f32 %v2238, 1.442695
        %v2299 = vpow.pop %v2298
        %v2300 = vmul.f32 %v2239, 1.442695
        %v2301 = vpow.pop %v2300
        %v2302 = vmul.f32 %v2240, 1.442695
        %v2303 = vpow.pop %v2302
        %v2304 = vmul.f32 %v2241, 1.442695
        %v2305 = vpow.pop %v2304
        %v2306 = vadd.f32 %v2243, %v2245
        %2307 = vadd.xlane.f32.xlu0 %v2306
        %v2308 = vpop.xlane.xlu0 %2307
        %v2309 = vadd.f32 %v2247, %v2249
        %2310 = vadd.xlane.f32.xlu0 %v2309
        %v2311 = vpop.xlane.xlu0 %2310
        %v2312 = vadd.f32 %v2251, %v2253
        %2313 = vadd.xlane.f32.xlu0 %v2312
        %v2314 = vpop.xlane.xlu0 %2313
        %v2315 = vadd.f32 %v2255, %v2257
        %2316 = vadd.xlane.f32.xlu0 %v2315
        %v2317 = vpop.xlane.xlu0 %2316
        %v2318 = vadd.f32 %v2259, %v2261
        %2319 = vadd.xlane.f32.xlu0 %v2318
        %v2320 = vpop.xlane.xlu0 %2319
        %v2321 = vadd.f32 %v2263, %v2265
        %2322 = vadd.xlane.f32.xlu0 %v2321
        %v2323 = vpop.xlane.xlu0 %2322
        %v2324 = vadd.f32 %v2267, %v2269
        %2325 = vadd.xlane.f32.xlu0 %v2324
        %v2326 = vpop.xlane.xlu0 %2325
        %v2327 = vadd.f32 %v2271, %v2273
        %2328 = vadd.xlane.f32.xlu0 %v2327
        %v2329 = vpop.xlane.xlu0 %2328
        %v2330 = vadd.f32 %v2275, %v2277
        %2331 = vadd.xlane.f32.xlu0 %v2330
        %v2332 = vpop.xlane.xlu0 %2331
        %v2333 = vadd.f32 %v2279, %v2281
        %2334 = vadd.xlane.f32.xlu0 %v2333
        %v2335 = vpop.xlane.xlu0 %2334
        %v2336 = vadd.f32 %v2283, %v2285
        %2337 = vadd.xlane.f32.xlu0 %v2336
        %v2338 = vpop.xlane.xlu0 %2337
        %v2339 = vadd.f32 %v2287, %v2289
        %2340 = vadd.xlane.f32.xlu0 %v2339
        %v2341 = vpop.xlane.xlu0 %2340
        %v2342 = vadd.f32 %v2291, %v2293
        %2343 = vadd.xlane.f32.xlu0 %v2342
        %v2344 = vpop.xlane.xlu0 %2343
        %v2345 = vadd.f32 %v2295, %v2297
        %2346 = vadd.xlane.f32.xlu0 %v2345
        %v2347 = vpop.xlane.xlu0 %2346
        %v2348 = vadd.f32 %v2299, %v2301
        %2349 = vadd.xlane.f32.xlu0 %v2348
        %v2350 = vpop.xlane.xlu0 %2349
        %v2351 = vadd.f32 %v2303, %v2305
        %2352 = vadd.xlane.f32.xlu0 %v2351
        %v2353 = vpop.xlane.xlu0 %2352
        %v2354 = vrcp.pop %v2308
        %v2355 = vrcp.pop %v2311
        %v2356 = vrcp.pop %v2314
        %v2357 = vrcp.pop %v2317
        %v2358 = vrcp.pop %v2320
        %v2359 = vrcp.pop %v2323
        %v2360 = vrcp.pop %v2326
        %v2361 = vrcp.pop %v2329
        %v2362 = vrcp.pop %v2332
        %v2363 = vrcp.pop %v2335
        %v2364 = vrcp.pop %v2338
        %v2365 = vrcp.pop %v2341
        %v2366 = vrcp.pop %v2344
        %v2367 = vrcp.pop %v2347
        %v2368 = vrcp.pop %v2350
        %v2369 = vrcp.pop %v2353
        %2370 = vmatprep.subr.mxu0 0.0
        %2371 = vmatpush1.msra.mxu0 %v1824
        %2372 = vmatprep.subr.mxu0 0.0
        %2373 = vmatpush1.msra.mxu0 %v1825
        %2374 = vmatprep.subr.mxu0 0.0
        %2375 = vmatpush1.msra.mxu0 %v1826
        %2376 = vmatprep.subr.mxu0 0.0
        %2377 = vmatpush1.msra.mxu0 %v1827
        %2378 = vmatprep.subr.mxu0 0.0
        %2379 = vmatpush1.msra.mxu0 %v1828
        %2380 = vmatprep.subr.mxu0 0.0
        %2381 = vmatpush1.msra.mxu0 %v1829
        %2382 = vmatprep.subr.mxu0 0.0
        %2383 = vmatpush1.msra.mxu0 %v1830
        %2384 = vmatprep.subr.mxu0 0.0
        %2385 = vmatpush1.msra.mxu0 %v1831
        %2386 = vmatprep.subr.mxu0 0.0
        %2387 = vmatpush1.msra.mxu0 %v1832
        %2388 = vmatprep.subr.mxu0 0.0
        %2389 = vmatpush1.msra.mxu0 %v1833
        %2390 = vmatprep.subr.mxu0 0.0
        %2391 = vmatpush1.msra.mxu0 %v1834
        %2392 = vmatprep.subr.mxu0 0.0
        %2393 = vmatpush1.msra.mxu0 %v1835
        %2394 = vmatprep.subr.mxu0 0.0
        %2395 = vmatpush1.msra.mxu0 %v1836
        %2396 = vmatprep.subr.mxu0 0.0
        %2397 = vmatpush1.msra.mxu0 %v1837
        %2398 = vmatprep.subr.mxu0 0.0
        %2399 = vmatpush1.msra.mxu0 %v1838
        %2400 = vmatprep.subr.mxu0 0.0
        %2401 = vmatpush1.msra.mxu0 %v1839
        %2402 = vmatprep.subr.mxu0 0.0
        %2403 = vmatpush1.msra.mxu0 %v1840
        %2404 = vmatprep.subr.mxu0 0.0
        %2405 = vmatpush1.msra.mxu0 %v1841
        %2406 = vmatprep.subr.mxu0 0.0
        %2407 = vmatpush1.msra.mxu0 %v1842
        %2408 = vmatprep.subr.mxu0 0.0
        %2409 = vmatpush1.msra.mxu0 %v1843
        %2410 = vmatprep.subr.mxu0 0.0
        %2411 = vmatpush1.msra.mxu0 %v1844
        %2412 = vmatprep.subr.mxu0 0.0
        %2413 = vmatpush1.msra.mxu0 %v1845
        %2414 = vmatprep.subr.mxu0 0.0
        %2415 = vmatpush1.msra.mxu0 %v1846
        %2416 = vmatprep.subr.mxu0 0.0
        %2417 = vmatpush1.msra.mxu0 %v1847
        %2418 = vmatprep.subr.mxu0 0.0
        %2419 = vmatpush1.msra.mxu0 %v1848
        %2420 = vmatprep.subr.mxu0 0.0
        %2421 = vmatpush1.msra.mxu0 %v1849
        %2422 = vmatprep.subr.mxu0 0.0
        %2423 = vmatpush1.msra.mxu0 %v1850
        %2424 = vmatprep.subr.mxu0 0.0
        %2425 = vmatpush1.msra.mxu0 %v1851
        %2426 = vmatprep.subr.mxu0 0.0
        %2427 = vmatpush1.msra.mxu0 %v1852
        %2428 = vmatprep.subr.mxu0 0.0
        %2429 = vmatpush1.msra.mxu0 %v1853
        %2430 = vmatprep.subr.mxu0 0.0
        %2431 = vmatpush1.msra.mxu0 %v1854
        %2432 = vmatprep.subr.mxu0 0.0
        %2433 = vmatpush1.msra.mxu0 %v1855
        %2434 = vmatprep.mubr.f32.mxu0 %v2245
        %2435 = vmatmul.mubr.f32.gmra.mrb[0].mxu0 %v2243
        %v2436 = vpop.f32.mrb[0].mxu0
        %v2437 = vadd.f32 0.0, %v2436
        %v2438 = vpop.f32.mrb[0].mxu0
        %2439 = vmatprep.mubr.f32.mxu0 %v2249
        %2440 = vmatmul.mubr.f32.gmra.mrb[0].mxu0 %v2247
        %v2441 = vpop.f32.mrb[0].mxu0
        %v2442 = vadd.f32 0.0, %v2441
        %v2443 = vpop.f32.mrb[0].mxu0
        %2444 = vmatprep.mubr.f32.mxu0 %v2253
        %2445 = vmatmul.mubr.f32.gmra.mrb[0].mxu0 %v2251
        %v2446 = vpop.f32.mrb[0].mxu0
        %v2447 = vadd.f32 0.0, %v2446
        %v2448 = vpop.f32.mrb[0].mxu0
        %2449 = vmatprep.mubr.f32.mxu0 %v2257
        %2450 = vmatmul.mubr.f32.gmra.mrb[0].mxu0 %v2255
        %v2451 = vpop.f32.mrb[0].mxu0
        %v2452 = vadd.f32 0.0, %v2451
        %v2453 = vpop.f32.mrb[0].mxu0
        %2454 = vmatprep.mubr.f32.mxu0 %v2261
        %2455 = vmatmul.mubr.f32.gmra.mrb[0].mxu0 %v2259
        %v2456 = vpop.f32.mrb[0].mxu0
        %v2457 = vadd.f32 0.0, %v2456
        %v2458 = vpop.f32.mrb[0].mxu0
        %2459 = vmatprep.mubr.f32.mxu0 %v2265
        %2460 = vmatmul.mubr.f32.gmra.mrb[0].mxu0 %v2263
        %v2461 = vpop.f32.mrb[0].mxu0
        %v2462 = vadd.f32 0.0, %v2461
        %v2463 = vpop.f32.mrb[0].mxu0
        %2464 = vmatprep.mubr.f32.mxu0 %v2269
        %2465 = vmatmul.mubr.f32.gmra.mrb[0].mxu0 %v2267
        %v2466 = vpop.f32.mrb[0].mxu0
        %v2467 = vadd.f32 0.0, %v2466
        %v2468 = vpop.f32.mrb[0].mxu0
        %2469 = vmatprep.mubr.f32.mxu0 %v2273
        %2470 = vmatmul.mubr.f32.gmra.mrb[0].mxu0 %v2271
        %v2471 = vpop.f32.mrb[0].mxu0
        %v2472 = vadd.f32 0.0, %v2471
        %v2473 = vpop.f32.mrb[0].mxu0
        %2474 = vmatprep.mubr.f32.mxu0 %v2277
        %2475 = vmatmul.mubr.f32.gmra.mrb[0].mxu0 %v2275
        %v2476 = vpop.f32.mrb[0].mxu0
        %v2477 = vadd.f32 0.0, %v2476
        %v2478 = vpop.f32.mrb[0].mxu0
        %2479 = vmatprep.mubr.f32.mxu0 %v2281
        %2480 = vmatmul.mubr.f32.gmra.mrb[0].mxu0 %v2279
        %v2481 = vpop.f32.mrb[0].mxu0
        %v2482 = vadd.f32 0.0, %v2481
        %v2483 = vpop.f32.mrb[0].mxu0
        %2484 = vmatprep.mubr.f32.mxu0 %v2285
        %2485 = vmatmul.mubr.f32.gmra.mrb[0].mxu0 %v2283
        %v2486 = vpop.f32.mrb[0].mxu0
        %v2487 = vadd.f32 0.0, %v2486
        %v2488 = vpop.f32.mrb[0].mxu0
        %2489 = vmatprep.mubr.f32.mxu0 %v2289
        %2490 = vmatmul.mubr.f32.gmra.mrb[0].mxu0 %v2287
        %v2491 = vpop.f32.mrb[0].mxu0
        %v2492 = vadd.f32 0.0, %v2491
        %v2493 = vpop.f32.mrb[0].mxu0
        %2494 = vmatprep.mubr.f32.mxu0 %v2293
        %2495 = vmatmul.mubr.f32.gmra.mrb[0].mxu0 %v2291
        %v2496 = vpop.f32.mrb[0].mxu0
        %v2497 = vadd.f32 0.0, %v2496
        %v2498 = vpop.f32.mrb[0].mxu0
        %2499 = vmatprep.mubr.f32.mxu0 %v2297
        %2500 = vmatmul.mubr.f32.gmra.mrb[0].mxu0 %v2295
        %v2501 = vpop.f32.mrb[0].mxu0
        %v2502 = vadd.f32 0.0, %v2501
        %v2503 = vpop.f32.mrb[0].mxu0
        %2504 = vmatprep.mubr.f32.mxu0 %v2301
        %2505 = vmatmul.mubr.f32.gmra.mrb[0].mxu0 %v2299
        %v2506 = vpop.f32.mrb[0].mxu0
        %v2507 = vadd.f32 0.0, %v2506
        %v2508 = vpop.f32.mrb[0].mxu0
        %2509 = vmatprep.mubr.f32.mxu0 %v2305
        %2510 = vmatmul.mubr.f32.gmra.mrb[0].mxu0 %v2303
        %v2511 = vpop.f32.mrb[0].mxu0
        %v2512 = vadd.f32 0.0, %v2511
        %v2513 = vpop.f32.mrb[0].mxu0
        %2514 = vdwg.mxu0
        %v2515 = vmul.f32 %v2437, %v2354
        %v2516 = vmul.f32 %v2442, %v2355
        %v2517 = vmul.f32 %v2447, %v2356
        %v2518 = vmul.f32 %v2452, %v2357
        %v2519 = vmul.f32 %v2457, %v2358
        %v2520 = vmul.f32 %v2462, %v2359
        %v2521 = vmul.f32 %v2467, %v2360
        %v2522 = vmul.f32 %v2472, %v2361
        %v2523 = vmul.f32 %v2477, %v2362
        %v2524 = vmul.f32 %v2482, %v2363
        %v2525 = vmul.f32 %v2487, %v2364
        %v2526 = vmul.f32 %v2492, %v2365
        %v2527 = vmul.f32 %v2497, %v2366
        %v2528 = vmul.f32 %v2502, %v2367
        %v2529 = vmul.f32 %v2507, %v2368
        %v2530 = vmul.f32 %v2512, %v2369
        %2531 = vrot.lane.b32.xlu0 %v1686, 96
        %v2532 = vpop.permute.xlu0 %2531
        %2533 = vrot.lane.b32.xlu0 %v1691, 96
        %v2534 = vpop.permute.xlu0 %2533
        %2535 = vrot.lane.b32.xlu0 %v1696, 96
        %v2536 = vpop.permute.xlu0 %2535
        %2537 = vrot.lane.b32.xlu0 %v1701, 96
        %v2538 = vpop.permute.xlu0 %2537
        %2539 = vrot.lane.b32.xlu0 %v1706, 96
        %v2540 = vpop.permute.xlu0 %2539
        %2541 = vrot.lane.b32.xlu0 %v1711, 96
        %v2542 = vpop.permute.xlu0 %2541
        %2543 = vrot.lane.b32.xlu0 %v1716, 96
        %v2544 = vpop.permute.xlu0 %2543
        %2545 = vrot.lane.b32.xlu0 %v1721, 96
        %v2546 = vpop.permute.xlu0 %2545
        %2547 = vrot.lane.b32.xlu0 %v1726, 96
        %v2548 = vpop.permute.xlu0 %2547
        %2549 = vrot.lane.b32.xlu0 %v1731, 96
        %v2550 = vpop.permute.xlu0 %2549
        %2551 = vrot.lane.b32.xlu0 %v1736, 96
        %v2552 = vpop.permute.xlu0 %2551
        %2553 = vrot.lane.b32.xlu0 %v1741, 96
        %v2554 = vpop.permute.xlu0 %2553
        %2555 = vrot.lane.b32.xlu0 %v1746, 96
        %v2556 = vpop.permute.xlu0 %2555
        %2557 = vrot.lane.b32.xlu0 %v1751, 96
        %v2558 = vpop.permute.xlu0 %2557
        %2559 = vrot.lane.b32.xlu0 %v1756, 96
        %v2560 = vpop.permute.xlu0 %2559
        %2561 = vrot.lane.b32.xlu0 %v1761, 96
        %v2562 = vpop.permute.xlu0 %2561
        %2563 = vrot.lane.b32.xlu0 %v1792, 96
        %v2564 = vpop.permute.xlu0 %2563
        %2565 = vrot.lane.b32.xlu0 %v1793, 96
        %v2566 = vpop.permute.xlu0 %2565
        %2567 = vrot.lane.b32.xlu0 %v1794, 96
        %v2568 = vpop.permute.xlu0 %2567
        %2569 = vrot.lane.b32.xlu0 %v1795, 96
        %v2570 = vpop.permute.xlu0 %2569
        %2571 = vrot.lane.b32.xlu0 %v1796, 96
        %v2572 = vpop.permute.xlu0 %2571
        %2573 = vrot.lane.b32.xlu0 %v1797, 96
        %v2574 = vpop.permute.xlu0 %2573
        %2575 = vrot.lane.b32.xlu0 %v1798, 96
        %v2576 = vpop.permute.xlu0 %2575
        %2577 = vrot.lane.b32.xlu0 %v1799, 96
        %v2578 = vpop.permute.xlu0 %2577
        %2579 = vrot.lane.b32.xlu0 %v1800, 96
        %v2580 = vpop.permute.xlu0 %2579
        %2581 = vrot.lane.b32.xlu0 %v1801, 96
        %v2582 = vpop.permute.xlu0 %2581
        %2583 = vrot.lane.b32.xlu0 %v1802, 96
        %v2584 = vpop.permute.xlu0 %2583
        %2585 = vrot.lane.b32.xlu0 %v1803, 96
        %v2586 = vpop.permute.xlu0 %2585
        %2587 = vrot.lane.b32.xlu0 %v1804, 96
        %v2588 = vpop.permute.xlu0 %2587
        %2589 = vrot.lane.b32.xlu0 %v1805, 96
        %v2590 = vpop.permute.xlu0 %2589
        %2591 = vrot.lane.b32.xlu0 %v1806, 96
        %v2592 = vpop.permute.xlu0 %2591
        %2593 = vrot.lane.b32.xlu0 %v1807, 96
        %v2594 = vpop.permute.xlu0 %2593
        %2595 = vrot.lane.b32.xlu0 %v1808, 96
        %v2596 = vpop.permute.xlu0 %2595
        %2597 = vrot.lane.b32.xlu0 %v1809, 96
        %v2598 = vpop.permute.xlu0 %2597
        %2599 = vrot.lane.b32.xlu0 %v1810, 96
        %v2600 = vpop.permute.xlu0 %2599
        %2601 = vrot.lane.b32.xlu0 %v1811, 96
        %v2602 = vpop.permute.xlu0 %2601
        %2603 = vrot.lane.b32.xlu0 %v1812, 96
        %v2604 = vpop.permute.xlu0 %2603
        %2605 = vrot.lane.b32.xlu0 %v1813, 96
        %v2606 = vpop.permute.xlu0 %2605
        %2607 = vrot.lane.b32.xlu0 %v1814, 96
        %v2608 = vpop.permute.xlu0 %2607
        %2609 = vrot.lane.b32.xlu0 %v1815, 96
        %v2610 = vpop.permute.xlu0 %2609
        %2611 = vrot.lane.b32.xlu0 %v1816, 96
        %v2612 = vpop.permute.xlu0 %2611
        %2613 = vrot.lane.b32.xlu0 %v1817, 96
        %v2614 = vpop.permute.xlu0 %2613
        %2615 = vrot.lane.b32.xlu0 %v1818, 96
        %v2616 = vpop.permute.xlu0 %2615
        %2617 = vrot.lane.b32.xlu0 %v1819, 96
        %v2618 = vpop.permute.xlu0 %2617
        %2619 = vrot.lane.b32.xlu0 %v1820, 96
        %v2620 = vpop.permute.xlu0 %2619
        %2621 = vrot.lane.b32.xlu0 %v1821, 96
        %v2622 = vpop.permute.xlu0 %2621
        %2623 = vrot.lane.b32.xlu0 %v1822, 96
        %v2624 = vpop.permute.xlu0 %2623
        %2625 = vrot.lane.b32.xlu0 %v1823, 96
        %v2626 = vpop.permute.xlu0 %2625
        %v2627 = vsel %vm1856, %v2532, 0
        %v2629 = vsel %vm1856, %v2534, 0
        %v2631 = vsel %vm1856, %v2536, 0
        %v2633 = vsel %vm1856, %v2538, 0
        %v2635 = vsel %vm1856, %v2540, 0
        %v2637 = vsel %vm1856, %v2542, 0
        %v2639 = vsel %vm1856, %v2544, 0
        %v2641 = vsel %vm1856, %v2546, 0
        %v2643 = vsel %vm1856, %v2548, 0
        %v2645 = vsel %vm1856, %v2550, 0
        %v2647 = vsel %vm1856, %v2552, 0
        %v2649 = vsel %vm1856, %v2554, 0
        %v2651 = vsel %vm1856, %v2556, 0
        %v2653 = vsel %vm1856, %v2558, 0
        %v2655 = vsel %vm1856, %v2560, 0
        %v2657 = vsel %vm1856, %v2562, 0
        %v2659 = vsel %vm1856, %v2564, 0
        %v2661 = vsel %vm1856, %v2566, 0
        %v2663 = vsel %vm1856, %v2568, 0
        %v2665 = vsel %vm1856, %v2570, 0
        %v2667 = vsel %vm1856, %v2572, 0
        %v2669 = vsel %vm1856, %v2574, 0
        %v2671 = vsel %vm1856, %v2576, 0
        %v2673 = vsel %vm1856, %v2578, 0
        %v2675 = vsel %vm1856, %v2580, 0
        %v2677 = vsel %vm1856, %v2582, 0
        %v2679 = vsel %vm1856, %v2584, 0
        %v2681 = vsel %vm1856, %v2586, 0
        %v2683 = vsel %vm1856, %v2588, 0
        %v2685 = vsel %vm1856, %v2590, 0
        %v2687 = vsel %vm1856, %v2592, 0
        %v2689 = vsel %vm1856, %v2594, 0
        %v2691 = vsel %vm1856, %v2596, 0
        %v2693 = vsel %vm1856, %v2598, 0
        %v2695 = vsel %vm1856, %v2600, 0
        %v2697 = vsel %vm1856, %v2602, 0
        %v2699 = vsel %vm1856, %v2604, 0
        %v2701 = vsel %vm1856, %v2606, 0
        %v2703 = vsel %vm1856, %v2608, 0
        %v2705 = vsel %vm1856, %v2610, 0
        %v2707 = vsel %vm1856, %v2612, 0
        %v2709 = vsel %vm1856, %v2614, 0
        %v2711 = vsel %vm1856, %v2616, 0
        %v2713 = vsel %vm1856, %v2618, 0
        %v2715 = vsel %vm1856, %v2620, 0
        %v2717 = vsel %vm1856, %v2622, 0
        %v2719 = vsel %vm1856, %v2624, 0
        %v2721 = vsel %vm1856, %v2626, 0
        %2723 = vmatprep.subr.mxu0 0.0
        %2724 = vmatpush1.xpose.msra.mxu0 %v2659
        %2725 = vmatprep.subr.mxu0 0.0
        %2726 = vmatpush1.xpose.msra.mxu0 %v2661
        %2727 = vmatprep.subr.mxu0 0.0
        %2728 = vmatpush1.xpose.msra.mxu0 %v2663
        %2729 = vmatprep.subr.mxu0 0.0
        %2730 = vmatpush1.xpose.msra.mxu0 %v2665
        %2731 = vmatprep.subr.mxu0 0.0
        %2732 = vmatpush1.xpose.msra.mxu0 %v2667
        %2733 = vmatprep.subr.mxu0 0.0
        %2734 = vmatpush1.xpose.msra.mxu0 %v2669
        %2735 = vmatprep.subr.mxu0 0.0
        %2736 = vmatpush1.xpose.msra.mxu0 %v2671
        %2737 = vmatprep.subr.mxu0 0.0
        %2738 = vmatpush1.xpose.msra.mxu0 %v2673
        %2739 = vmatprep.subr.mxu0 0.0
        %2740 = vmatpush1.xpose.msra.mxu0 %v2675
        %2741 = vmatprep.subr.mxu0 0.0
        %2742 = vmatpush1.xpose.msra.mxu0 %v2677
        %2743 = vmatprep.subr.mxu0 0.0
        %2744 = vmatpush1.xpose.msra.mxu0 %v2679
        %2745 = vmatprep.subr.mxu0 0.0
        %2746 = vmatpush1.xpose.msra.mxu0 %v2681
        %2747 = vmatprep.subr.mxu0 0.0
        %2748 = vmatpush1.xpose.msra.mxu0 %v2683
        %2749 = vmatprep.subr.mxu0 0.0
        %2750 = vmatpush1.xpose.msra.mxu0 %v2685
        %2751 = vmatprep.subr.mxu0 0.0
        %2752 = vmatpush1.xpose.msra.mxu0 %v2687
        %2753 = vmatprep.subr.mxu0 0.0
        %2754 = vmatpush1.xpose.msra.mxu0 %v2689
        %2755 = vmatprep.subr.mxu0 0.0
        %2756 = vmatpush1.xpose.msra.mxu0 %v2691
        %2757 = vmatprep.subr.mxu0 0.0
        %2758 = vmatpush1.xpose.msra.mxu0 %v2693
        %2759 = vmatprep.subr.mxu0 0.0
        %2760 = vmatpush1.xpose.msra.mxu0 %v2695
        %2761 = vmatprep.subr.mxu0 0.0
        %2762 = vmatpush1.xpose.msra.mxu0 %v2697
        %2763 = vmatprep.subr.mxu0 0.0
        %2764 = vmatpush1.xpose.msra.mxu0 %v2699
        %2765 = vmatprep.subr.mxu0 0.0
        %2766 = vmatpush1.xpose.msra.mxu0 %v2701
        %2767 = vmatprep.subr.mxu0 0.0
        %2768 = vmatpush1.xpose.msra.mxu0 %v2703
        %2769 = vmatprep.subr.mxu0 0.0
        %2770 = vmatpush1.xpose.msra.mxu0 %v2705
        %2771 = vmatprep.subr.mxu0 0.0
        %2772 = vmatpush1.xpose.msra.mxu0 %v2707
        %2773 = vmatprep.subr.mxu0 0.0
        %2774 = vmatpush1.xpose.msra.mxu0 %v2709
        %2775 = vmatprep.subr.mxu0 0.0
        %2776 = vmatpush1.xpose.msra.mxu0 %v2711
        %2777 = vmatprep.subr.mxu0 0.0
        %2778 = vmatpush1.xpose.msra.mxu0 %v2713
        %2779 = vmatprep.subr.mxu0 0.0
        %2780 = vmatpush1.xpose.msra.mxu0 %v2715
        %2781 = vmatprep.subr.mxu0 0.0
        %2782 = vmatpush1.xpose.msra.mxu0 %v2717
        %2783 = vmatprep.subr.mxu0 0.0
        %2784 = vmatpush1.xpose.msra.mxu0 %v2719
        %2785 = vmatprep.subr.mxu0 0.0
        %2786 = vmatpush1.xpose.msra.mxu0 %v2721
        %2787 = vmatprep.mubr.f32.mxu0 0.0
        %2788 = vmatmul.mubr.f32.gmra.mrb[0].mxu0 %v2627
        %v2789 = vpop.f32.mrb[0].mxu0
        %v2790 = vadd.f32 %v1769, %v2789
        %v2791 = vpop.f32.mrb[0].mxu0
        %v2792 = vadd.f32 %v1773, %v2791
        %2793 = vmatprep.mubr.f32.mxu0 0.0
        %2794 = vmatmul.mubr.f32.gmra.mrb[0].mxu0 %v2629
        %v2795 = vpop.f32.mrb[0].mxu0
        %v2796 = vadd.f32 %v1769, %v2795
        %v2797 = vpop.f32.mrb[0].mxu0
        %v2798 = vadd.f32 %v1773, %v2797
        %2799 = vmatprep.mubr.f32.mxu0 0.0
        %2800 = vmatmul.mubr.f32.gmra.mrb[0].mxu0 %v2631
        %v2801 = vpop.f32.mrb[0].mxu0
        %v2802 = vadd.f32 %v1769, %v2801
        %v2803 = vpop.f32.mrb[0].mxu0
        %v2804 = vadd.f32 %v1773, %v2803
        %2805 = vmatprep.mubr.f32.mxu0 0.0
        %2806 = vmatmul.mubr.f32.gmra.mrb[0].mxu0 %v2633
        %v2807 = vpop.f32.mrb[0].mxu0
        %v2808 = vadd.f32 %v1769, %v2807
        %v2809 = vpop.f32.mrb[0].mxu0
        %v2810 = vadd.f32 %v1773, %v2809
        %2811 = vmatprep.mubr.f32.mxu0 0.0
        %2812 = vmatmul.mubr.f32.gmra.mrb[0].mxu0 %v2635
        %v2813 = vpop.f32.mrb[0].mxu0
        %v2814 = vadd.f32 %v1769, %v2813
        %v2815 = vpop.f32.mrb[0].mxu0
        %v2816 = vadd.f32 %v1773, %v2815
        %2817 = vmatprep.mubr.f32.mxu0 0.0
        %2818 = vmatmul.mubr.f32.gmra.mrb[0].mxu0 %v2637
        %v2819 = vpop.f32.mrb[0].mxu0
        %v2820 = vadd.f32 %v1769, %v2819
        %v2821 = vpop.f32.mrb[0].mxu0
        %v2822 = vadd.f32 %v1773, %v2821
        %2823 = vmatprep.mubr.f32.mxu0 0.0
        %2824 = vmatmul.mubr.f32.gmra.mrb[0].mxu0 %v2639
        %v2825 = vpop.f32.mrb[0].mxu0
        %v2826 = vadd.f32 %v1769, %v2825
        %v2827 = vpop.f32.mrb[0].mxu0
        %v2828 = vadd.f32 %v1773, %v2827
        %2829 = vmatprep.mubr.f32.mxu0 0.0
        %2830 = vmatmul.mubr.f32.gmra.mrb[0].mxu0 %v2641
        %v2831 = vpop.f32.mrb[0].mxu0
        %v2832 = vadd.f32 %v1769, %v2831
        %v2833 = vpop.f32.mrb[0].mxu0
        %v2834 = vadd.f32 %v1773, %v2833
        %2835 = vmatprep.mubr.f32.mxu0 0.0
        %2836 = vmatmul.mubr.f32.gmra.mrb[0].mxu0 %v2643
        %v2837 = vpop.f32.mrb[0].mxu0
        %v2838 = vadd.f32 %v1769, %v2837
        %v2839 = vpop.f32.mrb[0].mxu0
        %v2840 = vadd.f32 %v1773, %v2839
        %2841 = vmatprep.mubr.f32.mxu0 0.0
        %2842 = vmatmul.mubr.f32.gmra.mrb[0].mxu0 %v2645
        %v2843 = vpop.f32.mrb[0].mxu0
        %v2844 = vadd.f32 %v1769, %v2843
        %v2845 = vpop.f32.mrb[0].mxu0
        %v2846 = vadd.f32 %v1773, %v2845
        %2847 = vmatprep.mubr.f32.mxu0 0.0
        %2848 = vmatmul.mubr.f32.gmra.mrb[0].mxu0 %v2647
        %v2849 = vpop.f32.mrb[0].mxu0
        %v2850 = vadd.f32 %v1769, %v2849
        %v2851 = vpop.f32.mrb[0].mxu0
        %v2852 = vadd.f32 %v1773, %v2851
        %2853 = vmatprep.mubr.f32.mxu0 0.0
        %2854 = vmatmul.mubr.f32.gmra.mrb[0].mxu0 %v2649
        %v2855 = vpop.f32.mrb[0].mxu0
        %v2856 = vadd.f32 %v1769, %v2855
        %v2857 = vpop.f32.mrb[0].mxu0
        %v2858 = vadd.f32 %v1773, %v2857
        %2859 = vmatprep.mubr.f32.mxu0 0.0
        %2860 = vmatmul.mubr.f32.gmra.mrb[0].mxu0 %v2651
        %v2861 = vpop.f32.mrb[0].mxu0
        %v2862 = vadd.f32 %v1769, %v2861
        %v2863 = vpop.f32.mrb[0].mxu0
        %v2864 = vadd.f32 %v1773, %v2863
        %2865 = vmatprep.mubr.f32.mxu0 0.0
        %2866 = vmatmul.mubr.f32.gmra.mrb[0].mxu0 %v2653
        %v2867 = vpop.f32.mrb[0].mxu0
        %v2868 = vadd.f32 %v1769, %v2867
        %v2869 = vpop.f32.mrb[0].mxu0
        %v2870 = vadd.f32 %v1773, %v2869
        %2871 = vmatprep.mubr.f32.mxu0 0.0
        %2872 = vmatmul.mubr.f32.gmra.mrb[0].mxu0 %v2655
        %v2873 = vpop.f32.mrb[0].mxu0
        %v2874 = vadd.f32 %v1769, %v2873
        %v2875 = vpop.f32.mrb[0].mxu0
        %v2876 = vadd.f32 %v1773, %v2875
        %2877 = vmatprep.mubr.f32.mxu0 0.0
        %2878 = vmatmul.mubr.f32.gmra.mrb[0].mxu0 %v2657
        %v2879 = vpop.f32.mrb[0].mxu0
        %v2880 = vadd.f32 %v1769, %v2879
        %v2881 = vpop.f32.mrb[0].mxu0
        %v2882 = vadd.f32 %v1773, %v2881
        %2883 = vdwg.mxu0
        %v2884 = vmax.f32 %v2790, %v2792
        %2885 = vmax.xlane.f32.xlu0 %v2884
        %v2886 = vpop.xlane.xlu0 %2885
        %v2887 = vmax.f32 %v2796, %v2798
        %2888 = vmax.xlane.f32.xlu0 %v2887
        %v2889 = vpop.xlane.xlu0 %2888
        %v2890 = vmax.f32 %v2802, %v2804
        %2891 = vmax.xlane.f32.xlu0 %v2890
        %v2892 = vpop.xlane.xlu0 %2891
        %v2893 = vmax.f32 %v2808, %v2810
        %2894 = vmax.xlane.f32.xlu0 %v2893
        %v2895 = vpop.xlane.xlu0 %2894
        %v2896 = vmax.f32 %v2814, %v2816
        %2897 = vmax.xlane.f32.xlu0 %v2896
        %v2898 = vpop.xlane.xlu0 %2897
        %v2899 = vmax.f32 %v2820, %v2822
        %2900 = vmax.xlane.f32.xlu0 %v2899
        %v2901 = vpop.xlane.xlu0 %2900
        %v2902 = vmax.f32 %v2826, %v2828
        %2903 = vmax.xlane.f32.xlu0 %v2902
        %v2904 = vpop.xlane.xlu0 %2903
        %v2905 = vmax.f32 %v2832, %v2834
        %2906 = vmax.xlane.f32.xlu0 %v2905
        %v2907 = vpop.xlane.xlu0 %2906
        %v2908 = vmax.f32 %v2838, %v2840
        %2909 = vmax.xlane.f32.xlu0 %v2908
        %v2910 = vpop.xlane.xlu0 %2909
        %v2911 = vmax.f32 %v2844, %v2846
        %2912 = vmax.xlane.f32.xlu0 %v2911
        %v2913 = vpop.xlane.xlu0 %2912
        %v2914 = vmax.f32 %v2850, %v2852
        %2915 = vmax.xlane.f32.xlu0 %v2914
        %v2916 = vpop.xlane.xlu0 %2915
        %v2917 = vmax.f32 %v2856, %v2858
        %2918 = vmax.xlane.f32.xlu0 %v2917
        %v2919 = vpop.xlane.xlu0 %2918
        %v2920 = vmax.f32 %v2862, %v2864
        %2921 = vmax.xlane.f32.xlu0 %v2920
        %v2922 = vpop.xlane.xlu0 %2921
        %v2923 = vmax.f32 %v2868, %v2870
        %2924 = vmax.xlane.f32.xlu0 %v2923
        %v2925 = vpop.xlane.xlu0 %2924
        %v2926 = vmax.f32 %v2874, %v2876
        %2927 = vmax.xlane.f32.xlu0 %v2926
        %v2928 = vpop.xlane.xlu0 %2927
        %v2929 = vmax.f32 %v2880, %v2882
        %2930 = vmax.xlane.f32.xlu0 %v2929
        %v2931 = vpop.xlane.xlu0 %2930
        %v2932 = vsub.f32 %v2790, %v2886
        %v2933 = vsub.f32 %v2792, %v2886
        %v2934 = vsub.f32 %v2796, %v2889
        %v2935 = vsub.f32 %v2798, %v2889
        %v2936 = vsub.f32 %v2802, %v2892
        %v2937 = vsub.f32 %v2804, %v2892
        %v2938 = vsub.f32 %v2808, %v2895
        %v2939 = vsub.f32 %v2810, %v2895
        %v2940 = vsub.f32 %v2814, %v2898
        %v2941 = vsub.f32 %v2816, %v2898
        %v2942 = vsub.f32 %v2820, %v2901
        %v2943 = vsub.f32 %v2822, %v2901
        %v2944 = vsub.f32 %v2826, %v2904
        %v2945 = vsub.f32 %v2828, %v2904
        %v2946 = vsub.f32 %v2832, %v2907
        %v2947 = vsub.f32 %v2834, %v2907
        %v2948 = vsub.f32 %v2838, %v2910
        %v2949 = vsub.f32 %v2840, %v2910
        %v2950 = vsub.f32 %v2844, %v2913
        %v2951 = vsub.f32 %v2846, %v2913
        %v2952 = vsub.f32 %v2850, %v2916
        %v2953 = vsub.f32 %v2852, %v2916
        %v2954 = vsub.f32 %v2856, %v2919
        %v2955 = vsub.f32 %v2858, %v2919
        %v2956 = vsub.f32 %v2862, %v2922
        %v2957 = vsub.f32 %v2864, %v2922
        %v2958 = vsub.f32 %v2868, %v2925
        %v2959 = vsub.f32 %v2870, %v2925
        %v2960 = vsub.f32 %v2874, %v2928
        %v2961 = vsub.f32 %v2876, %v2928
        %v2962 = vsub.f32 %v2880, %v2931
        %v2963 = vsub.f32 %v2882, %v2931
        %v2964 = vmul.f32 %v2932, 1.442695
        %v2965 = vpow.pop %v2964
        %v2966 = vmul.f32 %v2933, 1.442695
        %v2967 = vpow.pop %v2966
        %v2968 = vmul.f32 %v2934, 1.442695
        %v2969 = vpow.pop %v2968
        %v2970 = vmul.f32 %v2935, 1.442695
        %v2971 = vpow.pop %v2970
        %v2972 = vmul.f32 %v2936, 1.442695
        %v2973 = vpow.pop %v2972
        %v2974 = vmul.f32 %v2937, 1.442695
        %v2975 = vpow.pop %v2974
        %v2976 = vmul.f32 %v2938, 1.442695
        %v2977 = vpow.pop %v2976
        %v2978 = vmul.f32 %v2939, 1.442695
        %v2979 = vpow.pop %v2978
        %v2980 = vmul.f32 %v2940, 1.442695
        %v2981 = vpow.pop %v2980
        %v2982 = vmul.f32 %v2941, 1.442695
        %v2983 = vpow.pop %v2982
        %v2984 = vmul.f32 %v2942, 1.442695
        %v2985 = vpow.pop %v2984
        %v2986 = vmul.f32 %v2943, 1.442695
        %v2987 = vpow.pop %v2986
        %v2988 = vmul.f32 %v2944, 1.442695
        %v2989 = vpow.pop %v2988
        %v2990 = vmul.f32 %v2945, 1.442695
        %v2991 = vpow.pop %v2990
        %v2992 = vmul.f32 %v2946, 1.442695
        %v2993 = vpow.pop %v2992
        %v2994 = vmul.f32 %v2947, 1.442695
        %v2995 = vpow.pop %v2994
        %v2996 = vmul.f32 %v2948, 1.442695
        %v2997 = vpow.pop %v2996
        %v2998 = vmul.f32 %v2949, 1.442695
        %v2999 = vpow.pop %v2998
        %v3000 = vmul.f32 %v2950, 1.442695
        %v3001 = vpow.pop %v3000
        %v3002 = vmul.f32 %v2951, 1.442695
        %v3003 = vpow.pop %v3002
        %v3004 = vmul.f32 %v2952, 1.442695
        %v3005 = vpow.pop %v3004
        %v3006 = vmul.f32 %v2953, 1.442695
        %v3007 = vpow.pop %v3006
        %v3008 = vmul.f32 %v2954, 1.442695
        %v3009 = vpow.pop %v3008
        %v3010 = vmul.f32 %v2955, 1.442695
        %v3011 = vpow.pop %v3010
        %v3012 = vmul.f32 %v2956, 1.442695
        %v3013 = vpow.pop %v3012
        %v3014 = vmul.f32 %v2957, 1.442695
        %v3015 = vpow.pop %v3014
        %v3016 = vmul.f32 %v2958, 1.442695
        %v3017 = vpow.pop %v3016
        %v3018 = vmul.f32 %v2959, 1.442695
        %v3019 = vpow.pop %v3018
        %v3020 = vmul.f32 %v2960, 1.442695
        %v3021 = vpow.pop %v3020
        %v3022 = vmul.f32 %v2961, 1.442695
        %v3023 = vpow.pop %v3022
        %v3024 = vmul.f32 %v2962, 1.442695
        %v3025 = vpow.pop %v3024
        %v3026 = vmul.f32 %v2963, 1.442695
        %v3027 = vpow.pop %v3026
        %v3028 = vadd.f32 %v2965, %v2967
        %3029 = vadd.xlane.f32.xlu0 %v3028
        %v3030 = vpop.xlane.xlu0 %3029
        %v3031 = vadd.f32 %v2969, %v2971
        %3032 = vadd.xlane.f32.xlu0 %v3031
        %v3033 = vpop.xlane.xlu0 %3032
        %v3034 = vadd.f32 %v2973, %v2975
        %3035 = vadd.xlane.f32.xlu0 %v3034
        %v3036 = vpop.xlane.xlu0 %3035
        %v3037 = vadd.f32 %v2977, %v2979
        %3038 = vadd.xlane.f32.xlu0 %v3037
        %v3039 = vpop.xlane.xlu0 %3038
        %v3040 = vadd.f32 %v2981, %v2983
        %3041 = vadd.xlane.f32.xlu0 %v3040
        %v3042 = vpop.xlane.xlu0 %3041
        %v3043 = vadd.f32 %v2985, %v2987
        %3044 = vadd.xlane.f32.xlu0 %v3043
        %v3045 = vpop.xlane.xlu0 %3044
        %v3046 = vadd.f32 %v2989, %v2991
        %3047 = vadd.xlane.f32.xlu0 %v3046
        %v3048 = vpop.xlane.xlu0 %3047
        %v3049 = vadd.f32 %v2993, %v2995
        %3050 = vadd.xlane.f32.xlu0 %v3049
        %v3051 = vpop.xlane.xlu0 %3050
        %v3052 = vadd.f32 %v2997, %v2999
        %3053 = vadd.xlane.f32.xlu0 %v3052
        %v3054 = vpop.xlane.xlu0 %3053
        %v3055 = vadd.f32 %v3001, %v3003
        %3056 = vadd.xlane.f32.xlu0 %v3055
        %v3057 = vpop.xlane.xlu0 %3056
        %v3058 = vadd.f32 %v3005, %v3007
        %3059 = vadd.xlane.f32.xlu0 %v3058
        %v3060 = vpop.xlane.xlu0 %3059
        %v3061 = vadd.f32 %v3009, %v3011
        %3062 = vadd.xlane.f32.xlu0 %v3061
        %v3063 = vpop.xlane.xlu0 %3062
        %v3064 = vadd.f32 %v3013, %v3015
        %3065 = vadd.xlane.f32.xlu0 %v3064
        %v3066 = vpop.xlane.xlu0 %3065
        %v3067 = vadd.f32 %v3017, %v3019
        %3068 = vadd.xlane.f32.xlu0 %v3067
        %v3069 = vpop.xlane.xlu0 %3068
        %v3070 = vadd.f32 %v3021, %v3023
        %3071 = vadd.xlane.f32.xlu0 %v3070
        %v3072 = vpop.xlane.xlu0 %3071
        %v3073 = vadd.f32 %v3025, %v3027
        %3074 = vadd.xlane.f32.xlu0 %v3073
        %v3075 = vpop.xlane.xlu0 %3074
        %v3076 = vrcp.pop %v3030
        %v3077 = vrcp.pop %v3033
        %v3078 = vrcp.pop %v3036
        %v3079 = vrcp.pop %v3039
        %v3080 = vrcp.pop %v3042
        %v3081 = vrcp.pop %v3045
        %v3082 = vrcp.pop %v3048
        %v3083 = vrcp.pop %v3051
        %v3084 = vrcp.pop %v3054
        %v3085 = vrcp.pop %v3057
        %v3086 = vrcp.pop %v3060
        %v3087 = vrcp.pop %v3063
        %v3088 = vrcp.pop %v3066
        %v3089 = vrcp.pop %v3069
        %v3090 = vrcp.pop %v3072
        %v3091 = vrcp.pop %v3075
        %3124 = vrot.lane.b32.xlu0 %v1824, 96
        %v3125 = vpop.permute.xlu0 %3124
        %3126 = vrot.lane.b32.xlu0 %v1825, 96
        %v3127 = vpop.permute.xlu0 %3126
        %3128 = vrot.lane.b32.xlu0 %v1826, 96
        %v3129 = vpop.permute.xlu0 %3128
        %3130 = vrot.lane.b32.xlu0 %v1827, 96
        %v3131 = vpop.permute.xlu0 %3130
        %3132 = vrot.lane.b32.xlu0 %v1828, 96
        %v3133 = vpop.permute.xlu0 %3132
        %3134 = vrot.lane.b32.xlu0 %v1829, 96
        %v3135 = vpop.permute.xlu0 %3134
        %3136 = vrot.lane.b32.xlu0 %v1830, 96
        %v3137 = vpop.permute.xlu0 %3136
        %3138 = vrot.lane.b32.xlu0 %v1831, 96
        %v3139 = vpop.permute.xlu0 %3138
        %3140 = vrot.lane.b32.xlu0 %v1832, 96
        %v3141 = vpop.permute.xlu0 %3140
        %3142 = vrot.lane.b32.xlu0 %v1833, 96
        %v3143 = vpop.permute.xlu0 %3142
        %3144 = vrot.lane.b32.xlu0 %v1834, 96
        %v3145 = vpop.permute.xlu0 %3144
        %3146 = vrot.lane.b32.xlu0 %v1835, 96
        %v3147 = vpop.permute.xlu0 %3146
        %3148 = vrot.lane.b32.xlu0 %v1836, 96
        %v3149 = vpop.permute.xlu0 %3148
        %3150 = vrot.lane.b32.xlu0 %v1837, 96
        %v3151 = vpop.permute.xlu0 %3150
        %3152 = vrot.lane.b32.xlu0 %v1838, 96
        %v3153 = vpop.permute.xlu0 %3152
        %3154 = vrot.lane.b32.xlu0 %v1839, 96
        %v3155 = vpop.permute.xlu0 %3154
        %3156 = vrot.lane.b32.xlu0 %v1840, 96
        %v3157 = vpop.permute.xlu0 %3156
        %3158 = vrot.lane.b32.xlu0 %v1841, 96
        %v3159 = vpop.permute.xlu0 %3158
        %3160 = vrot.lane.b32.xlu0 %v1842, 96
        %v3161 = vpop.permute.xlu0 %3160
        %3162 = vrot.lane.b32.xlu0 %v1843, 96
        %v3163 = vpop.permute.xlu0 %3162
        %3164 = vrot.lane.b32.xlu0 %v1844, 96
        %v3165 = vpop.permute.xlu0 %3164
        %3166 = vrot.lane.b32.xlu0 %v1845, 96
        %v3167 = vpop.permute.xlu0 %3166
        %3168 = vrot.lane.b32.xlu0 %v1846, 96
        %v3169 = vpop.permute.xlu0 %3168
        %3170 = vrot.lane.b32.xlu0 %v1847, 96
        %v3171 = vpop.permute.xlu0 %3170
        %3172 = vrot.lane.b32.xlu0 %v1848, 96
        %v3173 = vpop.permute.xlu0 %3172
        %3174 = vrot.lane.b32.xlu0 %v1849, 96
        %v3175 = vpop.permute.xlu0 %3174
        %3176 = vrot.lane.b32.xlu0 %v1850, 96
        %v3177 = vpop.permute.xlu0 %3176
        %3178 = vrot.lane.b32.xlu0 %v1851, 96
        %v3179 = vpop.permute.xlu0 %3178
        %3180 = vrot.lane.b32.xlu0 %v1852, 96
        %v3181 = vpop.permute.xlu0 %3180
        %3182 = vrot.lane.b32.xlu0 %v1853, 96
        %v3183 = vpop.permute.xlu0 %3182
        %3184 = vrot.lane.b32.xlu0 %v1854, 96
        %v3185 = vpop.permute.xlu0 %3184
        %3186 = vrot.lane.b32.xlu0 %v1855, 96
        %v3187 = vpop.permute.xlu0 %3186
        %3220 = vmatprep.subr.mxu0 0.0
        %3221 = vmatpush1.msra.mxu0 %v3125
        %3222 = vmatprep.subr.mxu0 0.0
        %3223 = vmatpush1.msra.mxu0 %v3127
        %3224 = vmatprep.subr.mxu0 0.0
        %3225 = vmatpush1.msra.mxu0 %v3129
        %3226 = vmatprep.subr.mxu0 0.0
        %3227 = vmatpush1.msra.mxu0 %v3131
        %3228 = vmatprep.subr.mxu0 0.0
        %3229 = vmatpush1.msra.mxu0 %v3133
        %3230 = vmatprep.subr.mxu0 0.0
        %3231 = vmatpush1.msra.mxu0 %v3135
        %3232 = vmatprep.subr.mxu0 0.0
        %3233 = vmatpush1.msra.mxu0 %v3137
        %3234 = vmatprep.subr.mxu0 0.0
        %3235 = vmatpush1.msra.mxu0 %v3139
        %3236 = vmatprep.subr.mxu0 0.0
        %3237 = vmatpush1.msra.mxu0 %v3141
        %3238 = vmatprep.subr.mxu0 0.0
        %3239 = vmatpush1.msra.mxu0 %v3143
        %3240 = vmatprep.subr.mxu0 0.0
        %3241 = vmatpush1.msra.mxu0 %v3145
        %3242 = vmatprep.subr.mxu0 0.0
        %3243 = vmatpush1.msra.mxu0 %v3147
        %3244 = vmatprep.subr.mxu0 0.0
        %3245 = vmatpush1.msra.mxu0 %v3149
        %3246 = vmatprep.subr.mxu0 0.0
        %3247 = vmatpush1.msra.mxu0 %v3151
        %3248 = vmatprep.subr.mxu0 0.0
        %3249 = vmatpush1.msra.mxu0 %v3153
        %3250 = vmatprep.subr.mxu0 0.0
        %3251 = vmatpush1.msra.mxu0 %v3155
        %3252 = vmatprep.subr.mxu0 0.0
        %3253 = vmatpush1.msra.mxu0 %v3157
        %3254 = vmatprep.subr.mxu0 0.0
        %3255 = vmatpush1.msra.mxu0 %v3159
        %3256 = vmatprep.subr.mxu0 0.0
        %3257 = vmatpush1.msra.mxu0 %v3161
        %3258 = vmatprep.subr.mxu0 0.0
        %3259 = vmatpush1.msra.mxu0 %v3163
        %3260 = vmatprep.subr.mxu0 0.0
        %3261 = vmatpush1.msra.mxu0 %v3165
        %3262 = vmatprep.subr.mxu0 0.0
        %3263 = vmatpush1.msra.mxu0 %v3167
        %3264 = vmatprep.subr.mxu0 0.0
        %3265 = vmatpush1.msra.mxu0 %v3169
        %3266 = vmatprep.subr.mxu0 0.0
        %3267 = vmatpush1.msra.mxu0 %v3171
        %3268 = vmatprep.subr.mxu0 0.0
        %3269 = vmatpush1.msra.mxu0 %v3173
        %3270 = vmatprep.subr.mxu0 0.0
        %3271 = vmatpush1.msra.mxu0 %v3175
        %3272 = vmatprep.subr.mxu0 0.0
        %3273 = vmatpush1.msra.mxu0 %v3177
        %3274 = vmatprep.subr.mxu0 0.0
        %3275 = vmatpush1.msra.mxu0 %v3179
        %3276 = vmatprep.subr.mxu0 0.0
        %3277 = vmatpush1.msra.mxu0 %v3181
        %3278 = vmatprep.subr.mxu0 0.0
        %3279 = vmatpush1.msra.mxu0 %v3183
        %3280 = vmatprep.subr.mxu0 0.0
        %3281 = vmatpush1.msra.mxu0 %v3185
        %3282 = vmatprep.subr.mxu0 0.0
        %3283 = vmatpush1.msra.mxu0 %v3187
        %3284 = vmatprep.mubr.f32.mxu0 %v2967
        %3285 = vmatmul.mubr.f32.gmra.mrb[0].mxu0 %v2965
        %v3286 = vpop.f32.mrb[0].mxu0
        %v3287 = vadd.f32 0.0, %v3286
        %v3288 = vpop.f32.mrb[0].mxu0
        %3289 = vmatprep.mubr.f32.mxu0 %v2971
        %3290 = vmatmul.mubr.f32.gmra.mrb[0].mxu0 %v2969
        %v3291 = vpop.f32.mrb[0].mxu0
        %v3292 = vadd.f32 0.0, %v3291
        %v3293 = vpop.f32.mrb[0].mxu0
        %3294 = vmatprep.mubr.f32.mxu0 %v2975
        %3295 = vmatmul.mubr.f32.gmra.mrb[0].mxu0 %v2973
        %v3296 = vpop.f32.mrb[0].mxu0
        %v3297 = vadd.f32 0.0, %v3296
        %v3298 = vpop.f32.mrb[0].mxu0
        %3299 = vmatprep.mubr.f32.mxu0 %v2979
        %3300 = vmatmul.mubr.f32.gmra.mrb[0].mxu0 %v2977
        %v3301 = vpop.f32.mrb[0].mxu0
        %v3302 = vadd.f32 0.0, %v3301
        %v3303 = vpop.f32.mrb[0].mxu0
        %3304 = vmatprep.mubr.f32.mxu0 %v2983
        %3305 = vmatmul.mubr.f32.gmra.mrb[0].mxu0 %v2981
        %v3306 = vpop.f32.mrb[0].mxu0
        %v3307 = vadd.f32 0.0, %v3306
        %v3308 = vpop.f32.mrb[0].mxu0
        %3309 = vmatprep.mubr.f32.mxu0 %v2987
        %3310 = vmatmul.mubr.f32.gmra.mrb[0].mxu0 %v2985
        %v3311 = vpop.f32.mrb[0].mxu0
        %v3312 = vadd.f32 0.0, %v3311
        %v3313 = vpop.f32.mrb[0].mxu0
        %3314 = vmatprep.mubr.f32.mxu0 %v2991
        %3315 = vmatmul.mubr.f32.gmra.mrb[0].mxu0 %v2989
        %v3316 = vpop.f32.mrb[0].mxu0
        %v3317 = vadd.f32 0.0, %v3316
        %v3318 = vpop.f32.mrb[0].mxu0
        %3319 = vmatprep.mubr.f32.mxu0 %v2995
        %3320 = vmatmul.mubr.f32.gmra.mrb[0].mxu0 %v2993
        %v3321 = vpop.f32.mrb[0].mxu0
        %v3322 = vadd.f32 0.0, %v3321
        %v3323 = vpop.f32.mrb[0].mxu0
        %3324 = vmatprep.mubr.f32.mxu0 %v2999
        %3325 = vmatmul.mubr.f32.gmra.mrb[0].mxu0 %v2997
        %v3326 = vpop.f32.mrb[0].mxu0
        %v3327 = vadd.f32 0.0, %v3326
        %v3328 = vpop.f32.mrb[0].mxu0
        %3329 = vmatprep.mubr.f32.mxu0 %v3003
        %3330 = vmatmul.mubr.f32.gmra.mrb[0].mxu0 %v3001
        %v3331 = vpop.f32.mrb[0].mxu0
        %v3332 = vadd.f32 0.0, %v3331
        %v3333 = vpop.f32.mrb[0].mxu0
        %3334 = vmatprep.mubr.f32.mxu0 %v3007
        %3335 = vmatmul.mubr.f32.gmra.mrb[0].mxu0 %v3005
        %v3336 = vpop.f32.mrb[0].mxu0
        %v3337 = vadd.f32 0.0, %v3336
        %v3338 = vpop.f32.mrb[0].mxu0
        %3339 = vmatprep.mubr.f32.mxu0 %v3011
        %3340 = vmatmul.mubr.f32.gmra.mrb[0].mxu0 %v3009
        %v3341 = vpop.f32.mrb[0].mxu0
        %v3342 = vadd.f32 0.0, %v3341
        %v3343 = vpop.f32.mrb[0].mxu0
        %3344 = vmatprep.mubr.f32.mxu0 %v3015
        %3345 = vmatmul.mubr.f32.gmra.mrb[0].mxu0 %v3013
        %v3346 = vpop.f32.mrb[0].mxu0
        %v3347 = vadd.f32 0.0, %v3346
        %v3348 = vpop.f32.mrb[0].mxu0
        %3349 = vmatprep.mubr.f32.mxu0 %v3019
        %3350 = vmatmul.mubr.f32.gmra.mrb[0].mxu0 %v3017
        %v3351 = vpop.f32.mrb[0].mxu0
        %v3352 = vadd.f32 0.0, %v3351
        %v3353 = vpop.f32.mrb[0].mxu0
        %3354 = vmatprep.mubr.f32.mxu0 %v3023
        %3355 = vmatmul.mubr.f32.gmra.mrb[0].mxu0 %v3021
        %v3356 = vpop.f32.mrb[0].mxu0
        %v3357 = vadd.f32 0.0, %v3356
        %v3358 = vpop.f32.mrb[0].mxu0
        %3359 = vmatprep.mubr.f32.mxu0 %v3027
        %3360 = vmatmul.mubr.f32.gmra.mrb[0].mxu0 %v3025
        %v3361 = vpop.f32.mrb[0].mxu0
        %v3362 = vadd.f32 0.0, %v3361
        %v3363 = vpop.f32.mrb[0].mxu0
        %3364 = vdwg.mxu0
        %v3365 = vmul.f32 %v3287, %v3076
        %v3366 = vmul.f32 %v3292, %v3077
        %v3367 = vmul.f32 %v3297, %v3078
        %v3368 = vmul.f32 %v3302, %v3079
        %v3369 = vmul.f32 %v3307, %v3080
        %v3370 = vmul.f32 %v3312, %v3081
        %v3371 = vmul.f32 %v3317, %v3082
        %v3372 = vmul.f32 %v3322, %v3083
        %v3373 = vmul.f32 %v3327, %v3084
        %v3374 = vmul.f32 %v3332, %v3085
        %v3375 = vmul.f32 %v3337, %v3086
        %v3376 = vmul.f32 %v3342, %v3087
        %v3377 = vmul.f32 %v3347, %v3088
        %v3378 = vmul.f32 %v3352, %v3089
        %v3379 = vmul.f32 %v3357, %v3090
        %v3380 = vmul.f32 %v3362, %v3091
        %v3382 = vsel %vm1856, %v3365, 0
        %v3385 = vsel %vm1856, %v3366, 0
        %v3388 = vsel %vm1856, %v3367, 0
        %v3391 = vsel %vm1856, %v3368, 0
        %v3394 = vsel %vm1856, %v3369, 0
        %v3397 = vsel %vm1856, %v3370, 0
        %v3400 = vsel %vm1856, %v3371, 0
        %v3403 = vsel %vm1856, %v3372, 0
        %v3406 = vsel %vm1856, %v3373, 0
        %v3409 = vsel %vm1856, %v3374, 0
        %v3412 = vsel %vm1856, %v3375, 0
        %v3415 = vsel %vm1856, %v3376, 0
        %v3418 = vsel %vm1856, %v3377, 0
        %v3421 = vsel %vm1856, %v3378, 0
        %v3424 = vsel %vm1856, %v3379, 0
        %v3427 = vsel %vm1856, %v3380, 0
        %3429 = vmatprep.subr.mxu0 0.0
        %3430 = vmatpush1.msra.mxu0 %v1780
        %3431 = vmatprep.subr.mxu0 0.0
        %3432 = vmatpush1.msra.mxu0 %v1781
        %3433 = vmatprep.subr.mxu0 0.0
        %3434 = vmatpush1.msra.mxu0 %v1782
        %3435 = vmatprep.subr.mxu0 0.0
        %3436 = vmatpush1.msra.mxu0 %v1783
        %3437 = vmatprep.subr.mxu0 0.0
        %3438 = vmatpush1.msra.mxu0 0.0
        %3439 = vmatprep.subr.mxu0 0.0
        %3440 = vmatpush1.msra.mxu0 0.0
        %3441 = vmatprep.subr.mxu0 0.0
        %3442 = vmatpush1.msra.mxu0 0.0
        %3443 = vmatprep.subr.mxu0 0.0
        %3444 = vmatpush1.msra.mxu0 0.0
        %3445 = vmatprep.subr.mxu0 0.0
        %3446 = vmatpush1.msra.mxu0 0.0
        %3447 = vmatprep.subr.mxu0 0.0
        %3448 = vmatpush1.msra.mxu0 0.0
        %3449 = vmatprep.subr.mxu0 0.0
        %3450 = vmatpush1.msra.mxu0 0.0
        %3451 = vmatprep.subr.mxu0 0.0
        %3452 = vmatpush1.msra.mxu0 0.0
        %3453 = vmatprep.subr.mxu0 0.0
        %3454 = vmatpush1.msra.mxu0 0.0
        %3455 = vmatprep.subr.mxu0 0.0
        %3456 = vmatpush1.msra.mxu0 0.0
        %3457 = vmatprep.subr.mxu0 0.0
        %3458 = vmatpush1.msra.mxu0 0.0
        %3459 = vmatprep.subr.mxu0 0.0
        %3460 = vmatpush1.msra.mxu0 0.0
        %3461 = vmatprep.subr.mxu0 0.0
        %3462 = vmatpush1.msra.mxu0 0.0
        %3463 = vmatprep.subr.mxu0 0.0
        %3464 = vmatpush1.msra.mxu0 0.0
        %3465 = vmatprep.subr.mxu0 0.0
        %3466 = vmatpush1.msra.mxu0 0.0
        %3467 = vmatprep.subr.mxu0 0.0
        %3468 = vmatpush1.msra.mxu0 0.0
        %3469 = vmatprep.subr.mxu0 0.0
        %3470 = vmatpush1.msra.mxu0 0.0
        %3471 = vmatprep.subr.mxu0 0.0
        %3472 = vmatpush1.msra.mxu0 0.0
        %3473 = vmatprep.subr.mxu0 0.0
        %3474 = vmatpush1.msra.mxu0 0.0
        %3475 = vmatprep.subr.mxu0 0.0
        %3476 = vmatpush1.msra.mxu0 0.0
        %3477 = vmatprep.subr.mxu0 0.0
        %3478 = vmatpush1.msra.mxu0 0.0
        %3479 = vmatprep.subr.mxu0 0.0
        %3480 = vmatpush1.msra.mxu0 0.0
        %3481 = vmatprep.subr.mxu0 0.0
        %3482 = vmatpush1.msra.mxu0 0.0
        %3483 = vmatprep.subr.mxu0 0.0
        %3484 = vmatpush1.msra.mxu0 0.0
        %3485 = vmatprep.subr.mxu0 0.0
        %3486 = vmatpush1.msra.mxu0 0.0
        %3487 = vmatprep.subr.mxu0 0.0
        %3488 = vmatpush1.msra.mxu0 0.0
        %3489 = vmatprep.subr.mxu0 0.0
        %3490 = vmatpush1.msra.mxu0 0.0
        %3491 = vmatprep.subr.mxu0 0.0
        %3492 = vmatpush1.msra.mxu0 0.0
        %3493 = vmatprep.mubr.f32.mxu0 0.0
        %3494 = vmatmul.mubr.f32.gmra.mrb[0].mxu0 %v3382
        %v3495 = vpop.f32.mrb[0].mxu0
        %v3496 = vadd.f32 0.0, %v3495
        %v3497 = vpop.f32.mrb[0].mxu0
        %3498 = vmatprep.mubr.f32.mxu0 0.0
        %3499 = vmatmul.mubr.f32.gmra.mrb[0].mxu0 %v3385
        %v3500 = vpop.f32.mrb[0].mxu0
        %v3501 = vadd.f32 0.0, %v3500
        %v3502 = vpop.f32.mrb[0].mxu0
        %3503 = vmatprep.mubr.f32.mxu0 0.0
        %3504 = vmatmul.mubr.f32.gmra.mrb[0].mxu0 %v3388
        %v3505 = vpop.f32.mrb[0].mxu0
        %v3506 = vadd.f32 0.0, %v3505
        %v3507 = vpop.f32.mrb[0].mxu0
        %3508 = vmatprep.mubr.f32.mxu0 0.0
        %3509 = vmatmul.mubr.f32.gmra.mrb[0].mxu0 %v3391
        %v3510 = vpop.f32.mrb[0].mxu0
        %v3511 = vadd.f32 0.0, %v3510
        %v3512 = vpop.f32.mrb[0].mxu0
        %3513 = vmatprep.mubr.f32.mxu0 0.0
        %3514 = vmatmul.mubr.f32.gmra.mrb[0].mxu0 %v3394
        %v3515 = vpop.f32.mrb[0].mxu0
        %v3516 = vadd.f32 0.0, %v3515
        %v3517 = vpop.f32.mrb[0].mxu0
        %3518 = vmatprep.mubr.f32.mxu0 0.0
        %3519 = vmatmul.mubr.f32.gmra.mrb[0].mxu0 %v3397
        %v3520 = vpop.f32.mrb[0].mxu0
        %v3521 = vadd.f32 0.0, %v3520
        %v3522 = vpop.f32.mrb[0].mxu0
        %3523 = vmatprep.mubr.f32.mxu0 0.0
        %3524 = vmatmul.mubr.f32.gmra.mrb[0].mxu0 %v3400
        %v3525 = vpop.f32.mrb[0].mxu0
        %v3526 = vadd.f32 0.0, %v3525
        %v3527 = vpop.f32.mrb[0].mxu0
        %3528 = vmatprep.mubr.f32.mxu0 0.0
        %3529 = vmatmul.mubr.f32.gmra.mrb[0].mxu0 %v3403
        %v3530 = vpop.f32.mrb[0].mxu0
        %v3531 = vadd.f32 0.0, %v3530
        %v3532 = vpop.f32.mrb[0].mxu0
        %3533 = vmatprep.mubr.f32.mxu0 0.0
        %3534 = vmatmul.mubr.f32.gmra.mrb[0].mxu0 %v3406
        %v3535 = vpop.f32.mrb[0].mxu0
        %v3536 = vadd.f32 0.0, %v3535
        %v3537 = vpop.f32.mrb[0].mxu0
        %3538 = vmatprep.mubr.f32.mxu0 0.0
        %3539 = vmatmul.mubr.f32.gmra.mrb[0].mxu0 %v3409
        %v3540 = vpop.f32.mrb[0].mxu0
        %v3541 = vadd.f32 0.0, %v3540
        %v3542 = vpop.f32.mrb[0].mxu0
        %3543 = vmatprep.mubr.f32.mxu0 0.0
        %3544 = vmatmul.mubr.f32.gmra.mrb[0].mxu0 %v3412
        %v3545 = vpop.f32.mrb[0].mxu0
        %v3546 = vadd.f32 0.0, %v3545
        %v3547 = vpop.f32.mrb[0].mxu0
        %3548 = vmatprep.mubr.f32.mxu0 0.0
        %3549 = vmatmul.mubr.f32.gmra.mrb[0].mxu0 %v3415
        %v3550 = vpop.f32.mrb[0].mxu0
        %v3551 = vadd.f32 0.0, %v3550
        %v3552 = vpop.f32.mrb[0].mxu0
        %3553 = vmatprep.mubr.f32.mxu0 0.0
        %3554 = vmatmul.mubr.f32.gmra.mrb[0].mxu0 %v3418
        %v3555 = vpop.f32.mrb[0].mxu0
        %v3556 = vadd.f32 0.0, %v3555
        %v3557 = vpop.f32.mrb[0].mxu0
        %3558 = vmatprep.mubr.f32.mxu0 0.0
        %3559 = vmatmul.mubr.f32.gmra.mrb[0].mxu0 %v3421
        %v3560 = vpop.f32.mrb[0].mxu0
        %v3561 = vadd.f32 0.0, %v3560
        %v3562 = vpop.f32.mrb[0].mxu0
        %3563 = vmatprep.mubr.f32.mxu0 0.0
        %3564 = vmatmul.mubr.f32.gmra.mrb[0].mxu0 %v3424
        %v3565 = vpop.f32.mrb[0].mxu0
        %v3566 = vadd.f32 0.0, %v3565
        %v3567 = vpop.f32.mrb[0].mxu0
        %3568 = vmatprep.mubr.f32.mxu0 0.0
        %3569 = vmatmul.mubr.f32.gmra.mrb[0].mxu0 %v3427
        %v3570 = vpop.f32.mrb[0].mxu0
        %v3571 = vadd.f32 0.0, %v3570
        %v3572 = vpop.f32.mrb[0].mxu0
        %3573 = vdwg.mxu0
        %v3575 = vsel %vm1856, %v2515, 0
        %v3578 = vsel %vm1856, %v2516, 0
        %v3581 = vsel %vm1856, %v2517, 0
        %v3584 = vsel %vm1856, %v2518, 0
        %v3587 = vsel %vm1856, %v2519, 0
        %v3590 = vsel %vm1856, %v2520, 0
        %v3593 = vsel %vm1856, %v2521, 0
        %v3596 = vsel %vm1856, %v2522, 0
        %v3599 = vsel %vm1856, %v2523, 0
        %v3602 = vsel %vm1856, %v2524, 0
        %v3605 = vsel %vm1856, %v2525, 0
        %v3608 = vsel %vm1856, %v2526, 0
        %v3611 = vsel %vm1856, %v2527, 0
        %v3614 = vsel %vm1856, %v2528, 0
        %v3617 = vsel %vm1856, %v2529, 0
        %v3620 = vsel %vm1856, %v2530, 0
        %3622 = vmatprep.subr.mxu0 0.0
        %3623 = vmatpush1.msra.mxu0 %v1776
        %3624 = vmatprep.subr.mxu0 0.0
        %3625 = vmatpush1.msra.mxu0 %v1777
        %3626 = vmatprep.subr.mxu0 0.0
        %3627 = vmatpush1.msra.mxu0 %v1778
        %3628 = vmatprep.subr.mxu0 0.0
        %3629 = vmatpush1.msra.mxu0 %v1779
        %3630 = vmatprep.subr.mxu0 0.0
        %3631 = vmatpush1.msra.mxu0 0.0
        %3632 = vmatprep.subr.mxu0 0.0
        %3633 = vmatpush1.msra.mxu0 0.0
        %3634 = vmatprep.subr.mxu0 0.0
        %3635 = vmatpush1.msra.mxu0 0.0
        %3636 = vmatprep.subr.mxu0 0.0
        %3637 = vmatpush1.msra.mxu0 0.0
        %3638 = vmatprep.subr.mxu0 0.0
        %3639 = vmatpush1.msra.mxu0 0.0
        %3640 = vmatprep.subr.mxu0 0.0
        %3641 = vmatpush1.msra.mxu0 0.0
        %3642 = vmatprep.subr.mxu0 0.0
        %3643 = vmatpush1.msra.mxu0 0.0
        %3644 = vmatprep.subr.mxu0 0.0
        %3645 = vmatpush1.msra.mxu0 0.0
        %3646 = vmatprep.subr.mxu0 0.0
        %3647 = vmatpush1.msra.mxu0 0.0
        %3648 = vmatprep.subr.mxu0 0.0
        %3649 = vmatpush1.msra.mxu0 0.0
        %3650 = vmatprep.subr.mxu0 0.0
        %3651 = vmatpush1.msra.mxu0 0.0
        %3652 = vmatprep.subr.mxu0 0.0
        %3653 = vmatpush1.msra.mxu0 0.0
        %3654 = vmatprep.subr.mxu0 0.0
        %3655 = vmatpush1.msra.mxu0 0.0
        %3656 = vmatprep.subr.mxu0 0.0
        %3657 = vmatpush1.msra.mxu0 0.0
        %3658 = vmatprep.subr.mxu0 0.0
        %3659 = vmatpush1.msra.mxu0 0.0
        %3660 = vmatprep.subr.mxu0 0.0
        %3661 = vmatpush1.msra.mxu0 0.0
        %3662 = vmatprep.subr.mxu0 0.0
        %3663 = vmatpush1.msra.mxu0 0.0
        %3664 = vmatprep.subr.mxu0 0.0
        %3665 = vmatpush1.msra.mxu0 0.0
        %3666 = vmatprep.subr.mxu0 0.0
        %3667 = vmatpush1.msra.mxu0 0.0
        %3668 = vmatprep.subr.mxu0 0.0
        %3669 = vmatpush1.msra.mxu0 0.0
        %3670 = vmatprep.subr.mxu0 0.0
        %3671 = vmatpush1.msra.mxu0 0.0
        %3672 = vmatprep.subr.mxu0 0.0
        %3673 = vmatpush1.msra.mxu0 0.0
        %3674 = vmatprep.subr.mxu0 0.0
        %3675 = vmatpush1.msra.mxu0 0.0
        %3676 = vmatprep.subr.mxu0 0.0
        %3677 = vmatpush1.msra.mxu0 0.0
        %3678 = vmatprep.subr.mxu0 0.0
        %3679 = vmatpush1.msra.mxu0 0.0
        %3680 = vmatprep.subr.mxu0 0.0
        %3681 = vmatpush1.msra.mxu0 0.0
        %3682 = vmatprep.subr.mxu0 0.0
        %3683 = vmatpush1.msra.mxu0 0.0
        %3684 = vmatprep.subr.mxu0 0.0
        %3685 = vmatpush1.msra.mxu0 0.0
        %3686 = vmatprep.mubr.f32.mxu0 0.0
        %3687 = vmatmul.mubr.f32.gmra.mrb[0].mxu0 %v3575
        %v3688 = vpop.f32.mrb[0].mxu0
        %v3689 = vadd.f32 %v3496, %v3688
        %v3690 = vpop.f32.mrb[0].mxu0
        %3691 = vmatprep.mubr.f32.mxu0 0.0
        %3692 = vmatmul.mubr.f32.gmra.mrb[0].mxu0 %v3578
        %v3693 = vpop.f32.mrb[0].mxu0
        %v3694 = vadd.f32 %v3501, %v3693
        %v3695 = vpop.f32.mrb[0].mxu0
        %3696 = vmatprep.mubr.f32.mxu0 0.0
        %3697 = vmatmul.mubr.f32.gmra.mrb[0].mxu0 %v3581
        %v3698 = vpop.f32.mrb[0].mxu0
        %v3699 = vadd.f32 %v3506, %v3698
        %v3700 = vpop.f32.mrb[0].mxu0
        %3701 = vmatprep.mubr.f32.mxu0 0.0
        %3702 = vmatmul.mubr.f32.gmra.mrb[0].mxu0 %v3584
        %v3703 = vpop.f32.mrb[0].mxu0
        %v3704 = vadd.f32 %v3511, %v3703
        %v3705 = vpop.f32.mrb[0].mxu0
        %3706 = vmatprep.mubr.f32.mxu0 0.0
        %3707 = vmatmul.mubr.f32.gmra.mrb[0].mxu0 %v3587
        %v3708 = vpop.f32.mrb[0].mxu0
        %v3709 = vadd.f32 %v3516, %v3708
        %v3710 = vpop.f32.mrb[0].mxu0
        %3711 = vmatprep.mubr.f32.mxu0 0.0
        %3712 = vmatmul.mubr.f32.gmra.mrb[0].mxu0 %v3590
        %v3713 = vpop.f32.mrb[0].mxu0
        %v3714 = vadd.f32 %v3521, %v3713
        %v3715 = vpop.f32.mrb[0].mxu0
        %3716 = vmatprep.mubr.f32.mxu0 0.0
        %3717 = vmatmul.mubr.f32.gmra.mrb[0].mxu0 %v3593
        %v3718 = vpop.f32.mrb[0].mxu0
        %v3719 = vadd.f32 %v3526, %v3718
        %v3720 = vpop.f32.mrb[0].mxu0
        %3721 = vmatprep.mubr.f32.mxu0 0.0
        %3722 = vmatmul.mubr.f32.gmra.mrb[0].mxu0 %v3596
        %v3723 = vpop.f32.mrb[0].mxu0
        %v3724 = vadd.f32 %v3531, %v3723
        %v3725 = vpop.f32.mrb[0].mxu0
        %3726 = vmatprep.mubr.f32.mxu0 0.0
        %3727 = vmatmul.mubr.f32.gmra.mrb[0].mxu0 %v3599
        %v3728 = vpop.f32.mrb[0].mxu0
        %v3729 = vadd.f32 %v3536, %v3728
        %v3730 = vpop.f32.mrb[0].mxu0
        %3731 = vmatprep.mubr.f32.mxu0 0.0
        %3732 = vmatmul.mubr.f32.gmra.mrb[0].mxu0 %v3602
        %v3733 = vpop.f32.mrb[0].mxu0
        %v3734 = vadd.f32 %v3541, %v3733
        %v3735 = vpop.f32.mrb[0].mxu0
        %3736 = vmatprep.mubr.f32.mxu0 0.0
        %3737 = vmatmul.mubr.f32.gmra.mrb[0].mxu0 %v3605
        %v3738 = vpop.f32.mrb[0].mxu0
        %v3739 = vadd.f32 %v3546, %v3738
        %v3740 = vpop.f32.mrb[0].mxu0
        %3741 = vmatprep.mubr.f32.mxu0 0.0
        %3742 = vmatmul.mubr.f32.gmra.mrb[0].mxu0 %v3608
        %v3743 = vpop.f32.mrb[0].mxu0
        %v3744 = vadd.f32 %v3551, %v3743
        %v3745 = vpop.f32.mrb[0].mxu0
        %3746 = vmatprep.mubr.f32.mxu0 0.0
        %3747 = vmatmul.mubr.f32.gmra.mrb[0].mxu0 %v3611
        %v3748 = vpop.f32.mrb[0].mxu0
        %v3749 = vadd.f32 %v3556, %v3748
        %v3750 = vpop.f32.mrb[0].mxu0
        %3751 = vmatprep.mubr.f32.mxu0 0.0
        %3752 = vmatmul.mubr.f32.gmra.mrb[0].mxu0 %v3614
        %v3753 = vpop.f32.mrb[0].mxu0
        %v3754 = vadd.f32 %v3561, %v3753
        %v3755 = vpop.f32.mrb[0].mxu0
        %3756 = vmatprep.mubr.f32.mxu0 0.0
        %3757 = vmatmul.mubr.f32.gmra.mrb[0].mxu0 %v3617
        %v3758 = vpop.f32.mrb[0].mxu0
        %v3759 = vadd.f32 %v3566, %v3758
        %v3760 = vpop.f32.mrb[0].mxu0
        %3761 = vmatprep.mubr.f32.mxu0 0.0
        %3762 = vmatmul.mubr.f32.gmra.mrb[0].mxu0 %v3620
        %v3763 = vpop.f32.mrb[0].mxu0
        %v3764 = vadd.f32 %v3571, %v3763
        %v3765 = vpop.f32.mrb[0].mxu0
        %3766 = vdwg.mxu0
        %3767 = vrot.lane.b32.xlu0 %v1686, 64
        %v3768 = vpop.permute.xlu0 %3767
        %3769 = vrot.lane.b32.xlu0 %v1691, 64
        %v3770 = vpop.permute.xlu0 %3769
        %3771 = vrot.lane.b32.xlu0 %v1696, 64
        %v3772 = vpop.permute.xlu0 %3771
        %3773 = vrot.lane.b32.xlu0 %v1701, 64
        %v3774 = vpop.permute.xlu0 %3773
        %3775 = vrot.lane.b32.xlu0 %v1706, 64
        %v3776 = vpop.permute.xlu0 %3775
        %3777 = vrot.lane.b32.xlu0 %v1711, 64
        %v3778 = vpop.permute.xlu0 %3777
        %3779 = vrot.lane.b32.xlu0 %v1716, 64
        %v3780 = vpop.permute.xlu0 %3779
        %3781 = vrot.lane.b32.xlu0 %v1721, 64
        %v3782 = vpop.permute.xlu0 %3781
        %3783 = vrot.lane.b32.xlu0 %v1726, 64
        %v3784 = vpop.permute.xlu0 %3783
        %3785 = vrot.lane.b32.xlu0 %v1731, 64
        %v3786 = vpop.permute.xlu0 %3785
        %3787 = vrot.lane.b32.xlu0 %v1736, 64
        %v3788 = vpop.permute.xlu0 %3787
        %3789 = vrot.lane.b32.xlu0 %v1741, 64
        %v3790 = vpop.permute.xlu0 %3789
        %3791 = vrot.lane.b32.xlu0 %v1746, 64
        %v3792 = vpop.permute.xlu0 %3791
        %3793 = vrot.lane.b32.xlu0 %v1751, 64
        %v3794 = vpop.permute.xlu0 %3793
        %3795 = vrot.lane.b32.xlu0 %v1756, 64
        %v3796 = vpop.permute.xlu0 %3795
        %3797 = vrot.lane.b32.xlu0 %v1761, 64
        %v3798 = vpop.permute.xlu0 %3797
        %3799 = vrot.lane.b32.xlu0 %v1792, 64
        %v3800 = vpop.permute.xlu0 %3799
        %3801 = vrot.lane.b32.xlu0 %v1793, 64
        %v3802 = vpop.permute.xlu0 %3801
        %3803 = vrot.lane.b32.xlu0 %v1794, 64
        %v3804 = vpop.permute.xlu0 %3803
        %3805 = vrot.lane.b32.xlu0 %v1795, 64
        %v3806 = vpop.permute.xlu0 %3805
        %3807 = vrot.lane.b32.xlu0 %v1796, 64
        %v3808 = vpop.permute.xlu0 %3807
        %3809 = vrot.lane.b32.xlu0 %v1797, 64
        %v3810 = vpop.permute.xlu0 %3809
        %3811 = vrot.lane.b32.xlu0 %v1798, 64
        %v3812 = vpop.permute.xlu0 %3811
        %3813 = vrot.lane.b32.xlu0 %v1799, 64
        %v3814 = vpop.permute.xlu0 %3813
        %3815 = vrot.lane.b32.xlu0 %v1800, 64
        %v3816 = vpop.permute.xlu0 %3815
        %3817 = vrot.lane.b32.xlu0 %v1801, 64
        %v3818 = vpop.permute.xlu0 %3817
        %3819 = vrot.lane.b32.xlu0 %v1802, 64
        %v3820 = vpop.permute.xlu0 %3819
        %3821 = vrot.lane.b32.xlu0 %v1803, 64
        %v3822 = vpop.permute.xlu0 %3821
        %3823 = vrot.lane.b32.xlu0 %v1804, 64
        %v3824 = vpop.permute.xlu0 %3823
        %3825 = vrot.lane.b32.xlu0 %v1805, 64
        %v3826 = vpop.permute.xlu0 %3825
        %3827 = vrot.lane.b32.xlu0 %v1806, 64
        %v3828 = vpop.permute.xlu0 %3827
        %3829 = vrot.lane.b32.xlu0 %v1807, 64
        %v3830 = vpop.permute.xlu0 %3829
        %3831 = vrot.lane.b32.xlu0 %v1808, 64
        %v3832 = vpop.permute.xlu0 %3831
        %3833 = vrot.lane.b32.xlu0 %v1809, 64
        %v3834 = vpop.permute.xlu0 %3833
        %3835 = vrot.lane.b32.xlu0 %v1810, 64
        %v3836 = vpop.permute.xlu0 %3835
        %3837 = vrot.lane.b32.xlu0 %v1811, 64
        %v3838 = vpop.permute.xlu0 %3837
        %3839 = vrot.lane.b32.xlu0 %v1812, 64
        %v3840 = vpop.permute.xlu0 %3839
        %3841 = vrot.lane.b32.xlu0 %v1813, 64
        %v3842 = vpop.permute.xlu0 %3841
        %3843 = vrot.lane.b32.xlu0 %v1814, 64
        %v3844 = vpop.permute.xlu0 %3843
        %3845 = vrot.lane.b32.xlu0 %v1815, 64
        %v3846 = vpop.permute.xlu0 %3845
        %3847 = vrot.lane.b32.xlu0 %v1816, 64
        %v3848 = vpop.permute.xlu0 %3847
        %3849 = vrot.lane.b32.xlu0 %v1817, 64
        %v3850 = vpop.permute.xlu0 %3849
        %3851 = vrot.lane.b32.xlu0 %v1818, 64
        %v3852 = vpop.permute.xlu0 %3851
        %3853 = vrot.lane.b32.xlu0 %v1819, 64
        %v3854 = vpop.permute.xlu0 %3853
        %3855 = vrot.lane.b32.xlu0 %v1820, 64
        %v3856 = vpop.permute.xlu0 %3855
        %3857 = vrot.lane.b32.xlu0 %v1821, 64
        %v3858 = vpop.permute.xlu0 %3857
        %3859 = vrot.lane.b32.xlu0 %v1822, 64
        %v3860 = vpop.permute.xlu0 %3859
        %3861 = vrot.lane.b32.xlu0 %v1823, 64
        %v3862 = vpop.permute.xlu0 %3861
        %v3863 = vsel %vm1856, %v3768, 0
        %v3865 = vsel %vm1856, %v3770, 0
        %v3867 = vsel %vm1856, %v3772, 0
        %v3869 = vsel %vm1856, %v3774, 0
        %v3871 = vsel %vm1856, %v3776, 0
        %v3873 = vsel %vm1856, %v3778, 0
        %v3875 = vsel %vm1856, %v3780, 0
        %v3877 = vsel %vm1856, %v3782, 0
        %v3879 = vsel %vm1856, %v3784, 0
        %v3881 = vsel %vm1856, %v3786, 0
        %v3883 = vsel %vm1856, %v3788, 0
        %v3885 = vsel %vm1856, %v3790, 0
        %v3887 = vsel %vm1856, %v3792, 0
        %v3889 = vsel %vm1856, %v3794, 0
        %v3891 = vsel %vm1856, %v3796, 0
        %v3893 = vsel %vm1856, %v3798, 0
        %v3895 = vsel %vm1856, %v3800, 0
        %v3897 = vsel %vm1856, %v3802, 0
        %v3899 = vsel %vm1856, %v3804, 0
        %v3901 = vsel %vm1856, %v3806, 0
        %v3903 = vsel %vm1856, %v3808, 0
        %v3905 = vsel %vm1856, %v3810, 0
        %v3907 = vsel %vm1856, %v3812, 0
        %v3909 = vsel %vm1856, %v3814, 0
        %v3911 = vsel %vm1856, %v3816, 0
        %v3913 = vsel %vm1856, %v3818, 0
        %v3915 = vsel %vm1856, %v3820, 0
        %v3917 = vsel %vm1856, %v3822, 0
        %v3919 = vsel %vm1856, %v3824, 0
        %v3921 = vsel %vm1856, %v3826, 0
        %v3923 = vsel %vm1856, %v3828, 0
        %v3925 = vsel %vm1856, %v3830, 0
        %v3927 = vsel %vm1856, %v3832, 0
        %v3929 = vsel %vm1856, %v3834, 0
        %v3931 = vsel %vm1856, %v3836, 0
        %v3933 = vsel %vm1856, %v3838, 0
        %v3935 = vsel %vm1856, %v3840, 0
        %v3937 = vsel %vm1856, %v3842, 0
        %v3939 = vsel %vm1856, %v3844, 0
        %v3941 = vsel %vm1856, %v3846, 0
        %v3943 = vsel %vm1856, %v3848, 0
        %v3945 = vsel %vm1856, %v3850, 0
        %v3947 = vsel %vm1856, %v3852, 0
        %v3949 = vsel %vm1856, %v3854, 0
        %v3951 = vsel %vm1856, %v3856, 0
        %v3953 = vsel %vm1856, %v3858, 0
        %v3955 = vsel %vm1856, %v3860, 0
        %v3957 = vsel %vm1856, %v3862, 0
        %3959 = vmatprep.subr.mxu0 0.0
        %3960 = vmatpush1.xpose.msra.mxu0 %v3895
        %3961 = vmatprep.subr.mxu0 0.0
        %3962 = vmatpush1.xpose.msra.mxu0 %v3897
        %3963 = vmatprep.subr.mxu0 0.0
        %3964 = vmatpush1.xpose.msra.mxu0 %v3899
        %3965 = vmatprep.subr.mxu0 0.0
        %3966 = vmatpush1.xpose.msra.mxu0 %v3901
        %3967 = vmatprep.subr.mxu0 0.0
        %3968 = vmatpush1.xpose.msra.mxu0 %v3903
        %3969 = vmatprep.subr.mxu0 0.0
        %3970 = vmatpush1.xpose.msra.mxu0 %v3905
        %3971 = vmatprep.subr.mxu0 0.0
        %3972 = vmatpush1.xpose.msra.mxu0 %v3907
        %3973 = vmatprep.subr.mxu0 0.0
        %3974 = vmatpush1.xpose.msra.mxu0 %v3909
        %3975 = vmatprep.subr.mxu0 0.0
        %3976 = vmatpush1.xpose.msra.mxu0 %v3911
        %3977 = vmatprep.subr.mxu0 0.0
        %3978 = vmatpush1.xpose.msra.mxu0 %v3913
        %3979 = vmatprep.subr.mxu0 0.0
        %3980 = vmatpush1.xpose.msra.mxu0 %v3915
        %3981 = vmatprep.subr.mxu0 0.0
        %3982 = vmatpush1.xpose.msra.mxu0 %v3917
        %3983 = vmatprep.subr.mxu0 0.0
        %3984 = vmatpush1.xpose.msra.mxu0 %v3919
        %3985 = vmatprep.subr.mxu0 0.0
        %3986 = vmatpush1.xpose.msra.mxu0 %v3921
        %3987 = vmatprep.subr.mxu0 0.0
        %3988 = vmatpush1.xpose.msra.mxu0 %v3923
        %3989 = vmatprep.subr.mxu0 0.0
        %3990 = vmatpush1.xpose.msra.mxu0 %v3925
        %3991 = vmatprep.subr.mxu0 0.0
        %3992 = vmatpush1.xpose.msra.mxu0 %v3927
        %3993 = vmatprep.subr.mxu0 0.0
        %3994 = vmatpush1.xpose.msra.mxu0 %v3929
        %3995 = vmatprep.subr.mxu0 0.0
        %3996 = vmatpush1.xpose.msra.mxu0 %v3931
        %3997 = vmatprep.subr.mxu0 0.0
        %3998 = vmatpush1.xpose.msra.mxu0 %v3933
        %3999 = vmatprep.subr.mxu0 0.0
        %4000 = vmatpush1.xpose.msra.mxu0 %v3935
        %4001 = vmatprep.subr.mxu0 0.0
        %4002 = vmatpush1.xpose.msra.mxu0 %v3937
        %4003 = vmatprep.subr.mxu0 0.0
        %4004 = vmatpush1.xpose.msra.mxu0 %v3939
        %4005 = vmatprep.subr.mxu0 0.0
        %4006 = vmatpush1.xpose.msra.mxu0 %v3941
        %4007 = vmatprep.subr.mxu0 0.0
        %4008 = vmatpush1.xpose.msra.mxu0 %v3943
        %4009 = vmatprep.subr.mxu0 0.0
        %4010 = vmatpush1.xpose.msra.mxu0 %v3945
        %4011 = vmatprep.subr.mxu0 0.0
        %4012 = vmatpush1.xpose.msra.mxu0 %v3947
        %4013 = vmatprep.subr.mxu0 0.0
        %4014 = vmatpush1.xpose.msra.mxu0 %v3949
        %4015 = vmatprep.subr.mxu0 0.0
        %4016 = vmatpush1.xpose.msra.mxu0 %v3951
        %4017 = vmatprep.subr.mxu0 0.0
        %4018 = vmatpush1.xpose.msra.mxu0 %v3953
        %4019 = vmatprep.subr.mxu0 0.0
        %4020 = vmatpush1.xpose.msra.mxu0 %v3955
        %4021 = vmatprep.subr.mxu0 0.0
        %4022 = vmatpush1.xpose.msra.mxu0 %v3957
        %4023 = vmatprep.mubr.f32.mxu0 0.0
        %4024 = vmatmul.mubr.f32.gmra.mrb[0].mxu0 %v3863
        %v4025 = vpop.f32.mrb[0].mxu0
        %v4026 = vadd.f32 %v1769, %v4025
        %v4027 = vpop.f32.mrb[0].mxu0
        %v4028 = vadd.f32 %v1773, %v4027
        %4029 = vmatprep.mubr.f32.mxu0 0.0
        %4030 = vmatmul.mubr.f32.gmra.mrb[0].mxu0 %v3865
        %v4031 = vpop.f32.mrb[0].mxu0
        %v4032 = vadd.f32 %v1769, %v4031
        %v4033 = vpop.f32.mrb[0].mxu0
        %v4034 = vadd.f32 %v1773, %v4033
        %4035 = vmatprep.mubr.f32.mxu0 0.0
        %4036 = vmatmul.mubr.f32.gmra.mrb[0].mxu0 %v3867
        %v4037 = vpop.f32.mrb[0].mxu0
        %v4038 = vadd.f32 %v1769, %v4037
        %v4039 = vpop.f32.mrb[0].mxu0
        %v4040 = vadd.f32 %v1773, %v4039
        %4041 = vmatprep.mubr.f32.mxu0 0.0
        %4042 = vmatmul.mubr.f32.gmra.mrb[0].mxu0 %v3869
        %v4043 = vpop.f32.mrb[0].mxu0
        %v4044 = vadd.f32 %v1769, %v4043
        %v4045 = vpop.f32.mrb[0].mxu0
        %v4046 = vadd.f32 %v1773, %v4045
        %4047 = vmatprep.mubr.f32.mxu0 0.0
        %4048 = vmatmul.mubr.f32.gmra.mrb[0].mxu0 %v3871
        %v4049 = vpop.f32.mrb[0].mxu0
        %v4050 = vadd.f32 %v1769, %v4049
        %v4051 = vpop.f32.mrb[0].mxu0
        %v4052 = vadd.f32 %v1773, %v4051
        %4053 = vmatprep.mubr.f32.mxu0 0.0
        %4054 = vmatmul.mubr.f32.gmra.mrb[0].mxu0 %v3873
        %v4055 = vpop.f32.mrb[0].mxu0
        %v4056 = vadd.f32 %v1769, %v4055
        %v4057 = vpop.f32.mrb[0].mxu0
        %v4058 = vadd.f32 %v1773, %v4057
        %4059 = vmatprep.mubr.f32.mxu0 0.0
        %4060 = vmatmul.mubr.f32.gmra.mrb[0].mxu0 %v3875
        %v4061 = vpop.f32.mrb[0].mxu0
        %v4062 = vadd.f32 %v1769, %v4061
        %v4063 = vpop.f32.mrb[0].mxu0
        %v4064 = vadd.f32 %v1773, %v4063
        %4065 = vmatprep.mubr.f32.mxu0 0.0
        %4066 = vmatmul.mubr.f32.gmra.mrb[0].mxu0 %v3877
        %v4067 = vpop.f32.mrb[0].mxu0
        %v4068 = vadd.f32 %v1769, %v4067
        %v4069 = vpop.f32.mrb[0].mxu0
        %v4070 = vadd.f32 %v1773, %v4069
        %4071 = vmatprep.mubr.f32.mxu0 0.0
        %4072 = vmatmul.mubr.f32.gmra.mrb[0].mxu0 %v3879
        %v4073 = vpop.f32.mrb[0].mxu0
        %v4074 = vadd.f32 %v1769, %v4073
        %v4075 = vpop.f32.mrb[0].mxu0
        %v4076 = vadd.f32 %v1773, %v4075
        %4077 = vmatprep.mubr.f32.mxu0 0.0
        %4078 = vmatmul.mubr.f32.gmra.mrb[0].mxu0 %v3881
        %v4079 = vpop.f32.mrb[0].mxu0
        %v4080 = vadd.f32 %v1769, %v4079
        %v4081 = vpop.f32.mrb[0].mxu0
        %v4082 = vadd.f32 %v1773, %v4081
        %4083 = vmatprep.mubr.f32.mxu0 0.0
        %4084 = vmatmul.mubr.f32.gmra.mrb[0].mxu0 %v3883
        %v4085 = vpop.f32.mrb[0].mxu0
        %v4086 = vadd.f32 %v1769, %v4085
        %v4087 = vpop.f32.mrb[0].mxu0
        %v4088 = vadd.f32 %v1773, %v4087
        %4089 = vmatprep.mubr.f32.mxu0 0.0
        %4090 = vmatmul.mubr.f32.gmra.mrb[0].mxu0 %v3885
        %v4091 = vpop.f32.mrb[0].mxu0
        %v4092 = vadd.f32 %v1769, %v4091
        %v4093 = vpop.f32.mrb[0].mxu0
        %v4094 = vadd.f32 %v1773, %v4093
        %4095 = vmatprep.mubr.f32.mxu0 0.0
        %4096 = vmatmul.mubr.f32.gmra.mrb[0].mxu0 %v3887
        %v4097 = vpop.f32.mrb[0].mxu0
        %v4098 = vadd.f32 %v1769, %v4097
        %v4099 = vpop.f32.mrb[0].mxu0
        %v4100 = vadd.f32 %v1773, %v4099
        %4101 = vmatprep.mubr.f32.mxu0 0.0
        %4102 = vmatmul.mubr.f32.gmra.mrb[0].mxu0 %v3889
        %v4103 = vpop.f32.mrb[0].mxu0
        %v4104 = vadd.f32 %v1769, %v4103
        %v4105 = vpop.f32.mrb[0].mxu0
        %v4106 = vadd.f32 %v1773, %v4105
        %4107 = vmatprep.mubr.f32.mxu0 0.0
        %4108 = vmatmul.mubr.f32.gmra.mrb[0].mxu0 %v3891
        %v4109 = vpop.f32.mrb[0].mxu0
        %v4110 = vadd.f32 %v1769, %v4109
        %v4111 = vpop.f32.mrb[0].mxu0
        %v4112 = vadd.f32 %v1773, %v4111
        %4113 = vmatprep.mubr.f32.mxu0 0.0
        %4114 = vmatmul.mubr.f32.gmra.mrb[0].mxu0 %v3893
        %v4115 = vpop.f32.mrb[0].mxu0
        %v4116 = vadd.f32 %v1769, %v4115
        %v4117 = vpop.f32.mrb[0].mxu0
        %v4118 = vadd.f32 %v1773, %v4117
        %4119 = vdwg.mxu0
        %v4120 = vmax.f32 %v4026, %v4028
        %4121 = vmax.xlane.f32.xlu0 %v4120
        %v4122 = vpop.xlane.xlu0 %4121
        %v4123 = vmax.f32 %v4032, %v4034
        %4124 = vmax.xlane.f32.xlu0 %v4123
        %v4125 = vpop.xlane.xlu0 %4124
        %v4126 = vmax.f32 %v4038, %v4040
        %4127 = vmax.xlane.f32.xlu0 %v4126
        %v4128 = vpop.xlane.xlu0 %4127
        %v4129 = vmax.f32 %v4044, %v4046
        %4130 = vmax.xlane.f32.xlu0 %v4129
        %v4131 = vpop.xlane.xlu0 %4130
        %v4132 = vmax.f32 %v4050, %v4052
        %4133 = vmax.xlane.f32.xlu0 %v4132
        %v4134 = vpop.xlane.xlu0 %4133
        %v4135 = vmax.f32 %v4056, %v4058
        %4136 = vmax.xlane.f32.xlu0 %v4135
        %v4137 = vpop.xlane.xlu0 %4136
        %v4138 = vmax.f32 %v4062, %v4064
        %4139 = vmax.xlane.f32.xlu0 %v4138
        %v4140 = vpop.xlane.xlu0 %4139
        %v4141 = vmax.f32 %v4068, %v4070
        %4142 = vmax.xlane.f32.xlu0 %v4141
        %v4143 = vpop.xlane.xlu0 %4142
        %v4144 = vmax.f32 %v4074, %v4076
        %4145 = vmax.xlane.f32.xlu0 %v4144
        %v4146 = vpop.xlane.xlu0 %4145
        %v4147 = vmax.f32 %v4080, %v4082
        %4148 = vmax.xlane.f32.xlu0 %v4147
        %v4149 = vpop.xlane.xlu0 %4148
        %v4150 = vmax.f32 %v4086, %v4088
        %4151 = vmax.xlane.f32.xlu0 %v4150
        %v4152 = vpop.xlane.xlu0 %4151
        %v4153 = vmax.f32 %v4092, %v4094
        %4154 = vmax.xlane.f32.xlu0 %v4153
        %v4155 = vpop.xlane.xlu0 %4154
        %v4156 = vmax.f32 %v4098, %v4100
        %4157 = vmax.xlane.f32.xlu0 %v4156
        %v4158 = vpop.xlane.xlu0 %4157
        %v4159 = vmax.f32 %v4104, %v4106
        %4160 = vmax.xlane.f32.xlu0 %v4159
        %v4161 = vpop.xlane.xlu0 %4160
        %v4162 = vmax.f32 %v4110, %v4112
        %4163 = vmax.xlane.f32.xlu0 %v4162
        %v4164 = vpop.xlane.xlu0 %4163
        %v4165 = vmax.f32 %v4116, %v4118
        %4166 = vmax.xlane.f32.xlu0 %v4165
        %v4167 = vpop.xlane.xlu0 %4166
        %v4168 = vsub.f32 %v4026, %v4122
        %v4169 = vsub.f32 %v4028, %v4122
        %v4170 = vsub.f32 %v4032, %v4125
        %v4171 = vsub.f32 %v4034, %v4125
        %v4172 = vsub.f32 %v4038, %v4128
        %v4173 = vsub.f32 %v4040, %v4128
        %v4174 = vsub.f32 %v4044, %v4131
        %v4175 = vsub.f32 %v4046, %v4131
        %v4176 = vsub.f32 %v4050, %v4134
        %v4177 = vsub.f32 %v4052, %v4134
        %v4178 = vsub.f32 %v4056, %v4137
        %v4179 = vsub.f32 %v4058, %v4137
        %v4180 = vsub.f32 %v4062, %v4140
        %v4181 = vsub.f32 %v4064, %v4140
        %v4182 = vsub.f32 %v4068, %v4143
        %v4183 = vsub.f32 %v4070, %v4143
        %v4184 = vsub.f32 %v4074, %v4146
        %v4185 = vsub.f32 %v4076, %v4146
        %v4186 = vsub.f32 %v4080, %v4149
        %v4187 = vsub.f32 %v4082, %v4149
        %v4188 = vsub.f32 %v4086, %v4152
        %v4189 = vsub.f32 %v4088, %v4152
        %v4190 = vsub.f32 %v4092, %v4155
        %v4191 = vsub.f32 %v4094, %v4155
        %v4192 = vsub.f32 %v4098, %v4158
        %v4193 = vsub.f32 %v4100, %v4158
        %v4194 = vsub.f32 %v4104, %v4161
        %v4195 = vsub.f32 %v4106, %v4161
        %v4196 = vsub.f32 %v4110, %v4164
        %v4197 = vsub.f32 %v4112, %v4164
        %v4198 = vsub.f32 %v4116, %v4167
        %v4199 = vsub.f32 %v4118, %v4167
        %v4200 = vmul.f32 %v4168, 1.442695
        %v4201 = vpow.pop %v4200
        %v4202 = vmul.f32 %v4169, 1.442695
        %v4203 = vpow.pop %v4202
        %v4204 = vmul.f32 %v4170, 1.442695
        %v4205 = vpow.pop %v4204
        %v4206 = vmul.f32 %v4171, 1.442695
        %v4207 = vpow.pop %v4206
        %v4208 = vmul.f32 %v4172, 1.442695
        %v4209 = vpow.pop %v4208
        %v4210 = vmul.f32 %v4173, 1.442695
        %v4211 = vpow.pop %v4210
        %v4212 = vmul.f32 %v4174, 1.442695
        %v4213 = vpow.pop %v4212
        %v4214 = vmul.f32 %v4175, 1.442695
        %v4215 = vpow.pop %v4214
        %v4216 = vmul.f32 %v4176, 1.442695
        %v4217 = vpow.pop %v4216
        %v4218 = vmul.f32 %v4177, 1.442695
        %v4219 = vpow.pop %v4218
        %v4220 = vmul.f32 %v4178, 1.442695
        %v4221 = vpow.pop %v4220
        %v4222 = vmul.f32 %v4179, 1.442695
        %v4223 = vpow.pop %v4222
        %v4224 = vmul.f32 %v4180, 1.442695
        %v4225 = vpow.pop %v4224
        %v4226 = vmul.f32 %v4181, 1.442695
        %v4227 = vpow.pop %v4226
        %v4228 = vmul.f32 %v4182, 1.442695
        %v4229 = vpow.pop %v4228
        %v4230 = vmul.f32 %v4183, 1.442695
        %v4231 = vpow.pop %v4230
        %v4232 = vmul.f32 %v4184, 1.442695
        %v4233 = vpow.pop %v4232
        %v4234 = vmul.f32 %v4185, 1.442695
        %v4235 = vpow.pop %v4234
        %v4236 = vmul.f32 %v4186, 1.442695
        %v4237 = vpow.pop %v4236
        %v4238 = vmul.f32 %v4187, 1.442695
        %v4239 = vpow.pop %v4238
        %v4240 = vmul.f32 %v4188, 1.442695
        %v4241 = vpow.pop %v4240
        %v4242 = vmul.f32 %v4189, 1.442695
        %v4243 = vpow.pop %v4242
        %v4244 = vmul.f32 %v4190, 1.442695
        %v4245 = vpow.pop %v4244
        %v4246 = vmul.f32 %v4191, 1.442695
        %v4247 = vpow.pop %v4246
        %v4248 = vmul.f32 %v4192, 1.442695
        %v4249 = vpow.pop %v4248
        %v4250 = vmul.f32 %v4193, 1.442695
        %v4251 = vpow.pop %v4250
        %v4252 = vmul.f32 %v4194, 1.442695
        %v4253 = vpow.pop %v4252
        %v4254 = vmul.f32 %v4195, 1.442695
        %v4255 = vpow.pop %v4254
        %v4256 = vmul.f32 %v4196, 1.442695
        %v4257 = vpow.pop %v4256
        %v4258 = vmul.f32 %v4197, 1.442695
        %v4259 = vpow.pop %v4258
        %v4260 = vmul.f32 %v4198, 1.442695
        %v4261 = vpow.pop %v4260
        %v4262 = vmul.f32 %v4199, 1.442695
        %v4263 = vpow.pop %v4262
        %v4264 = vadd.f32 %v4201, %v4203
        %4265 = vadd.xlane.f32.xlu0 %v4264
        %v4266 = vpop.xlane.xlu0 %4265
        %v4267 = vadd.f32 %v4205, %v4207
        %4268 = vadd.xlane.f32.xlu0 %v4267
        %v4269 = vpop.xlane.xlu0 %4268
        %v4270 = vadd.f32 %v4209, %v4211
        %4271 = vadd.xlane.f32.xlu0 %v4270
        %v4272 = vpop.xlane.xlu0 %4271
        %v4273 = vadd.f32 %v4213, %v4215
        %4274 = vadd.xlane.f32.xlu0 %v4273
        %v4275 = vpop.xlane.xlu0 %4274
        %v4276 = vadd.f32 %v4217, %v4219
        %4277 = vadd.xlane.f32.xlu0 %v4276
        %v4278 = vpop.xlane.xlu0 %4277
        %v4279 = vadd.f32 %v4221, %v4223
        %4280 = vadd.xlane.f32.xlu0 %v4279
        %v4281 = vpop.xlane.xlu0 %4280
        %v4282 = vadd.f32 %v4225, %v4227
        %4283 = vadd.xlane.f32.xlu0 %v4282
        %v4284 = vpop.xlane.xlu0 %4283
        %v4285 = vadd.f32 %v4229, %v4231
        %4286 = vadd.xlane.f32.xlu0 %v4285
        %v4287 = vpop.xlane.xlu0 %4286
        %v4288 = vadd.f32 %v4233, %v4235
        %4289 = vadd.xlane.f32.xlu0 %v4288
        %v4290 = vpop.xlane.xlu0 %4289
        %v4291 = vadd.f32 %v4237, %v4239
        %4292 = vadd.xlane.f32.xlu0 %v4291
        %v4293 = vpop.xlane.xlu0 %4292
        %v4294 = vadd.f32 %v4241, %v4243
        %4295 = vadd.xlane.f32.xlu0 %v4294
        %v4296 = vpop.xlane.xlu0 %4295
        %v4297 = vadd.f32 %v4245, %v4247
        %4298 = vadd.xlane.f32.xlu0 %v4297
        %v4299 = vpop.xlane.xlu0 %4298
        %v4300 = vadd.f32 %v4249, %v4251
        %4301 = vadd.xlane.f32.xlu0 %v4300
        %v4302 = vpop.xlane.xlu0 %4301
        %v4303 = vadd.f32 %v4253, %v4255
        %4304 = vadd.xlane.f32.xlu0 %v4303
        %v4305 = vpop.xlane.xlu0 %4304
        %v4306 = vadd.f32 %v4257, %v4259
        %4307 = vadd.xlane.f32.xlu0 %v4306
        %v4308 = vpop.xlane.xlu0 %4307
        %v4309 = vadd.f32 %v4261, %v4263
        %4310 = vadd.xlane.f32.xlu0 %v4309
        %v4311 = vpop.xlane.xlu0 %4310
        %v4312 = vrcp.pop %v4266
        %v4313 = vrcp.pop %v4269
        %v4314 = vrcp.pop %v4272
        %v4315 = vrcp.pop %v4275
        %v4316 = vrcp.pop %v4278
        %v4317 = vrcp.pop %v4281
        %v4318 = vrcp.pop %v4284
        %v4319 = vrcp.pop %v4287
        %v4320 = vrcp.pop %v4290
        %v4321 = vrcp.pop %v4293
        %v4322 = vrcp.pop %v4296
        %v4323 = vrcp.pop %v4299
        %v4324 = vrcp.pop %v4302
        %v4325 = vrcp.pop %v4305
        %v4326 = vrcp.pop %v4308
        %v4327 = vrcp.pop %v4311
        %4328 = vrot.lane.b32.xlu0 %v1824, 64
        %v4329 = vpop.permute.xlu0 %4328
        %4330 = vrot.lane.b32.xlu0 %v1825, 64
        %v4331 = vpop.permute.xlu0 %4330
        %4332 = vrot.lane.b32.xlu0 %v1826, 64
        %v4333 = vpop.permute.xlu0 %4332
        %4334 = vrot.lane.b32.xlu0 %v1827, 64
        %v4335 = vpop.permute.xlu0 %4334
        %4336 = vrot.lane.b32.xlu0 %v1828, 64
        %v4337 = vpop.permute.xlu0 %4336
        %4338 = vrot.lane.b32.xlu0 %v1829, 64
        %v4339 = vpop.permute.xlu0 %4338
        %4340 = vrot.lane.b32.xlu0 %v1830, 64
        %v4341 = vpop.permute.xlu0 %4340
        %4342 = vrot.lane.b32.xlu0 %v1831, 64
        %v4343 = vpop.permute.xlu0 %4342
        %4344 = vrot.lane.b32.xlu0 %v1832, 64
        %v4345 = vpop.permute.xlu0 %4344
        %4346 = vrot.lane.b32.xlu0 %v1833, 64
        %v4347 = vpop.permute.xlu0 %4346
        %4348 = vrot.lane.b32.xlu0 %v1834, 64
        %v4349 = vpop.permute.xlu0 %4348
        %4350 = vrot.lane.b32.xlu0 %v1835, 64
        %v4351 = vpop.permute.xlu0 %4350
        %4352 = vrot.lane.b32.xlu0 %v1836, 64
        %v4353 = vpop.permute.xlu0 %4352
        %4354 = vrot.lane.b32.xlu0 %v1837, 64
        %v4355 = vpop.permute.xlu0 %4354
        %4356 = vrot.lane.b32.xlu0 %v1838, 64
        %v4357 = vpop.permute.xlu0 %4356
        %4358 = vrot.lane.b32.xlu0 %v1839, 64
        %v4359 = vpop.permute.xlu0 %4358
        %4360 = vrot.lane.b32.xlu0 %v1840, 64
        %v4361 = vpop.permute.xlu0 %4360
        %4362 = vrot.lane.b32.xlu0 %v1841, 64
        %v4363 = vpop.permute.xlu0 %4362
        %4364 = vrot.lane.b32.xlu0 %v1842, 64
        %v4365 = vpop.permute.xlu0 %4364
        %4366 = vrot.lane.b32.xlu0 %v1843, 64
        %v4367 = vpop.permute.xlu0 %4366
        %4368 = vrot.lane.b32.xlu0 %v1844, 64
        %v4369 = vpop.permute.xlu0 %4368
        %4370 = vrot.lane.b32.xlu0 %v1845, 64
        %v4371 = vpop.permute.xlu0 %4370
        %4372 = vrot.lane.b32.xlu0 %v1846, 64
        %v4373 = vpop.permute.xlu0 %4372
        %4374 = vrot.lane.b32.xlu0 %v1847, 64
        %v4375 = vpop.permute.xlu0 %4374
        %4376 = vrot.lane.b32.xlu0 %v1848, 64
        %v4377 = vpop.permute.xlu0 %4376
        %4378 = vrot.lane.b32.xlu0 %v1849, 64
        %v4379 = vpop.permute.xlu0 %4378
        %4380 = vrot.lane.b32.xlu0 %v1850, 64
        %v4381 = vpop.permute.xlu0 %4380
        %4382 = vrot.lane.b32.xlu0 %v1851, 64
        %v4383 = vpop.permute.xlu0 %4382
        %4384 = vrot.lane.b32.xlu0 %v1852, 64
        %v4385 = vpop.permute.xlu0 %4384
        %4386 = vrot.lane.b32.xlu0 %v1853, 64
        %v4387 = vpop.permute.xlu0 %4386
        %4388 = vrot.lane.b32.xlu0 %v1854, 64
        %v4389 = vpop.permute.xlu0 %4388
        %4390 = vrot.lane.b32.xlu0 %v1855, 64
        %v4391 = vpop.permute.xlu0 %4390
        %4424 = vmatprep.subr.mxu0 0.0
        %4425 = vmatpush1.msra.mxu0 %v4329
        %4426 = vmatprep.subr.mxu0 0.0
        %4427 = vmatpush1.msra.mxu0 %v4331
        %4428 = vmatprep.subr.mxu0 0.0
        %4429 = vmatpush1.msra.mxu0 %v4333
        %4430 = vmatprep.subr.mxu0 0.0
        %4431 = vmatpush1.msra.mxu0 %v4335
        %4432 = vmatprep.subr.mxu0 0.0
        %4433 = vmatpush1.msra.mxu0 %v4337
        %4434 = vmatprep.subr.mxu0 0.0
        %4435 = vmatpush1.msra.mxu0 %v4339
        %4436 = vmatprep.subr.mxu0 0.0
        %4437 = vmatpush1.msra.mxu0 %v4341
        %4438 = vmatprep.subr.mxu0 0.0
        %4439 = vmatpush1.msra.mxu0 %v4343
        %4440 = vmatprep.subr.mxu0 0.0
        %4441 = vmatpush1.msra.mxu0 %v4345
        %4442 = vmatprep.subr.mxu0 0.0
        %4443 = vmatpush1.msra.mxu0 %v4347
        %4444 = vmatprep.subr.mxu0 0.0
        %4445 = vmatpush1.msra.mxu0 %v4349
        %4446 = vmatprep.subr.mxu0 0.0
        %4447 = vmatpush1.msra.mxu0 %v4351
        %4448 = vmatprep.subr.mxu0 0.0
        %4449 = vmatpush1.msra.mxu0 %v4353
        %4450 = vmatprep.subr.mxu0 0.0
        %4451 = vmatpush1.msra.mxu0 %v4355
        %4452 = vmatprep.subr.mxu0 0.0
        %4453 = vmatpush1.msra.mxu0 %v4357
        %4454 = vmatprep.subr.mxu0 0.0
        %4455 = vmatpush1.msra.mxu0 %v4359
        %4456 = vmatprep.subr.mxu0 0.0
        %4457 = vmatpush1.msra.mxu0 %v4361
        %4458 = vmatprep.subr.mxu0 0.0
        %4459 = vmatpush1.msra.mxu0 %v4363
        %4460 = vmatprep.subr.mxu0 0.0
        %4461 = vmatpush1.msra.mxu0 %v4365
        %4462 = vmatprep.subr.mxu0 0.0
        %4463 = vmatpush1.msra.mxu0 %v4367
        %4464 = vmatprep.subr.mxu0 0.0
        %4465 = vmatpush1.msra.mxu0 %v4369
        %4466 = vmatprep.subr.mxu0 0.0
        %4467 = vmatpush1.msra.mxu0 %v4371
        %4468 = vmatprep.subr.mxu0 0.0
        %4469 = vmatpush1.msra.mxu0 %v4373
        %4470 = vmatprep.subr.mxu0 0.0
        %4471 = vmatpush1.msra.mxu0 %v4375
        %4472 = vmatprep.subr.mxu0 0.0
        %4473 = vmatpush1.msra.mxu0 %v4377
        %4474 = vmatprep.subr.mxu0 0.0
        %4475 = vmatpush1.msra.mxu0 %v4379
        %4476 = vmatprep.subr.mxu0 0.0
        %4477 = vmatpush1.msra.mxu0 %v4381
        %4478 = vmatprep.subr.mxu0 0.0
        %4479 = vmatpush1.msra.mxu0 %v4383
        %4480 = vmatprep.subr.mxu0 0.0
        %4481 = vmatpush1.msra.mxu0 %v4385
        %4482 = vmatprep.subr.mxu0 0.0
        %4483 = vmatpush1.msra.mxu0 %v4387
        %4484 = vmatprep.subr.mxu0 0.0
        %4485 = vmatpush1.msra.mxu0 %v4389
        %4486 = vmatprep.subr.mxu0 0.0
        %4487 = vmatpush1.msra.mxu0 %v4391
        %4488 = vmatprep.mubr.f32.mxu0 %v4203
        %4489 = vmatmul.mubr.f32.gmra.mrb[0].mxu0 %v4201
        %v4490 = vpop.f32.mrb[0].mxu0
        %v4491 = vadd.f32 0.0, %v4490
        %v4492 = vpop.f32.mrb[0].mxu0
        %4493 = vmatprep.mubr.f32.mxu0 %v4207
        %4494 = vmatmul.mubr.f32.gmra.mrb[0].mxu0 %v4205
        %v4495 = vpop.f32.mrb[0].mxu0
        %v4496 = vadd.f32 0.0, %v4495
        %v4497 = vpop.f32.mrb[0].mxu0
        %4498 = vmatprep.mubr.f32.mxu0 %v4211
        %4499 = vmatmul.mubr.f32.gmra.mrb[0].mxu0 %v4209
        %v4500 = vpop.f32.mrb[0].mxu0
        %v4501 = vadd.f32 0.0, %v4500
        %v4502 = vpop.f32.mrb[0].mxu0
        %4503 = vmatprep.mubr.f32.mxu0 %v4215
        %4504 = vmatmul.mubr.f32.gmra.mrb[0].mxu0 %v4213
        %v4505 = vpop.f32.mrb[0].mxu0
        %v4506 = vadd.f32 0.0, %v4505
        %v4507 = vpop.f32.mrb[0].mxu0
        %4508 = vmatprep.mubr.f32.mxu0 %v4219
        %4509 = vmatmul.mubr.f32.gmra.mrb[0].mxu0 %v4217
        %v4510 = vpop.f32.mrb[0].mxu0
        %v4511 = vadd.f32 0.0, %v4510
        %v4512 = vpop.f32.mrb[0].mxu0
        %4513 = vmatprep.mubr.f32.mxu0 %v4223
        %4514 = vmatmul.mubr.f32.gmra.mrb[0].mxu0 %v4221
        %v4515 = vpop.f32.mrb[0].mxu0
        %v4516 = vadd.f32 0.0, %v4515
        %v4517 = vpop.f32.mrb[0].mxu0
        %4518 = vmatprep.mubr.f32.mxu0 %v4227
        %4519 = vmatmul.mubr.f32.gmra.mrb[0].mxu0 %v4225
        %v4520 = vpop.f32.mrb[0].mxu0
        %v4521 = vadd.f32 0.0, %v4520
        %v4522 = vpop.f32.mrb[0].mxu0
        %4523 = vmatprep.mubr.f32.mxu0 %v4231
        %4524 = vmatmul.mubr.f32.gmra.mrb[0].mxu0 %v4229
        %v4525 = vpop.f32.mrb[0].mxu0
        %v4526 = vadd.f32 0.0, %v4525
        %v4527 = vpop.f32.mrb[0].mxu0
        %4528 = vmatprep.mubr.f32.mxu0 %v4235
        %4529 = vmatmul.mubr.f32.gmra.mrb[0].mxu0 %v4233
        %v4530 = vpop.f32.mrb[0].mxu0
        %v4531 = vadd.f32 0.0, %v4530
        %v4532 = vpop.f32.mrb[0].mxu0
        %4533 = vmatprep.mubr.f32.mxu0 %v4239
        %4534 = vmatmul.mubr.f32.gmra.mrb[0].mxu0 %v4237
        %v4535 = vpop.f32.mrb[0].mxu0
        %v4536 = vadd.f32 0.0, %v4535
        %v4537 = vpop.f32.mrb[0].mxu0
        %4538 = vmatprep.mubr.f32.mxu0 %v4243
        %4539 = vmatmul.mubr.f32.gmra.mrb[0].mxu0 %v4241
        %v4540 = vpop.f32.mrb[0].mxu0
        %v4541 = vadd.f32 0.0, %v4540
        %v4542 = vpop.f32.mrb[0].mxu0
        %4543 = vmatprep.mubr.f32.mxu0 %v4247
        %4544 = vmatmul.mubr.f32.gmra.mrb[0].mxu0 %v4245
        %v4545 = vpop.f32.mrb[0].mxu0
        %v4546 = vadd.f32 0.0, %v4545
        %v4547 = vpop.f32.mrb[0].mxu0
        %4548 = vmatprep.mubr.f32.mxu0 %v4251
        %4549 = vmatmul.mubr.f32.gmra.mrb[0].mxu0 %v4249
        %v4550 = vpop.f32.mrb[0].mxu0
        %v4551 = vadd.f32 0.0, %v4550
        %v4552 = vpop.f32.mrb[0].mxu0
        %4553 = vmatprep.mubr.f32.mxu0 %v4255
        %4554 = vmatmul.mubr.f32.gmra.mrb[0].mxu0 %v4253
        %v4555 = vpop.f32.mrb[0].mxu0
        %v4556 = vadd.f32 0.0, %v4555
        %v4557 = vpop.f32.mrb[0].mxu0
        %4558 = vmatprep.mubr.f32.mxu0 %v4259
        %4559 = vmatmul.mubr.f32.gmra.mrb[0].mxu0 %v4257
        %v4560 = vpop.f32.mrb[0].mxu0
        %v4561 = vadd.f32 0.0, %v4560
        %v4562 = vpop.f32.mrb[0].mxu0
        %4563 = vmatprep.mubr.f32.mxu0 %v4263
        %4564 = vmatmul.mubr.f32.gmra.mrb[0].mxu0 %v4261
        %v4565 = vpop.f32.mrb[0].mxu0
        %v4566 = vadd.f32 0.0, %v4565
        %v4567 = vpop.f32.mrb[0].mxu0
        %4568 = vdwg.mxu0
        %v4569 = vmul.f32 %v4491, %v4312
        %v4570 = vmul.f32 %v4496, %v4313
        %v4571 = vmul.f32 %v4501, %v4314
        %v4572 = vmul.f32 %v4506, %v4315
        %v4573 = vmul.f32 %v4511, %v4316
        %v4574 = vmul.f32 %v4516, %v4317
        %v4575 = vmul.f32 %v4521, %v4318
        %v4576 = vmul.f32 %v4526, %v4319
        %v4577 = vmul.f32 %v4531, %v4320
        %v4578 = vmul.f32 %v4536, %v4321
        %v4579 = vmul.f32 %v4541, %v4322
        %v4580 = vmul.f32 %v4546, %v4323
        %v4581 = vmul.f32 %v4551, %v4324
        %v4582 = vmul.f32 %v4556, %v4325
        %v4583 = vmul.f32 %v4561, %v4326
        %v4584 = vmul.f32 %v4566, %v4327
        %v4586 = vsel %vm1856, %v4569, 0
        %v4589 = vsel %vm1856, %v4570, 0
        %v4592 = vsel %vm1856, %v4571, 0
        %v4595 = vsel %vm1856, %v4572, 0
        %v4598 = vsel %vm1856, %v4573, 0
        %v4601 = vsel %vm1856, %v4574, 0
        %v4604 = vsel %vm1856, %v4575, 0
        %v4607 = vsel %vm1856, %v4576, 0
        %v4610 = vsel %vm1856, %v4577, 0
        %v4613 = vsel %vm1856, %v4578, 0
        %v4616 = vsel %vm1856, %v4579, 0
        %v4619 = vsel %vm1856, %v4580, 0
        %v4622 = vsel %vm1856, %v4581, 0
        %v4625 = vsel %vm1856, %v4582, 0
        %v4628 = vsel %vm1856, %v4583, 0
        %v4631 = vsel %vm1856, %v4584, 0
        %4633 = vmatprep.subr.mxu0 0.0
        %4634 = vmatpush1.msra.mxu0 %v1784
        %4635 = vmatprep.subr.mxu0 0.0
        %4636 = vmatpush1.msra.mxu0 %v1785
        %4637 = vmatprep.subr.mxu0 0.0
        %4638 = vmatpush1.msra.mxu0 %v1786
        %4639 = vmatprep.subr.mxu0 0.0
        %4640 = vmatpush1.msra.mxu0 %v1787
        %4641 = vmatprep.subr.mxu0 0.0
        %4642 = vmatpush1.msra.mxu0 0.0
        %4643 = vmatprep.subr.mxu0 0.0
        %4644 = vmatpush1.msra.mxu0 0.0
        %4645 = vmatprep.subr.mxu0 0.0
        %4646 = vmatpush1.msra.mxu0 0.0
        %4647 = vmatprep.subr.mxu0 0.0
        %4648 = vmatpush1.msra.mxu0 0.0
        %4649 = vmatprep.subr.mxu0 0.0
        %4650 = vmatpush1.msra.mxu0 0.0
        %4651 = vmatprep.subr.mxu0 0.0
        %4652 = vmatpush1.msra.mxu0 0.0
        %4653 = vmatprep.subr.mxu0 0.0
        %4654 = vmatpush1.msra.mxu0 0.0
        %4655 = vmatprep.subr.mxu0 0.0
        %4656 = vmatpush1.msra.mxu0 0.0
        %4657 = vmatprep.subr.mxu0 0.0
        %4658 = vmatpush1.msra.mxu0 0.0
        %4659 = vmatprep.subr.mxu0 0.0
        %4660 = vmatpush1.msra.mxu0 0.0
        %4661 = vmatprep.subr.mxu0 0.0
        %4662 = vmatpush1.msra.mxu0 0.0
        %4663 = vmatprep.subr.mxu0 0.0
        %4664 = vmatpush1.msra.mxu0 0.0
        %4665 = vmatprep.subr.mxu0 0.0
        %4666 = vmatpush1.msra.mxu0 0.0
        %4667 = vmatprep.subr.mxu0 0.0
        %4668 = vmatpush1.msra.mxu0 0.0
        %4669 = vmatprep.subr.mxu0 0.0
        %4670 = vmatpush1.msra.mxu0 0.0
        %4671 = vmatprep.subr.mxu0 0.0
        %4672 = vmatpush1.msra.mxu0 0.0
        %4673 = vmatprep.subr.mxu0 0.0
        %4674 = vmatpush1.msra.mxu0 0.0
        %4675 = vmatprep.subr.mxu0 0.0
        %4676 = vmatpush1.msra.mxu0 0.0
        %4677 = vmatprep.subr.mxu0 0.0
        %4678 = vmatpush1.msra.mxu0 0.0
        %4679 = vmatprep.subr.mxu0 0.0
        %4680 = vmatpush1.msra.mxu0 0.0
        %4681 = vmatprep.subr.mxu0 0.0
        %4682 = vmatpush1.msra.mxu0 0.0
        %4683 = vmatprep.subr.mxu0 0.0
        %4684 = vmatpush1.msra.mxu0 0.0
        %4685 = vmatprep.subr.mxu0 0.0
        %4686 = vmatpush1.msra.mxu0 0.0
        %4687 = vmatprep.subr.mxu0 0.0
        %4688 = vmatpush1.msra.mxu0 0.0
        %4689 = vmatprep.subr.mxu0 0.0
        %4690 = vmatpush1.msra.mxu0 0.0
        %4691 = vmatprep.subr.mxu0 0.0
        %4692 = vmatpush1.msra.mxu0 0.0
        %4693 = vmatprep.subr.mxu0 0.0
        %4694 = vmatpush1.msra.mxu0 0.0
        %4695 = vmatprep.subr.mxu0 0.0
        %4696 = vmatpush1.msra.mxu0 0.0
        %4697 = vmatprep.mubr.f32.mxu0 0.0
        %4698 = vmatmul.mubr.f32.gmra.mrb[0].mxu0 %v4586
        %v4699 = vpop.f32.mrb[0].mxu0
        %v4700 = vadd.f32 0.0, %v4699
        %v4701 = vpop.f32.mrb[0].mxu0
        %4702 = vmatprep.mubr.f32.mxu0 0.0
        %4703 = vmatmul.mubr.f32.gmra.mrb[0].mxu0 %v4589
        %v4704 = vpop.f32.mrb[0].mxu0
        %v4705 = vadd.f32 0.0, %v4704
        %v4706 = vpop.f32.mrb[0].mxu0
        %4707 = vmatprep.mubr.f32.mxu0 0.0
        %4708 = vmatmul.mubr.f32.gmra.mrb[0].mxu0 %v4592
        %v4709 = vpop.f32.mrb[0].mxu0
        %v4710 = vadd.f32 0.0, %v4709
        %v4711 = vpop.f32.mrb[0].mxu0
        %4712 = vmatprep.mubr.f32.mxu0 0.0
        %4713 = vmatmul.mubr.f32.gmra.mrb[0].mxu0 %v4595
        %v4714 = vpop.f32.mrb[0].mxu0
        %v4715 = vadd.f32 0.0, %v4714
        %v4716 = vpop.f32.mrb[0].mxu0
        %4717 = vmatprep.mubr.f32.mxu0 0.0
        %4718 = vmatmul.mubr.f32.gmra.mrb[0].mxu0 %v4598
        %v4719 = vpop.f32.mrb[0].mxu0
        %v4720 = vadd.f32 0.0, %v4719
        %v4721 = vpop.f32.mrb[0].mxu0
        %4722 = vmatprep.mubr.f32.mxu0 0.0
        %4723 = vmatmul.mubr.f32.gmra.mrb[0].mxu0 %v4601
        %v4724 = vpop.f32.mrb[0].mxu0
        %v4725 = vadd.f32 0.0, %v4724
        %v4726 = vpop.f32.mrb[0].mxu0
        %4727 = vmatprep.mubr.f32.mxu0 0.0
        %4728 = vmatmul.mubr.f32.gmra.mrb[0].mxu0 %v4604
        %v4729 = vpop.f32.mrb[0].mxu0
        %v4730 = vadd.f32 0.0, %v4729
        %v4731 = vpop.f32.mrb[0].mxu0
        %4732 = vmatprep.mubr.f32.mxu0 0.0
        %4733 = vmatmul.mubr.f32.gmra.mrb[0].mxu0 %v4607
        %v4734 = vpop.f32.mrb[0].mxu0
        %v4735 = vadd.f32 0.0, %v4734
        %v4736 = vpop.f32.mrb[0].mxu0
        %4737 = vmatprep.mubr.f32.mxu0 0.0
        %4738 = vmatmul.mubr.f32.gmra.mrb[0].mxu0 %v4610
        %v4739 = vpop.f32.mrb[0].mxu0
        %v4740 = vadd.f32 0.0, %v4739
        %v4741 = vpop.f32.mrb[0].mxu0
        %4742 = vmatprep.mubr.f32.mxu0 0.0
        %4743 = vmatmul.mubr.f32.gmra.mrb[0].mxu0 %v4613
        %v4744 = vpop.f32.mrb[0].mxu0
        %v4745 = vadd.f32 0.0, %v4744
        %v4746 = vpop.f32.mrb[0].mxu0
        %4747 = vmatprep.mubr.f32.mxu0 0.0
        %4748 = vmatmul.mubr.f32.gmra.mrb[0].mxu0 %v4616
        %v4749 = vpop.f32.mrb[0].mxu0
        %v4750 = vadd.f32 0.0, %v4749
        %v4751 = vpop.f32.mrb[0].mxu0
        %4752 = vmatprep.mubr.f32.mxu0 0.0
        %4753 = vmatmul.mubr.f32.gmra.mrb[0].mxu0 %v4619
        %v4754 = vpop.f32.mrb[0].mxu0
        %v4755 = vadd.f32 0.0, %v4754
        %v4756 = vpop.f32.mrb[0].mxu0
        %4757 = vmatprep.mubr.f32.mxu0 0.0
        %4758 = vmatmul.mubr.f32.gmra.mrb[0].mxu0 %v4622
        %v4759 = vpop.f32.mrb[0].mxu0
        %v4760 = vadd.f32 0.0, %v4759
        %v4761 = vpop.f32.mrb[0].mxu0
        %4762 = vmatprep.mubr.f32.mxu0 0.0
        %4763 = vmatmul.mubr.f32.gmra.mrb[0].mxu0 %v4625
        %v4764 = vpop.f32.mrb[0].mxu0
        %v4765 = vadd.f32 0.0, %v4764
        %v4766 = vpop.f32.mrb[0].mxu0
        %4767 = vmatprep.mubr.f32.mxu0 0.0
        %4768 = vmatmul.mubr.f32.gmra.mrb[0].mxu0 %v4628
        %v4769 = vpop.f32.mrb[0].mxu0
        %v4770 = vadd.f32 0.0, %v4769
        %v4771 = vpop.f32.mrb[0].mxu0
        %4772 = vmatprep.mubr.f32.mxu0 0.0
        %4773 = vmatmul.mubr.f32.gmra.mrb[0].mxu0 %v4631
        %v4774 = vpop.f32.mrb[0].mxu0
        %v4775 = vadd.f32 0.0, %v4774
        %v4776 = vpop.f32.mrb[0].mxu0
        %4777 = vdwg.mxu0
        %v4778 = vadd.f32 %v3689, %v4700
        %v4779 = vadd.f32 %v3694, %v4705
        %v4780 = vadd.f32 %v3699, %v4710
        %v4781 = vadd.f32 %v3704, %v4715
        %v4782 = vadd.f32 %v3709, %v4720
        %v4783 = vadd.f32 %v3714, %v4725
        %v4784 = vadd.f32 %v3719, %v4730
        %v4785 = vadd.f32 %v3724, %v4735
        %v4786 = vadd.f32 %v3729, %v4740
        %v4787 = vadd.f32 %v3734, %v4745
        %v4788 = vadd.f32 %v3739, %v4750
        %v4789 = vadd.f32 %v3744, %v4755
        %v4790 = vadd.f32 %v3749, %v4760
        %v4791 = vadd.f32 %v3754, %v4765
        %v4792 = vadd.f32 %v3759, %v4770
        %v4793 = vadd.f32 %v3764, %v4775
        %4794 = vrot.lane.b32.xlu0 %v1686, 32
        %v4795 = vpop.permute.xlu0 %4794
        %4796 = vrot.lane.b32.xlu0 %v1691, 32
        %v4797 = vpop.permute.xlu0 %4796
        %4798 = vrot.lane.b32.xlu0 %v1696, 32
        %v4799 = vpop.permute.xlu0 %4798
        %4800 = vrot.lane.b32.xlu0 %v1701, 32
        %v4801 = vpop.permute.xlu0 %4800
        %4802 = vrot.lane.b32.xlu0 %v1706, 32
        %v4803 = vpop.permute.xlu0 %4802
        %4804 = vrot.lane.b32.xlu0 %v1711, 32
        %v4805 = vpop.permute.xlu0 %4804
        %4806 = vrot.lane.b32.xlu0 %v1716, 32
        %v4807 = vpop.permute.xlu0 %4806
        %4808 = vrot.lane.b32.xlu0 %v1721, 32
        %v4809 = vpop.permute.xlu0 %4808
        %4810 = vrot.lane.b32.xlu0 %v1726, 32
        %v4811 = vpop.permute.xlu0 %4810
        %4812 = vrot.lane.b32.xlu0 %v1731, 32
        %v4813 = vpop.permute.xlu0 %4812
        %4814 = vrot.lane.b32.xlu0 %v1736, 32
        %v4815 = vpop.permute.xlu0 %4814
        %4816 = vrot.lane.b32.xlu0 %v1741, 32
        %v4817 = vpop.permute.xlu0 %4816
        %4818 = vrot.lane.b32.xlu0 %v1746, 32
        %v4819 = vpop.permute.xlu0 %4818
        %4820 = vrot.lane.b32.xlu0 %v1751, 32
        %v4821 = vpop.permute.xlu0 %4820
        %4822 = vrot.lane.b32.xlu0 %v1756, 32
        %v4823 = vpop.permute.xlu0 %4822
        %4824 = vrot.lane.b32.xlu0 %v1761, 32
        %v4825 = vpop.permute.xlu0 %4824
        %4826 = vrot.lane.b32.xlu0 %v1792, 32
        %v4827 = vpop.permute.xlu0 %4826
        %4828 = vrot.lane.b32.xlu0 %v1793, 32
        %v4829 = vpop.permute.xlu0 %4828
        %4830 = vrot.lane.b32.xlu0 %v1794, 32
        %v4831 = vpop.permute.xlu0 %4830
        %4832 = vrot.lane.b32.xlu0 %v1795, 32
        %v4833 = vpop.permute.xlu0 %4832
        %4834 = vrot.lane.b32.xlu0 %v1796, 32
        %v4835 = vpop.permute.xlu0 %4834
        %4836 = vrot.lane.b32.xlu0 %v1797, 32
        %v4837 = vpop.permute.xlu0 %4836
        %4838 = vrot.lane.b32.xlu0 %v1798, 32
        %v4839 = vpop.permute.xlu0 %4838
        %4840 = vrot.lane.b32.xlu0 %v1799, 32
        %v4841 = vpop.permute.xlu0 %4840
        %4842 = vrot.lane.b32.xlu0 %v1800, 32
        %v4843 = vpop.permute.xlu0 %4842
        %4844 = vrot.lane.b32.xlu0 %v1801, 32
        %v4845 = vpop.permute.xlu0 %4844
        %4846 = vrot.lane.b32.xlu0 %v1802, 32
        %v4847 = vpop.permute.xlu0 %4846
        %4848 = vrot.lane.b32.xlu0 %v1803, 32
        %v4849 = vpop.permute.xlu0 %4848
        %4850 = vrot.lane.b32.xlu0 %v1804, 32
        %v4851 = vpop.permute.xlu0 %4850
        %4852 = vrot.lane.b32.xlu0 %v1805, 32
        %v4853 = vpop.permute.xlu0 %4852
        %4854 = vrot.lane.b32.xlu0 %v1806, 32
        %v4855 = vpop.permute.xlu0 %4854
        %4856 = vrot.lane.b32.xlu0 %v1807, 32
        %v4857 = vpop.permute.xlu0 %4856
        %4858 = vrot.lane.b32.xlu0 %v1808, 32
        %v4859 = vpop.permute.xlu0 %4858
        %4860 = vrot.lane.b32.xlu0 %v1809, 32
        %v4861 = vpop.permute.xlu0 %4860
        %4862 = vrot.lane.b32.xlu0 %v1810, 32
        %v4863 = vpop.permute.xlu0 %4862
        %4864 = vrot.lane.b32.xlu0 %v1811, 32
        %v4865 = vpop.permute.xlu0 %4864
        %4866 = vrot.lane.b32.xlu0 %v1812, 32
        %v4867 = vpop.permute.xlu0 %4866
        %4868 = vrot.lane.b32.xlu0 %v1813, 32
        %v4869 = vpop.permute.xlu0 %4868
        %4870 = vrot.lane.b32.xlu0 %v1814, 32
        %v4871 = vpop.permute.xlu0 %4870
        %4872 = vrot.lane.b32.xlu0 %v1815, 32
        %v4873 = vpop.permute.xlu0 %4872
        %4874 = vrot.lane.b32.xlu0 %v1816, 32
        %v4875 = vpop.permute.xlu0 %4874
        %4876 = vrot.lane.b32.xlu0 %v1817, 32
        %v4877 = vpop.permute.xlu0 %4876
        %4878 = vrot.lane.b32.xlu0 %v1818, 32
        %v4879 = vpop.permute.xlu0 %4878
        %4880 = vrot.lane.b32.xlu0 %v1819, 32
        %v4881 = vpop.permute.xlu0 %4880
        %4882 = vrot.lane.b32.xlu0 %v1820, 32
        %v4883 = vpop.permute.xlu0 %4882
        %4884 = vrot.lane.b32.xlu0 %v1821, 32
        %v4885 = vpop.permute.xlu0 %4884
        %4886 = vrot.lane.b32.xlu0 %v1822, 32
        %v4887 = vpop.permute.xlu0 %4886
        %4888 = vrot.lane.b32.xlu0 %v1823, 32
        %v4889 = vpop.permute.xlu0 %4888
        %v4890 = vsel %vm1856, %v4795, 0
        %v4892 = vsel %vm1856, %v4797, 0
        %v4894 = vsel %vm1856, %v4799, 0
        %v4896 = vsel %vm1856, %v4801, 0
        %v4898 = vsel %vm1856, %v4803, 0
        %v4900 = vsel %vm1856, %v4805, 0
        %v4902 = vsel %vm1856, %v4807, 0
        %v4904 = vsel %vm1856, %v4809, 0
        %v4906 = vsel %vm1856, %v4811, 0
        %v4908 = vsel %vm1856, %v4813, 0
        %v4910 = vsel %vm1856, %v4815, 0
        %v4912 = vsel %vm1856, %v4817, 0
        %v4914 = vsel %vm1856, %v4819, 0
        %v4916 = vsel %vm1856, %v4821, 0
        %v4918 = vsel %vm1856, %v4823, 0
        %v4920 = vsel %vm1856, %v4825, 0
        %v4922 = vsel %vm1856, %v4827, 0
        %v4924 = vsel %vm1856, %v4829, 0
        %v4926 = vsel %vm1856, %v4831, 0
        %v4928 = vsel %vm1856, %v4833, 0
        %v4930 = vsel %vm1856, %v4835, 0
        %v4932 = vsel %vm1856, %v4837, 0
        %v4934 = vsel %vm1856, %v4839, 0
        %v4936 = vsel %vm1856, %v4841, 0
        %v4938 = vsel %vm1856, %v4843, 0
        %v4940 = vsel %vm1856, %v4845, 0
        %v4942 = vsel %vm1856, %v4847, 0
        %v4944 = vsel %vm1856, %v4849, 0
        %v4946 = vsel %vm1856, %v4851, 0
        %v4948 = vsel %vm1856, %v4853, 0
        %v4950 = vsel %vm1856, %v4855, 0
        %v4952 = vsel %vm1856, %v4857, 0
        %v4954 = vsel %vm1856, %v4859, 0
        %v4956 = vsel %vm1856, %v4861, 0
        %v4958 = vsel %vm1856, %v4863, 0
        %v4960 = vsel %vm1856, %v4865, 0
        %v4962 = vsel %vm1856, %v4867, 0
        %v4964 = vsel %vm1856, %v4869, 0
        %v4966 = vsel %vm1856, %v4871, 0
        %v4968 = vsel %vm1856, %v4873, 0
        %v4970 = vsel %vm1856, %v4875, 0
        %v4972 = vsel %vm1856, %v4877, 0
        %v4974 = vsel %vm1856, %v4879, 0
        %v4976 = vsel %vm1856, %v4881, 0
        %v4978 = vsel %vm1856, %v4883, 0
        %v4980 = vsel %vm1856, %v4885, 0
        %v4982 = vsel %vm1856, %v4887, 0
        %v4984 = vsel %vm1856, %v4889, 0
        %4986 = vmatprep.subr.mxu0 0.0
        %4987 = vmatpush1.xpose.msra.mxu0 %v4922
        %4988 = vmatprep.subr.mxu0 0.0
        %4989 = vmatpush1.xpose.msra.mxu0 %v4924
        %4990 = vmatprep.subr.mxu0 0.0
        %4991 = vmatpush1.xpose.msra.mxu0 %v4926
        %4992 = vmatprep.subr.mxu0 0.0
        %4993 = vmatpush1.xpose.msra.mxu0 %v4928
        %4994 = vmatprep.subr.mxu0 0.0
        %4995 = vmatpush1.xpose.msra.mxu0 %v4930
        %4996 = vmatprep.subr.mxu0 0.0
        %4997 = vmatpush1.xpose.msra.mxu0 %v4932
        %4998 = vmatprep.subr.mxu0 0.0
        %4999 = vmatpush1.xpose.msra.mxu0 %v4934
        %5000 = vmatprep.subr.mxu0 0.0
        %5001 = vmatpush1.xpose.msra.mxu0 %v4936
        %5002 = vmatprep.subr.mxu0 0.0
        %5003 = vmatpush1.xpose.msra.mxu0 %v4938
        %5004 = vmatprep.subr.mxu0 0.0
        %5005 = vmatpush1.xpose.msra.mxu0 %v4940
        %5006 = vmatprep.subr.mxu0 0.0
        %5007 = vmatpush1.xpose.msra.mxu0 %v4942
        %5008 = vmatprep.subr.mxu0 0.0
        %5009 = vmatpush1.xpose.msra.mxu0 %v4944
        %5010 = vmatprep.subr.mxu0 0.0
        %5011 = vmatpush1.xpose.msra.mxu0 %v4946
        %5012 = vmatprep.subr.mxu0 0.0
        %5013 = vmatpush1.xpose.msra.mxu0 %v4948
        %5014 = vmatprep.subr.mxu0 0.0
        %5015 = vmatpush1.xpose.msra.mxu0 %v4950
        %5016 = vmatprep.subr.mxu0 0.0
        %5017 = vmatpush1.xpose.msra.mxu0 %v4952
        %5018 = vmatprep.subr.mxu0 0.0
        %5019 = vmatpush1.xpose.msra.mxu0 %v4954
        %5020 = vmatprep.subr.mxu0 0.0
        %5021 = vmatpush1.xpose.msra.mxu0 %v4956
        %5022 = vmatprep.subr.mxu0 0.0
        %5023 = vmatpush1.xpose.msra.mxu0 %v4958
        %5024 = vmatprep.subr.mxu0 0.0
        %5025 = vmatpush1.xpose.msra.mxu0 %v4960
        %5026 = vmatprep.subr.mxu0 0.0
        %5027 = vmatpush1.xpose.msra.mxu0 %v4962
        %5028 = vmatprep.subr.mxu0 0.0
        %5029 = vmatpush1.xpose.msra.mxu0 %v4964
        %5030 = vmatprep.subr.mxu0 0.0
        %5031 = vmatpush1.xpose.msra.mxu0 %v4966
        %5032 = vmatprep.subr.mxu0 0.0
        %5033 = vmatpush1.xpose.msra.mxu0 %v4968
        %5034 = vmatprep.subr.mxu0 0.0
        %5035 = vmatpush1.xpose.msra.mxu0 %v4970
        %5036 = vmatprep.subr.mxu0 0.0
        %5037 = vmatpush1.xpose.msra.mxu0 %v4972
        %5038 = vmatprep.subr.mxu0 0.0
        %5039 = vmatpush1.xpose.msra.mxu0 %v4974
        %5040 = vmatprep.subr.mxu0 0.0
        %5041 = vmatpush1.xpose.msra.mxu0 %v4976
        %5042 = vmatprep.subr.mxu0 0.0
        %5043 = vmatpush1.xpose.msra.mxu0 %v4978
        %5044 = vmatprep.subr.mxu0 0.0
        %5045 = vmatpush1.xpose.msra.mxu0 %v4980
        %5046 = vmatprep.subr.mxu0 0.0
        %5047 = vmatpush1.xpose.msra.mxu0 %v4982
        %5048 = vmatprep.subr.mxu0 0.0
        %5049 = vmatpush1.xpose.msra.mxu0 %v4984
        %5050 = vmatprep.mubr.f32.mxu0 0.0
        %5051 = vmatmul.mubr.f32.gmra.mrb[0].mxu0 %v4890
        %v5052 = vpop.f32.mrb[0].mxu0
        %v5053 = vadd.f32 %v1769, %v5052
        %v5054 = vpop.f32.mrb[0].mxu0
        %v5055 = vadd.f32 %v1773, %v5054
        %5056 = vmatprep.mubr.f32.mxu0 0.0
        %5057 = vmatmul.mubr.f32.gmra.mrb[0].mxu0 %v4892
        %v5058 = vpop.f32.mrb[0].mxu0
        %v5059 = vadd.f32 %v1769, %v5058
        %v5060 = vpop.f32.mrb[0].mxu0
        %v5061 = vadd.f32 %v1773, %v5060
        %5062 = vmatprep.mubr.f32.mxu0 0.0
        %5063 = vmatmul.mubr.f32.gmra.mrb[0].mxu0 %v4894
        %v5064 = vpop.f32.mrb[0].mxu0
        %v5065 = vadd.f32 %v1769, %v5064
        %v5066 = vpop.f32.mrb[0].mxu0
        %v5067 = vadd.f32 %v1773, %v5066
        %5068 = vmatprep.mubr.f32.mxu0 0.0
        %5069 = vmatmul.mubr.f32.gmra.mrb[0].mxu0 %v4896
        %v5070 = vpop.f32.mrb[0].mxu0
        %v5071 = vadd.f32 %v1769, %v5070
        %v5072 = vpop.f32.mrb[0].mxu0
        %v5073 = vadd.f32 %v1773, %v5072
        %5074 = vmatprep.mubr.f32.mxu0 0.0
        %5075 = vmatmul.mubr.f32.gmra.mrb[0].mxu0 %v4898
        %v5076 = vpop.f32.mrb[0].mxu0
        %v5077 = vadd.f32 %v1769, %v5076
        %v5078 = vpop.f32.mrb[0].mxu0
        %v5079 = vadd.f32 %v1773, %v5078
        %5080 = vmatprep.mubr.f32.mxu0 0.0
        %5081 = vmatmul.mubr.f32.gmra.mrb[0].mxu0 %v4900
        %v5082 = vpop.f32.mrb[0].mxu0
        %v5083 = vadd.f32 %v1769, %v5082
        %v5084 = vpop.f32.mrb[0].mxu0
        %v5085 = vadd.f32 %v1773, %v5084
        %5086 = vmatprep.mubr.f32.mxu0 0.0
        %5087 = vmatmul.mubr.f32.gmra.mrb[0].mxu0 %v4902
        %v5088 = vpop.f32.mrb[0].mxu0
        %v5089 = vadd.f32 %v1769, %v5088
        %v5090 = vpop.f32.mrb[0].mxu0
        %v5091 = vadd.f32 %v1773, %v5090
        %5092 = vmatprep.mubr.f32.mxu0 0.0
        %5093 = vmatmul.mubr.f32.gmra.mrb[0].mxu0 %v4904
        %v5094 = vpop.f32.mrb[0].mxu0
        %v5095 = vadd.f32 %v1769, %v5094
        %v5096 = vpop.f32.mrb[0].mxu0
        %v5097 = vadd.f32 %v1773, %v5096
        %5098 = vmatprep.mubr.f32.mxu0 0.0
        %5099 = vmatmul.mubr.f32.gmra.mrb[0].mxu0 %v4906
        %v5100 = vpop.f32.mrb[0].mxu0
        %v5101 = vadd.f32 %v1769, %v5100
        %v5102 = vpop.f32.mrb[0].mxu0
        %v5103 = vadd.f32 %v1773, %v5102
        %5104 = vmatprep.mubr.f32.mxu0 0.0
        %5105 = vmatmul.mubr.f32.gmra.mrb[0].mxu0 %v4908
        %v5106 = vpop.f32.mrb[0].mxu0
        %v5107 = vadd.f32 %v1769, %v5106
        %v5108 = vpop.f32.mrb[0].mxu0
        %v5109 = vadd.f32 %v1773, %v5108
        %5110 = vmatprep.mubr.f32.mxu0 0.0
        %5111 = vmatmul.mubr.f32.gmra.mrb[0].mxu0 %v4910
        %v5112 = vpop.f32.mrb[0].mxu0
        %v5113 = vadd.f32 %v1769, %v5112
        %v5114 = vpop.f32.mrb[0].mxu0
        %v5115 = vadd.f32 %v1773, %v5114
        %5116 = vmatprep.mubr.f32.mxu0 0.0
        %5117 = vmatmul.mubr.f32.gmra.mrb[0].mxu0 %v4912
        %v5118 = vpop.f32.mrb[0].mxu0
        %v5119 = vadd.f32 %v1769, %v5118
        %v5120 = vpop.f32.mrb[0].mxu0
        %v5121 = vadd.f32 %v1773, %v5120
        %5122 = vmatprep.mubr.f32.mxu0 0.0
        %5123 = vmatmul.mubr.f32.gmra.mrb[0].mxu0 %v4914
        %v5124 = vpop.f32.mrb[0].mxu0
        %v5125 = vadd.f32 %v1769, %v5124
        %v5126 = vpop.f32.mrb[0].mxu0
        %v5127 = vadd.f32 %v1773, %v5126
        %5128 = vmatprep.mubr.f32.mxu0 0.0
        %5129 = vmatmul.mubr.f32.gmra.mrb[0].mxu0 %v4916
        %v5130 = vpop.f32.mrb[0].mxu0
        %v5131 = vadd.f32 %v1769, %v5130
        %v5132 = vpop.f32.mrb[0].mxu0
        %v5133 = vadd.f32 %v1773, %v5132
        %5134 = vmatprep.mubr.f32.mxu0 0.0
        %5135 = vmatmul.mubr.f32.gmra.mrb[0].mxu0 %v4918
        %v5136 = vpop.f32.mrb[0].mxu0
        %v5137 = vadd.f32 %v1769, %v5136
        %v5138 = vpop.f32.mrb[0].mxu0
        %v5139 = vadd.f32 %v1773, %v5138
        %5140 = vmatprep.mubr.f32.mxu0 0.0
        %5141 = vmatmul.mubr.f32.gmra.mrb[0].mxu0 %v4920
        %v5142 = vpop.f32.mrb[0].mxu0
        %v5143 = vadd.f32 %v1769, %v5142
        %v5144 = vpop.f32.mrb[0].mxu0
        %v5145 = vadd.f32 %v1773, %v5144
        %5146 = vdwg.mxu0
        %v5147 = vmax.f32 %v5053, %v5055
        %5148 = vmax.xlane.f32.xlu0 %v5147
        %v5149 = vpop.xlane.xlu0 %5148
        %v5150 = vmax.f32 %v5059, %v5061
        %5151 = vmax.xlane.f32.xlu0 %v5150
        %v5152 = vpop.xlane.xlu0 %5151
        %v5153 = vmax.f32 %v5065, %v5067
        %5154 = vmax.xlane.f32.xlu0 %v5153
        %v5155 = vpop.xlane.xlu0 %5154
        %v5156 = vmax.f32 %v5071, %v5073
        %5157 = vmax.xlane.f32.xlu0 %v5156
        %v5158 = vpop.xlane.xlu0 %5157
        %v5159 = vmax.f32 %v5077, %v5079
        %5160 = vmax.xlane.f32.xlu0 %v5159
        %v5161 = vpop.xlane.xlu0 %5160
        %v5162 = vmax.f32 %v5083, %v5085
        %5163 = vmax.xlane.f32.xlu0 %v5162
        %v5164 = vpop.xlane.xlu0 %5163
        %v5165 = vmax.f32 %v5089, %v5091
        %5166 = vmax.xlane.f32.xlu0 %v5165
        %v5167 = vpop.xlane.xlu0 %5166
        %v5168 = vmax.f32 %v5095, %v5097
        %5169 = vmax.xlane.f32.xlu0 %v5168
        %v5170 = vpop.xlane.xlu0 %5169
        %v5171 = vmax.f32 %v5101, %v5103
        %5172 = vmax.xlane.f32.xlu0 %v5171
        %v5173 = vpop.xlane.xlu0 %5172
        %v5174 = vmax.f32 %v5107, %v5109
        %5175 = vmax.xlane.f32.xlu0 %v5174
        %v5176 = vpop.xlane.xlu0 %5175
        %v5177 = vmax.f32 %v5113, %v5115
        %5178 = vmax.xlane.f32.xlu0 %v5177
        %v5179 = vpop.xlane.xlu0 %5178
        %v5180 = vmax.f32 %v5119, %v5121
        %5181 = vmax.xlane.f32.xlu0 %v5180
        %v5182 = vpop.xlane.xlu0 %5181
        %v5183 = vmax.f32 %v5125, %v5127
        %5184 = vmax.xlane.f32.xlu0 %v5183
        %v5185 = vpop.xlane.xlu0 %5184
        %v5186 = vmax.f32 %v5131, %v5133
        %5187 = vmax.xlane.f32.xlu0 %v5186
        %v5188 = vpop.xlane.xlu0 %5187
        %v5189 = vmax.f32 %v5137, %v5139
        %5190 = vmax.xlane.f32.xlu0 %v5189
        %v5191 = vpop.xlane.xlu0 %5190
        %v5192 = vmax.f32 %v5143, %v5145
        %5193 = vmax.xlane.f32.xlu0 %v5192
        %v5194 = vpop.xlane.xlu0 %5193
        %v5195 = vsub.f32 %v5053, %v5149
        %v5196 = vsub.f32 %v5055, %v5149
        %v5197 = vsub.f32 %v5059, %v5152
        %v5198 = vsub.f32 %v5061, %v5152
        %v5199 = vsub.f32 %v5065, %v5155
        %v5200 = vsub.f32 %v5067, %v5155
        %v5201 = vsub.f32 %v5071, %v5158
        %v5202 = vsub.f32 %v5073, %v5158
        %v5203 = vsub.f32 %v5077, %v5161
        %v5204 = vsub.f32 %v5079, %v5161
        %v5205 = vsub.f32 %v5083, %v5164
        %v5206 = vsub.f32 %v5085, %v5164
        %v5207 = vsub.f32 %v5089, %v5167
        %v5208 = vsub.f32 %v5091, %v5167
        %v5209 = vsub.f32 %v5095, %v5170
        %v5210 = vsub.f32 %v5097, %v5170
        %v5211 = vsub.f32 %v5101, %v5173
        %v5212 = vsub.f32 %v5103, %v5173
        %v5213 = vsub.f32 %v5107, %v5176
        %v5214 = vsub.f32 %v5109, %v5176
        %v5215 = vsub.f32 %v5113, %v5179
        %v5216 = vsub.f32 %v5115, %v5179
        %v5217 = vsub.f32 %v5119, %v5182
        %v5218 = vsub.f32 %v5121, %v5182
        %v5219 = vsub.f32 %v5125, %v5185
        %v5220 = vsub.f32 %v5127, %v5185
        %v5221 = vsub.f32 %v5131, %v5188
        %v5222 = vsub.f32 %v5133, %v5188
        %v5223 = vsub.f32 %v5137, %v5191
        %v5224 = vsub.f32 %v5139, %v5191
        %v5225 = vsub.f32 %v5143, %v5194
        %v5226 = vsub.f32 %v5145, %v5194
        %v5227 = vmul.f32 %v5195, 1.442695
        %v5228 = vpow.pop %v5227
        %v5229 = vmul.f32 %v5196, 1.442695
        %v5230 = vpow.pop %v5229
        %v5231 = vmul.f32 %v5197, 1.442695
        %v5232 = vpow.pop %v5231
        %v5233 = vmul.f32 %v5198, 1.442695
        %v5234 = vpow.pop %v5233
        %v5235 = vmul.f32 %v5199, 1.442695
        %v5236 = vpow.pop %v5235
        %v5237 = vmul.f32 %v5200, 1.442695
        %v5238 = vpow.pop %v5237
        %v5239 = vmul.f32 %v5201, 1.442695
        %v5240 = vpow.pop %v5239
        %v5241 = vmul.f32 %v5202, 1.442695
        %v5242 = vpow.pop %v5241
        %v5243 = vmul.f32 %v5203, 1.442695
        %v5244 = vpow.pop %v5243
        %v5245 = vmul.f32 %v5204, 1.442695
        %v5246 = vpow.pop %v5245
        %v5247 = vmul.f32 %v5205, 1.442695
        %v5248 = vpow.pop %v5247
        %v5249 = vmul.f32 %v5206, 1.442695
        %v5250 = vpow.pop %v5249
        %v5251 = vmul.f32 %v5207, 1.442695
        %v5252 = vpow.pop %v5251
        %v5253 = vmul.f32 %v5208, 1.442695
        %v5254 = vpow.pop %v5253
        %v5255 = vmul.f32 %v5209, 1.442695
        %v5256 = vpow.pop %v5255
        %v5257 = vmul.f32 %v5210, 1.442695
        %v5258 = vpow.pop %v5257
        %v5259 = vmul.f32 %v5211, 1.442695
        %v5260 = vpow.pop %v5259
        %v5261 = vmul.f32 %v5212, 1.442695
        %v5262 = vpow.pop %v5261
        %v5263 = vmul.f32 %v5213, 1.442695
        %v5264 = vpow.pop %v5263
        %v5265 = vmul.f32 %v5214, 1.442695
        %v5266 = vpow.pop %v5265
        %v5267 = vmul.f32 %v5215, 1.442695
        %v5268 = vpow.pop %v5267
        %v5269 = vmul.f32 %v5216, 1.442695
        %v5270 = vpow.pop %v5269
        %v5271 = vmul.f32 %v5217, 1.442695
        %v5272 = vpow.pop %v5271
        %v5273 = vmul.f32 %v5218, 1.442695
        %v5274 = vpow.pop %v5273
        %v5275 = vmul.f32 %v5219, 1.442695
        %v5276 = vpow.pop %v5275
        %v5277 = vmul.f32 %v5220, 1.442695
        %v5278 = vpow.pop %v5277
        %v5279 = vmul.f32 %v5221, 1.442695
        %v5280 = vpow.pop %v5279
        %v5281 = vmul.f32 %v5222, 1.442695
        %v5282 = vpow.pop %v5281
        %v5283 = vmul.f32 %v5223, 1.442695
        %v5284 = vpow.pop %v5283
        %v5285 = vmul.f32 %v5224, 1.442695
        %v5286 = vpow.pop %v5285
        %v5287 = vmul.f32 %v5225, 1.442695
        %v5288 = vpow.pop %v5287
        %v5289 = vmul.f32 %v5226, 1.442695
        %v5290 = vpow.pop %v5289
        %v5291 = vadd.f32 %v5228, %v5230
        %5292 = vadd.xlane.f32.xlu0 %v5291
        %v5293 = vpop.xlane.xlu0 %5292
        %v5294 = vadd.f32 %v5232, %v5234
        %5295 = vadd.xlane.f32.xlu0 %v5294
        %v5296 = vpop.xlane.xlu0 %5295
        %v5297 = vadd.f32 %v5236, %v5238
        %5298 = vadd.xlane.f32.xlu0 %v5297
        %v5299 = vpop.xlane.xlu0 %5298
        %v5300 = vadd.f32 %v5240, %v5242
        %5301 = vadd.xlane.f32.xlu0 %v5300
        %v5302 = vpop.xlane.xlu0 %5301
        %v5303 = vadd.f32 %v5244, %v5246
        %5304 = vadd.xlane.f32.xlu0 %v5303
        %v5305 = vpop.xlane.xlu0 %5304
        %v5306 = vadd.f32 %v5248, %v5250
        %5307 = vadd.xlane.f32.xlu0 %v5306
        %v5308 = vpop.xlane.xlu0 %5307
        %v5309 = vadd.f32 %v5252, %v5254
        %5310 = vadd.xlane.f32.xlu0 %v5309
        %v5311 = vpop.xlane.xlu0 %5310
        %v5312 = vadd.f32 %v5256, %v5258
        %5313 = vadd.xlane.f32.xlu0 %v5312
        %v5314 = vpop.xlane.xlu0 %5313
        %v5315 = vadd.f32 %v5260, %v5262
        %5316 = vadd.xlane.f32.xlu0 %v5315
        %v5317 = vpop.xlane.xlu0 %5316
        %v5318 = vadd.f32 %v5264, %v5266
        %5319 = vadd.xlane.f32.xlu0 %v5318
        %v5320 = vpop.xlane.xlu0 %5319
        %v5321 = vadd.f32 %v5268, %v5270
        %5322 = vadd.xlane.f32.xlu0 %v5321
        %v5323 = vpop.xlane.xlu0 %5322
        %v5324 = vadd.f32 %v5272, %v5274
        %5325 = vadd.xlane.f32.xlu0 %v5324
        %v5326 = vpop.xlane.xlu0 %5325
        %v5327 = vadd.f32 %v5276, %v5278
        %5328 = vadd.xlane.f32.xlu0 %v5327
        %v5329 = vpop.xlane.xlu0 %5328
        %v5330 = vadd.f32 %v5280, %v5282
        %5331 = vadd.xlane.f32.xlu0 %v5330
        %v5332 = vpop.xlane.xlu0 %5331
        %v5333 = vadd.f32 %v5284, %v5286
        %5334 = vadd.xlane.f32.xlu0 %v5333
        %v5335 = vpop.xlane.xlu0 %5334
        %v5336 = vadd.f32 %v5288, %v5290
        %5337 = vadd.xlane.f32.xlu0 %v5336
        %v5338 = vpop.xlane.xlu0 %5337
        %v5339 = vrcp.pop %v5293
        %v5340 = vrcp.pop %v5296
        %v5341 = vrcp.pop %v5299
        %v5342 = vrcp.pop %v5302
        %v5343 = vrcp.pop %v5305
        %v5344 = vrcp.pop %v5308
        %v5345 = vrcp.pop %v5311
        %v5346 = vrcp.pop %v5314
        %v5347 = vrcp.pop %v5317
        %v5348 = vrcp.pop %v5320
        %v5349 = vrcp.pop %v5323
        %v5350 = vrcp.pop %v5326
        %v5351 = vrcp.pop %v5329
        %v5352 = vrcp.pop %v5332
        %v5353 = vrcp.pop %v5335
        %v5354 = vrcp.pop %v5338
        %5355 = vrot.lane.b32.xlu0 %v1824, 32
        %v5356 = vpop.permute.xlu0 %5355
        %5357 = vrot.lane.b32.xlu0 %v1825, 32
        %v5358 = vpop.permute.xlu0 %5357
        %5359 = vrot.lane.b32.xlu0 %v1826, 32
        %v5360 = vpop.permute.xlu0 %5359
        %5361 = vrot.lane.b32.xlu0 %v1827, 32
        %v5362 = vpop.permute.xlu0 %5361
        %5363 = vrot.lane.b32.xlu0 %v1828, 32
        %v5364 = vpop.permute.xlu0 %5363
        %5365 = vrot.lane.b32.xlu0 %v1829, 32
        %v5366 = vpop.permute.xlu0 %5365
        %5367 = vrot.lane.b32.xlu0 %v1830, 32
        %v5368 = vpop.permute.xlu0 %5367
        %5369 = vrot.lane.b32.xlu0 %v1831, 32
        %v5370 = vpop.permute.xlu0 %5369
        %5371 = vrot.lane.b32.xlu0 %v1832, 32
        %v5372 = vpop.permute.xlu0 %5371
        %5373 = vrot.lane.b32.xlu0 %v1833, 32
        %v5374 = vpop.permute.xlu0 %5373
        %5375 = vrot.lane.b32.xlu0 %v1834, 32
        %v5376 = vpop.permute.xlu0 %5375
        %5377 = vrot.lane.b32.xlu0 %v1835, 32
        %v5378 = vpop.permute.xlu0 %5377
        %5379 = vrot.lane.b32.xlu0 %v1836, 32
        %v5380 = vpop.permute.xlu0 %5379
        %5381 = vrot.lane.b32.xlu0 %v1837, 32
        %v5382 = vpop.permute.xlu0 %5381
        %5383 = vrot.lane.b32.xlu0 %v1838, 32
        %v5384 = vpop.permute.xlu0 %5383
        %5385 = vrot.lane.b32.xlu0 %v1839, 32
        %v5386 = vpop.permute.xlu0 %5385
        %5387 = vrot.lane.b32.xlu0 %v1840, 32
        %v5388 = vpop.permute.xlu0 %5387
        %5389 = vrot.lane.b32.xlu0 %v1841, 32
        %v5390 = vpop.permute.xlu0 %5389
        %5391 = vrot.lane.b32.xlu0 %v1842, 32
        %v5392 = vpop.permute.xlu0 %5391
        %5393 = vrot.lane.b32.xlu0 %v1843, 32
        %v5394 = vpop.permute.xlu0 %5393
        %5395 = vrot.lane.b32.xlu0 %v1844, 32
        %v5396 = vpop.permute.xlu0 %5395
        %5397 = vrot.lane.b32.xlu0 %v1845, 32
        %v5398 = vpop.permute.xlu0 %5397
        %5399 = vrot.lane.b32.xlu0 %v1846, 32
        %v5400 = vpop.permute.xlu0 %5399
        %5401 = vrot.lane.b32.xlu0 %v1847, 32
        %v5402 = vpop.permute.xlu0 %5401
        %5403 = vrot.lane.b32.xlu0 %v1848, 32
        %v5404 = vpop.permute.xlu0 %5403
        %5405 = vrot.lane.b32.xlu0 %v1849, 32
        %v5406 = vpop.permute.xlu0 %5405
        %5407 = vrot.lane.b32.xlu0 %v1850, 32
        %v5408 = vpop.permute.xlu0 %5407
        %5409 = vrot.lane.b32.xlu0 %v1851, 32
        %v5410 = vpop.permute.xlu0 %5409
        %5411 = vrot.lane.b32.xlu0 %v1852, 32
        %v5412 = vpop.permute.xlu0 %5411
        %5413 = vrot.lane.b32.xlu0 %v1853, 32
        %v5414 = vpop.permute.xlu0 %5413
        %5415 = vrot.lane.b32.xlu0 %v1854, 32
        %v5416 = vpop.permute.xlu0 %5415
        %5417 = vrot.lane.b32.xlu0 %v1855, 32
        %v5418 = vpop.permute.xlu0 %5417
        %5451 = vmatprep.subr.mxu0 0.0
        %5452 = vmatpush1.msra.mxu0 %v5356
        %5453 = vmatprep.subr.mxu0 0.0
        %5454 = vmatpush1.msra.mxu0 %v5358
        %5455 = vmatprep.subr.mxu0 0.0
        %5456 = vmatpush1.msra.mxu0 %v5360
        %5457 = vmatprep.subr.mxu0 0.0
        %5458 = vmatpush1.msra.mxu0 %v5362
        %5459 = vmatprep.subr.mxu0 0.0
        %5460 = vmatpush1.msra.mxu0 %v5364
        %5461 = vmatprep.subr.mxu0 0.0
        %5462 = vmatpush1.msra.mxu0 %v5366
        %5463 = vmatprep.subr.mxu0 0.0
        %5464 = vmatpush1.msra.mxu0 %v5368
        %5465 = vmatprep.subr.mxu0 0.0
        %5466 = vmatpush1.msra.mxu0 %v5370
        %5467 = vmatprep.subr.mxu0 0.0
        %5468 = vmatpush1.msra.mxu0 %v5372
        %5469 = vmatprep.subr.mxu0 0.0
        %5470 = vmatpush1.msra.mxu0 %v5374
        %5471 = vmatprep.subr.mxu0 0.0
        %5472 = vmatpush1.msra.mxu0 %v5376
        %5473 = vmatprep.subr.mxu0 0.0
        %5474 = vmatpush1.msra.mxu0 %v5378
        %5475 = vmatprep.subr.mxu0 0.0
        %5476 = vmatpush1.msra.mxu0 %v5380
        %5477 = vmatprep.subr.mxu0 0.0
        %5478 = vmatpush1.msra.mxu0 %v5382
        %5479 = vmatprep.subr.mxu0 0.0
        %5480 = vmatpush1.msra.mxu0 %v5384
        %5481 = vmatprep.subr.mxu0 0.0
        %5482 = vmatpush1.msra.mxu0 %v5386
        %5483 = vmatprep.subr.mxu0 0.0
        %5484 = vmatpush1.msra.mxu0 %v5388
        %5485 = vmatprep.subr.mxu0 0.0
        %5486 = vmatpush1.msra.mxu0 %v5390
        %5487 = vmatprep.subr.mxu0 0.0
        %5488 = vmatpush1.msra.mxu0 %v5392
        %5489 = vmatprep.subr.mxu0 0.0
        %5490 = vmatpush1.msra.mxu0 %v5394
        %5491 = vmatprep.subr.mxu0 0.0
        %5492 = vmatpush1.msra.mxu0 %v5396
        %5493 = vmatprep.subr.mxu0 0.0
        %5494 = vmatpush1.msra.mxu0 %v5398
        %5495 = vmatprep.subr.mxu0 0.0
        %5496 = vmatpush1.msra.mxu0 %v5400
        %5497 = vmatprep.subr.mxu0 0.0
        %5498 = vmatpush1.msra.mxu0 %v5402
        %5499 = vmatprep.subr.mxu0 0.0
        %5500 = vmatpush1.msra.mxu0 %v5404
        %5501 = vmatprep.subr.mxu0 0.0
        %5502 = vmatpush1.msra.mxu0 %v5406
        %5503 = vmatprep.subr.mxu0 0.0
        %5504 = vmatpush1.msra.mxu0 %v5408
        %5505 = vmatprep.subr.mxu0 0.0
        %5506 = vmatpush1.msra.mxu0 %v5410
        %5507 = vmatprep.subr.mxu0 0.0
        %5508 = vmatpush1.msra.mxu0 %v5412
        %5509 = vmatprep.subr.mxu0 0.0
        %5510 = vmatpush1.msra.mxu0 %v5414
        %5511 = vmatprep.subr.mxu0 0.0
        %5512 = vmatpush1.msra.mxu0 %v5416
        %5513 = vmatprep.subr.mxu0 0.0
        %5514 = vmatpush1.msra.mxu0 %v5418
        %5515 = vmatprep.mubr.f32.mxu0 %v5230
        %5516 = vmatmul.mubr.f32.gmra.mrb[0].mxu0 %v5228
        %v5517 = vpop.f32.mrb[0].mxu0
        %v5518 = vadd.f32 0.0, %v5517
        %v5519 = vpop.f32.mrb[0].mxu0
        %5520 = vmatprep.mubr.f32.mxu0 %v5234
        %5521 = vmatmul.mubr.f32.gmra.mrb[0].mxu0 %v5232
        %v5522 = vpop.f32.mrb[0].mxu0
        %v5523 = vadd.f32 0.0, %v5522
        %v5524 = vpop.f32.mrb[0].mxu0
        %5525 = vmatprep.mubr.f32.mxu0 %v5238
        %5526 = vmatmul.mubr.f32.gmra.mrb[0].mxu0 %v5236
        %v5527 = vpop.f32.mrb[0].mxu0
        %v5528 = vadd.f32 0.0, %v5527
        %v5529 = vpop.f32.mrb[0].mxu0
        %5530 = vmatprep.mubr.f32.mxu0 %v5242
        %5531 = vmatmul.mubr.f32.gmra.mrb[0].mxu0 %v5240
        %v5532 = vpop.f32.mrb[0].mxu0
        %v5533 = vadd.f32 0.0, %v5532
        %v5534 = vpop.f32.mrb[0].mxu0
        %5535 = vmatprep.mubr.f32.mxu0 %v5246
        %5536 = vmatmul.mubr.f32.gmra.mrb[0].mxu0 %v5244
        %v5537 = vpop.f32.mrb[0].mxu0
        %v5538 = vadd.f32 0.0, %v5537
        %v5539 = vpop.f32.mrb[0].mxu0
        %5540 = vmatprep.mubr.f32.mxu0 %v5250
        %5541 = vmatmul.mubr.f32.gmra.mrb[0].mxu0 %v5248
        %v5542 = vpop.f32.mrb[0].mxu0
        %v5543 = vadd.f32 0.0, %v5542
        %v5544 = vpop.f32.mrb[0].mxu0
        %5545 = vmatprep.mubr.f32.mxu0 %v5254
        %5546 = vmatmul.mubr.f32.gmra.mrb[0].mxu0 %v5252
        %v5547 = vpop.f32.mrb[0].mxu0
        %v5548 = vadd.f32 0.0, %v5547
        %v5549 = vpop.f32.mrb[0].mxu0
        %5550 = vmatprep.mubr.f32.mxu0 %v5258
        %5551 = vmatmul.mubr.f32.gmra.mrb[0].mxu0 %v5256
        %v5552 = vpop.f32.mrb[0].mxu0
        %v5553 = vadd.f32 0.0, %v5552
        %v5554 = vpop.f32.mrb[0].mxu0
        %5555 = vmatprep.mubr.f32.mxu0 %v5262
        %5556 = vmatmul.mubr.f32.gmra.mrb[0].mxu0 %v5260
        %v5557 = vpop.f32.mrb[0].mxu0
        %v5558 = vadd.f32 0.0, %v5557
        %v5559 = vpop.f32.mrb[0].mxu0
        %5560 = vmatprep.mubr.f32.mxu0 %v5266
        %5561 = vmatmul.mubr.f32.gmra.mrb[0].mxu0 %v5264
        %v5562 = vpop.f32.mrb[0].mxu0
        %v5563 = vadd.f32 0.0, %v5562
        %v5564 = vpop.f32.mrb[0].mxu0
        %5565 = vmatprep.mubr.f32.mxu0 %v5270
        %5566 = vmatmul.mubr.f32.gmra.mrb[0].mxu0 %v5268
        %v5567 = vpop.f32.mrb[0].mxu0
        %v5568 = vadd.f32 0.0, %v5567
        %v5569 = vpop.f32.mrb[0].mxu0
        %5570 = vmatprep.mubr.f32.mxu0 %v5274
        %5571 = vmatmul.mubr.f32.gmra.mrb[0].mxu0 %v5272
        %v5572 = vpop.f32.mrb[0].mxu0
        %v5573 = vadd.f32 0.0, %v5572
        %v5574 = vpop.f32.mrb[0].mxu0
        %5575 = vmatprep.mubr.f32.mxu0 %v5278
        %5576 = vmatmul.mubr.f32.gmra.mrb[0].mxu0 %v5276
        %v5577 = vpop.f32.mrb[0].mxu0
        %v5578 = vadd.f32 0.0, %v5577
        %v5579 = vpop.f32.mrb[0].mxu0
        %5580 = vmatprep.mubr.f32.mxu0 %v5282
        %5581 = vmatmul.mubr.f32.gmra.mrb[0].mxu0 %v5280
        %v5582 = vpop.f32.mrb[0].mxu0
        %v5583 = vadd.f32 0.0, %v5582
        %v5584 = vpop.f32.mrb[0].mxu0
        %5585 = vmatprep.mubr.f32.mxu0 %v5286
        %5586 = vmatmul.mubr.f32.gmra.mrb[0].mxu0 %v5284
        %v5587 = vpop.f32.mrb[0].mxu0
        %v5588 = vadd.f32 0.0, %v5587
        %v5589 = vpop.f32.mrb[0].mxu0
        %5590 = vmatprep.mubr.f32.mxu0 %v5290
        %5591 = vmatmul.mubr.f32.gmra.mrb[0].mxu0 %v5288
        %v5592 = vpop.f32.mrb[0].mxu0
        %v5593 = vadd.f32 0.0, %v5592
        %v5594 = vpop.f32.mrb[0].mxu0
        %5595 = vdwg.mxu0
        %v5596 = vmul.f32 %v5518, %v5339
        %v5597 = vmul.f32 %v5523, %v5340
        %v5598 = vmul.f32 %v5528, %v5341
        %v5599 = vmul.f32 %v5533, %v5342
        %v5600 = vmul.f32 %v5538, %v5343
        %v5601 = vmul.f32 %v5543, %v5344
        %v5602 = vmul.f32 %v5548, %v5345
        %v5603 = vmul.f32 %v5553, %v5346
        %v5604 = vmul.f32 %v5558, %v5347
        %v5605 = vmul.f32 %v5563, %v5348
        %v5606 = vmul.f32 %v5568, %v5349
        %v5607 = vmul.f32 %v5573, %v5350
        %v5608 = vmul.f32 %v5578, %v5351
        %v5609 = vmul.f32 %v5583, %v5352
        %v5610 = vmul.f32 %v5588, %v5353
        %v5611 = vmul.f32 %v5593, %v5354
        %v5613 = vsel %vm1856, %v5596, 0
        %v5616 = vsel %vm1856, %v5597, 0
        %v5619 = vsel %vm1856, %v5598, 0
        %v5622 = vsel %vm1856, %v5599, 0
        %v5625 = vsel %vm1856, %v5600, 0
        %v5628 = vsel %vm1856, %v5601, 0
        %v5631 = vsel %vm1856, %v5602, 0
        %v5634 = vsel %vm1856, %v5603, 0
        %v5637 = vsel %vm1856, %v5604, 0
        %v5640 = vsel %vm1856, %v5605, 0
        %v5643 = vsel %vm1856, %v5606, 0
        %v5646 = vsel %vm1856, %v5607, 0
        %v5649 = vsel %vm1856, %v5608, 0
        %v5652 = vsel %vm1856, %v5609, 0
        %v5655 = vsel %vm1856, %v5610, 0
        %v5658 = vsel %vm1856, %v5611, 0
        %5660 = vmatprep.subr.mxu0 0.0
        %5661 = vmatpush1.msra.mxu0 %v1788
        %5662 = vmatprep.subr.mxu0 0.0
        %5663 = vmatpush1.msra.mxu0 %v1789
        %5664 = vmatprep.subr.mxu0 0.0
        %5665 = vmatpush1.msra.mxu0 %v1790
        %5666 = vmatprep.subr.mxu0 0.0
        %5667 = vmatpush1.msra.mxu0 %v1791
        %5668 = vmatprep.subr.mxu0 0.0
        %5669 = vmatpush1.msra.mxu0 0.0
        %5670 = vmatprep.subr.mxu0 0.0
        %5671 = vmatpush1.msra.mxu0 0.0
        %5672 = vmatprep.subr.mxu0 0.0
        %5673 = vmatpush1.msra.mxu0 0.0
        %5674 = vmatprep.subr.mxu0 0.0
        %5675 = vmatpush1.msra.mxu0 0.0
        %5676 = vmatprep.subr.mxu0 0.0
        %5677 = vmatpush1.msra.mxu0 0.0
        %5678 = vmatprep.subr.mxu0 0.0
        %5679 = vmatpush1.msra.mxu0 0.0
        %5680 = vmatprep.subr.mxu0 0.0
        %5681 = vmatpush1.msra.mxu0 0.0
        %5682 = vmatprep.subr.mxu0 0.0
        %5683 = vmatpush1.msra.mxu0 0.0
        %5684 = vmatprep.subr.mxu0 0.0
        %5685 = vmatpush1.msra.mxu0 0.0
        %5686 = vmatprep.subr.mxu0 0.0
        %5687 = vmatpush1.msra.mxu0 0.0
        %5688 = vmatprep.subr.mxu0 0.0
        %5689 = vmatpush1.msra.mxu0 0.0
        %5690 = vmatprep.subr.mxu0 0.0
        %5691 = vmatpush1.msra.mxu0 0.0
        %5692 = vmatprep.subr.mxu0 0.0
        %5693 = vmatpush1.msra.mxu0 0.0
        %5694 = vmatprep.subr.mxu0 0.0
        %5695 = vmatpush1.msra.mxu0 0.0
        %5696 = vmatprep.subr.mxu0 0.0
        %5697 = vmatpush1.msra.mxu0 0.0
        %5698 = vmatprep.subr.mxu0 0.0
        %5699 = vmatpush1.msra.mxu0 0.0
        %5700 = vmatprep.subr.mxu0 0.0
        %5701 = vmatpush1.msra.mxu0 0.0
        %5702 = vmatprep.subr.mxu0 0.0
        %5703 = vmatpush1.msra.mxu0 0.0
        %5704 = vmatprep.subr.mxu0 0.0
        %5705 = vmatpush1.msra.mxu0 0.0
        %5706 = vmatprep.subr.mxu0 0.0
        %5707 = vmatpush1.msra.mxu0 0.0
        %5708 = vmatprep.subr.mxu0 0.0
        %5709 = vmatpush1.msra.mxu0 0.0
        %5710 = vmatprep.subr.mxu0 0.0
        %5711 = vmatpush1.msra.mxu0 0.0
        %5712 = vmatprep.subr.mxu0 0.0
        %5713 = vmatpush1.msra.mxu0 0.0
        %5714 = vmatprep.subr.mxu0 0.0
        %5715 = vmatpush1.msra.mxu0 0.0
        %5716 = vmatprep.subr.mxu0 0.0
        %5717 = vmatpush1.msra.mxu0 0.0
        %5718 = vmatprep.subr.mxu0 0.0
        %5719 = vmatpush1.msra.mxu0 0.0
        %5720 = vmatprep.subr.mxu0 0.0
        %5721 = vmatpush1.msra.mxu0 0.0
        %5722 = vmatprep.subr.mxu0 0.0
        %5723 = vmatpush1.msra.mxu0 0.0
        %5724 = vmatprep.mubr.f32.mxu0 0.0
        %5725 = vmatmul.mubr.f32.gmra.mrb[0].mxu0 %v5613
        %v5726 = vpop.f32.mrb[0].mxu0
        %v5727 = vadd.f32 0.0, %v5726
        %v5728 = vpop.f32.mrb[0].mxu0
        %5729 = vmatprep.mubr.f32.mxu0 0.0
        %5730 = vmatmul.mubr.f32.gmra.mrb[0].mxu0 %v5616
        %v5731 = vpop.f32.mrb[0].mxu0
        %v5732 = vadd.f32 0.0, %v5731
        %v5733 = vpop.f32.mrb[0].mxu0
        %5734 = vmatprep.mubr.f32.mxu0 0.0
        %5735 = vmatmul.mubr.f32.gmra.mrb[0].mxu0 %v5619
        %v5736 = vpop.f32.mrb[0].mxu0
        %v5737 = vadd.f32 0.0, %v5736
        %v5738 = vpop.f32.mrb[0].mxu0
        %5739 = vmatprep.mubr.f32.mxu0 0.0
        %5740 = vmatmul.mubr.f32.gmra.mrb[0].mxu0 %v5622
        %v5741 = vpop.f32.mrb[0].mxu0
        %v5742 = vadd.f32 0.0, %v5741
        %v5743 = vpop.f32.mrb[0].mxu0
        %5744 = vmatprep.mubr.f32.mxu0 0.0
        %5745 = vmatmul.mubr.f32.gmra.mrb[0].mxu0 %v5625
        %v5746 = vpop.f32.mrb[0].mxu0
        %v5747 = vadd.f32 0.0, %v5746
        %v5748 = vpop.f32.mrb[0].mxu0
        %5749 = vmatprep.mubr.f32.mxu0 0.0
        %5750 = vmatmul.mubr.f32.gmra.mrb[0].mxu0 %v5628
        %v5751 = vpop.f32.mrb[0].mxu0
        %v5752 = vadd.f32 0.0, %v5751
        %v5753 = vpop.f32.mrb[0].mxu0
        %5754 = vmatprep.mubr.f32.mxu0 0.0
        %5755 = vmatmul.mubr.f32.gmra.mrb[0].mxu0 %v5631
        %v5756 = vpop.f32.mrb[0].mxu0
        %v5757 = vadd.f32 0.0, %v5756
        %v5758 = vpop.f32.mrb[0].mxu0
        %5759 = vmatprep.mubr.f32.mxu0 0.0
        %5760 = vmatmul.mubr.f32.gmra.mrb[0].mxu0 %v5634
        %v5761 = vpop.f32.mrb[0].mxu0
        %v5762 = vadd.f32 0.0, %v5761
        %v5763 = vpop.f32.mrb[0].mxu0
        %5764 = vmatprep.mubr.f32.mxu0 0.0
        %5765 = vmatmul.mubr.f32.gmra.mrb[0].mxu0 %v5637
        %v5766 = vpop.f32.mrb[0].mxu0
        %v5767 = vadd.f32 0.0, %v5766
        %v5768 = vpop.f32.mrb[0].mxu0
        %5769 = vmatprep.mubr.f32.mxu0 0.0
        %5770 = vmatmul.mubr.f32.gmra.mrb[0].mxu0 %v5640
        %v5771 = vpop.f32.mrb[0].mxu0
        %v5772 = vadd.f32 0.0, %v5771
        %v5773 = vpop.f32.mrb[0].mxu0
        %5774 = vmatprep.mubr.f32.mxu0 0.0
        %5775 = vmatmul.mubr.f32.gmra.mrb[0].mxu0 %v5643
        %v5776 = vpop.f32.mrb[0].mxu0
        %v5777 = vadd.f32 0.0, %v5776
        %v5778 = vpop.f32.mrb[0].mxu0
        %5779 = vmatprep.mubr.f32.mxu0 0.0
        %5780 = vmatmul.mubr.f32.gmra.mrb[0].mxu0 %v5646
        %v5781 = vpop.f32.mrb[0].mxu0
        %v5782 = vadd.f32 0.0, %v5781
        %v5783 = vpop.f32.mrb[0].mxu0
        %5784 = vmatprep.mubr.f32.mxu0 0.0
        %5785 = vmatmul.mubr.f32.gmra.mrb[0].mxu0 %v5649
        %v5786 = vpop.f32.mrb[0].mxu0
        %v5787 = vadd.f32 0.0, %v5786
        %v5788 = vpop.f32.mrb[0].mxu0
        %5789 = vmatprep.mubr.f32.mxu0 0.0
        %5790 = vmatmul.mubr.f32.gmra.mrb[0].mxu0 %v5652
        %v5791 = vpop.f32.mrb[0].mxu0
        %v5792 = vadd.f32 0.0, %v5791
        %v5793 = vpop.f32.mrb[0].mxu0
        %5794 = vmatprep.mubr.f32.mxu0 0.0
        %5795 = vmatmul.mubr.f32.gmra.mrb[0].mxu0 %v5655
        %v5796 = vpop.f32.mrb[0].mxu0
        %v5797 = vadd.f32 0.0, %v5796
        %v5798 = vpop.f32.mrb[0].mxu0
        %5799 = vmatprep.mubr.f32.mxu0 0.0
        %5800 = vmatmul.mubr.f32.gmra.mrb[0].mxu0 %v5658
        %v5801 = vpop.f32.mrb[0].mxu0
        %v5802 = vadd.f32 0.0, %v5801
        %v5803 = vpop.f32.mrb[0].mxu0
        %5804 = vdwg.mxu0
        %v5805 = vadd.f32 %v4778, %v5727
        %v5806 = vadd.f32 %v4779, %v5732
        %v5807 = vadd.f32 %v4780, %v5737
        %v5808 = vadd.f32 %v4781, %v5742
        %v5809 = vadd.f32 %v4782, %v5747
        %v5810 = vadd.f32 %v4783, %v5752
        %v5811 = vadd.f32 %v4784, %v5757
        %v5812 = vadd.f32 %v4785, %v5762
        %v5813 = vadd.f32 %v4786, %v5767
        %v5814 = vadd.f32 %v4787, %v5772
        %v5815 = vadd.f32 %v4788, %v5777
        %v5816 = vadd.f32 %v4789, %v5782
        %v5817 = vadd.f32 %v4790, %v5787
        %v5818 = vadd.f32 %v4791, %v5792
        %v5819 = vadd.f32 %v4792, %v5797
        %v5820 = vadd.f32 %v4793, %v5802
        %v5821 = vld [vmem:[%s10] sm:$0x1]
        %v5823 = vlaneseq
        %v5824 = vshrl.u32 %v5823, 7
        %v5825 = vsub.s32 0, %v5824
        %v5826 = vrot.slane %v5821, %v5825
        %v5828 = vadd.f32 %v5805, %v5826
        %v5829 = vadd.f32 %v5806, %v5826
        %v5830 = vadd.f32 %v5807, %v5826
        %v5831 = vadd.f32 %v5808, %v5826
        %v5832 = vadd.f32 %v5809, %v5826
        %v5833 = vadd.f32 %v5810, %v5826
        %v5834 = vadd.f32 %v5811, %v5826
        %v5835 = vadd.f32 %v5812, %v5826
        %v5836 = vadd.f32 %v5813, %v5826
        %v5837 = vadd.f32 %v5814, %v5826
        %v5838 = vadd.f32 %v5815, %v5826
        %v5839 = vadd.f32 %v5816, %v5826
        %v5840 = vadd.f32 %v5817, %v5826
        %v5841 = vadd.f32 %v5818, %v5826
        %v5842 = vadd.f32 %v5819, %v5826
        %v5843 = vadd.f32 %v5820, %v5826
        %v5844 = vadd.f32 %v5828, %v1580
        %v5845 = vadd.f32 %v5829, %v1581
        %v5846 = vadd.f32 %v5830, %v1582
        %v5847 = vadd.f32 %v5831, %v1583
        %v5848 = vadd.f32 %v5832, %v1584
        %v5849 = vadd.f32 %v5833, %v1585
        %v5850 = vadd.f32 %v5834, %v1586
        %v5851 = vadd.f32 %v5835, %v1587
        %v5852 = vadd.f32 %v5836, %v1588
        %v5853 = vadd.f32 %v5837, %v1589
        %v5854 = vadd.f32 %v5838, %v1590
        %v5855 = vadd.f32 %v5839, %v1591
        %v5856 = vadd.f32 %v5840, %v1592
        %v5857 = vadd.f32 %v5841, %v1593
        %v5858 = vadd.f32 %v5842, %v1594
        %v5859 = vadd.f32 %v5843, %v1595
        %5860 = vst [vmem:[%s518] sm:$0xff] %v5844
        %5861 = vst [vmem:[%s518 + $0x8] sm:$0xff] %v5845
        %5862 = vst [vmem:[%s518 + $0x10] sm:$0xff] %v5846
        %5863 = vst [vmem:[%s518 + $0x18] sm:$0xff] %v5847
        %5864 = vst [vmem:[%s518 + $0x20] sm:$0xff] %v5848
        %5865 = vst [vmem:[%s518 + $0x28] sm:$0xff] %v5849
        %5866 = vst [vmem:[%s518 + $0x30] sm:$0xff] %v5850
        %5867 = vst [vmem:[%s518 + $0x38] sm:$0xff] %v5851
        %5868 = vst [vmem:[%s518 + $0x40] sm:$0xff] %v5852
        %5869 = vst [vmem:[%s518 + $0x48] sm:$0xff] %v5853
        %5870 = vst [vmem:[%s518 + $0x50] sm:$0xff] %v5854
        %5871 = vst [vmem:[%s518 + $0x58] sm:$0xff] %v5855
        %5872 = vst [vmem:[%s518 + $0x60] sm:$0xff] %v5856
        %5873 = vst [vmem:[%s518 + $0x68] sm:$0xff] %v5857
        %5874 = vst [vmem:[%s518 + $0x70] sm:$0xff] %v5858
        %5875 = vst [vmem:[%s518 + $0x78] sm:$0xff] %v5859
        %s5876 = sand.u32 %s302, 1
        %s5877 = scalar_lea.sflag [#allocation5], %s5876
        %s5878 = sand.u32 %s302, 1
        %s5879 = smul.addr %s5878, 128
        %s5880 = scalar_lea.vmem [#allocation12], %s5879
        // Predicated region
        $region89: #{tpu_custom_call.1} parent=63 // pred_check
          %p5881 = pneg %p312
        $region90: #{tpu_custom_call.1} parent=63 // pred_check_branch
          %5883 = sbr.rel (%p5881) target = $region92
        $region91: #{tpu_custom_call.1} parent=63 // pred_region
          %s5884 = smul.u32 16, %s37
          %s5886 = ssub.s32 2048, 2048
          %5887 = vsyncadd %s5877, %s5886
          %s5888 = smul.addr %s36, 32
          %s5889 = sadd.s32 %s5884, %s5888
          %s5890 = smul.addr %s5889, 128
          %s5891 = scalar_lea.hbm %s11, %s5890
          %s5892 = sshll.u32 %s5880, 4
          %s5893 = int_to_ptr.vmem [resolvable:$true] %s5892
          %5898 = dma.vmem_to_hbm [thread:$0]  %s5893, 2048, %s5891, %s5877, 128, 128, 8
        $region92: #{tpu_custom_call.1} parent=63 // pred_fallthru
          _
      $region64: #{tpu_custom_call.1} parent=5 // pred_fallthru
        _
      %p5899 = scmp.le.s32.totalorder 2, %s27
      // Predicated region
      $region93: #{tpu_custom_call.1} parent=5 // pred_check
        %p5900 = pneg %p5899
      $region94: #{tpu_custom_call.1} parent=5 // pred_check_branch
        %5902 = sbr.rel (%p5900) target = $region96
      $region95: #{tpu_custom_call.1} parent=5 // pred_region
        %s5903 = ssub.s32 %s27, 2
        // Predicated region
        $region97: #{tpu_custom_call.1} parent=95 // pred_check
          %p5904 = pneg %p318
        $region98: #{tpu_custom_call.1} parent=95 // pred_check_branch
          %5906 = sbr.rel (%p5904) target = $region100
        $region99: #{tpu_custom_call.1} parent=95 // pred_region
          %s5907 = sand.u32 %s303, 1
          %s5908 = scalar_lea.sflag [#allocation5], %s5907
          %s5909 = sand.u32 %s303, 1
          %s5910 = smul.addr %s5909, 128
          %s5911 = scalar_lea.vmem [#allocation12], %s5910
          %5912 = dma.done %s5908, 2048
        $region100: #{tpu_custom_call.1} parent=95 // pred_fallthru
          _
      $region96: #{tpu_custom_call.1} parent=5 // pred_fallthru
        _
    $region6: #{tpu_custom_call.1} parent=1 // loop_footer
      %s31 = sadd.s32 1, %s27
    $region7: #{tpu_custom_call.1} parent=1 // loop_footer_branch
      %26 = sbr.rel target = $region3
    $region8: #{tpu_custom_call.1} parent=1 // loop_exit
      _
    %5913 = vsyncpa [#allocation4], 1
    %s5914 = scalar_lea.sflag [#allocation4], 1
    %5915 = vsyncpa %s5914, 1
    %5916 = vsyncpa [#allocation7], 1
    %s5917 = scalar_lea.sflag [#allocation7], 1
    %5918 = vsyncpa %s5917, 1
    %5919 = vsyncpa [#allocation10], 1
    %5920 = vsyncpa [#allocation5], 1
    %s5921 = scalar_lea.sflag [#allocation5], 1
    %5922 = vsyncpa %s5921, 1

</llo_original>
